<compile_context>
chip_gen: v7x
topology: tpu7x:2x2x1
jax: 0.10.0
libtpu: 0.0.40
codegen_flags: <defaults>
</compile_context>

<pallas_src>
import numpy as np
import jax
import jax.numpy as jnp
from jax.experimental import pallas as pl
from jax.experimental.pallas import tpu as pltpu

# ----------------------- model hyper-parameters (small) ----------------------
X_DIM = 32            # observation embedding size
H_DIM = 32            # deterministic recurrent state size
Z_NUM_VAR = 8         # number of categorical variables
Z_VAR_DIM = 4         # size of each categorical variable
Z_DIM = Z_NUM_VAR * Z_VAR_DIM   # 32
A_DIM = 8             # action size
HID = 1024            # MLP hidden width (hard-coded (1024, 1024) in the module)
BATCH = 8
DTYPE = jnp.float32
WDTYPE = jnp.bfloat16           # storage dtype for the non-quantized weights

OUT_W = H_DIM + Z_DIM           # useful lanes of the packed output (h | one-hot z)
OUT_PAD = 128                   # padded lane-dense output width (1 unmasked vst)


def _elu(v):
    # ELU(alpha=1.0); exp() only on the non-positive branch (no inf/NaN hazard).
    # TODO(synk): expm1 would be slightly more accurate for tiny negatives;
    # exp-1 kept because its Mosaic lowering is guaranteed.
    return jnp.where(v > 0, v, jnp.exp(jnp.minimum(v, 0.0)) - 1.0)


# ------------------------------- fused kernel --------------------------------
def rssm_fused_kernel(za_ref, x_ref, h_ref,
                      wi_ref, wh_ref, bi_ref, bh_ref,
                      w1_ref, b1_ref,
                      w2q_ref, w2s_ref, b2_ref,
                      w3_ref, b3_ref,
                      g_ref, out_ref):
    f32 = jnp.float32
    bf16 = jnp.bfloat16

    za = za_ref[...].astype(bf16)   # (B, Z_DIM + A_DIM) == concat([z, action])
    x = x_ref[...].astype(bf16)     # (B, X_DIM)
    h0 = h_ref[...]                 # (B, H_DIM) f32

    # ---- GRUCell, gates packed as [r | z | n] along 3*H_DIM lanes ----
    gi = jnp.dot(za, wi_ref[...], preferred_element_type=f32) + bi_ref[...]
    gh = jnp.dot(h0.astype(bf16), wh_ref[...], preferred_element_type=f32) + bh_ref[...]
    r = jax.nn.sigmoid(gi[:, 0:H_DIM] + gh[:, 0:H_DIM])
    u = jax.nn.sigmoid(gi[:, H_DIM:2 * H_DIM] + gh[:, H_DIM:2 * H_DIM])
    n = jnp.tanh(gi[:, 2 * H_DIM:3 * H_DIM] + r * gh[:, 2 * H_DIM:3 * H_DIM])
    h_new = (1.0 - u) * n + u * h0                                   # (B, H) f32

    # ---- MLP.  program 0 = representation(cat[x, h]); program 1 = transition(h).
    # program 1's x-rows of w1 are zero, so both programs share one stacked
    # (X+H, HID) first layer and a single matmul. ----
    hb = h_new.astype(bf16)
    xh = jnp.concatenate([x, hb], axis=1)                            # (B, X+H) bf16
    a1 = _elu(jnp.dot(xh, w1_ref[...], preferred_element_type=f32) + b1_ref[...])

    # w2 stored int8 + per-output-column f32 scales; cast to bf16 for the MXU
    # (works on all generations), scale folded in after the f32 accumulation.
    w2 = w2q_ref[...].astype(bf16)
    a2 = _elu(jnp.dot(a1.astype(bf16), w2, preferred_element_type=f32)
              * w2s_ref[...] + b2_ref[...])

    logits = (jnp.dot(a2.astype(bf16), w3_ref[...], preferred_element_type=f32)
              + b3_ref[...])
    # logits are in category-major layout: lane = d * Z_NUM_VAR + v.

    # ---- straight-through Gumbel-max one-hot sample (forward value of
    #      OneHotCategoricalStraightThrough.rsample()) ----
    y = logits + g_ref[...]
    y0 = y[:, 0 * Z_NUM_VAR:1 * Z_NUM_VAR]
    y1 = y[:, 1 * Z_NUM_VAR:2 * Z_NUM_VAR]
    y2 = y[:, 2 * Z_NUM_VAR:3 * Z_NUM_VAR]
    y3 = y[:, 3 * Z_NUM_VAR:4 * Z_NUM_VAR]
    m = jnp.maximum(jnp.maximum(y0, y1), jnp.maximum(y2, y3))        # per-var max
    c0 = jnp.where(y0 >= m, 0, Z_VAR_DIM)
    c1 = jnp.where(y1 >= m, 1, Z_VAR_DIM)
    c2 = jnp.where(y2 >= m, 2, Z_VAR_DIM)
    c3 = jnp.where(y3 >= m, 3, Z_VAR_DIM)
    # argmax with first-wins tie-breaking -> strict one-hot even under ties.
    first = jnp.minimum(jnp.minimum(c0, c1), jnp.minimum(c2, c3))    # (B, Z_NUM_VAR)

    # ---- coalesced, lane-dense output: h | one-hot(z) | zero pad -> 128 lanes,
    #      one unmasked store ----
    b_sz = h_new.shape[0]
    row = jnp.concatenate(
        [h_new,
         (first == 0).astype(f32), (first == 1).astype(f32),
         (first == 2).astype(f32), (first == 3).astype(f32),
         jnp.zeros((b_sz, OUT_PAD - OUT_W), f32)],
        axis=1)                                                       # (B, 128)
    out_ref[...] = row


# ------------------------------ pallas wrapper --------------------------------
def rssm_fused(za, x, h0, kparams, gumbel):
    (wi, wh, bi, bh, w1, b1, w2q, w2s, b2, w3, b3) = kparams
    B = x.shape[0]

    def whole(arr):
        nd = arr.ndim
        return pl.BlockSpec(tuple(arr.shape), lambda i, _nd=nd: (0,) * _nd)

    def stacked(arr):
        nd = arr.ndim
        return pl.BlockSpec((None,) + tuple(arr.shape[1:]),
                            lambda i, _nd=nd: (i,) + (0,) * (_nd - 1))

    in_specs = [
        whole(za), whole(x), whole(h0),
        whole(wi), whole(wh), whole(bi), whole(bh),
        stacked(w1), stacked(b1),
        stacked(w2q), stacked(w2s), stacked(b2),
        stacked(w3), stacked(b3),
        stacked(gumbel),
    ]
    out_specs = pl.BlockSpec((None, B, OUT_PAD), lambda i: (i, 0, 0))

    flops = 2 * 2 * B * ((Z_DIM + A_DIM) * 3 * H_DIM + H_DIM * 3 * H_DIM
                         + (X_DIM + H_DIM) * HID + HID * HID + HID * Z_DIM)
    bytes_w = int(sum(int(np.prod(a.shape)) * a.dtype.itemsize
                      for a in (wi, wh, bi, bh, w1, b1, w2q, w2s, b2, w3, b3)))
    bytes_act = 4 * B * (X_DIM + H_DIM + Z_DIM + A_DIM + 2 * Z_DIM + 2 * OUT_PAD)
    cost = pl.CostEstimate(flops=int(flops),
                           transcendentals=int(2 * B * (3 * H_DIM + 2 * HID)),
                           bytes_accessed=bytes_w + bytes_act)

    return pl.pallas_call(
        rssm_fused_kernel,
        out_shape=jax.ShapeDtypeStruct((2, B, OUT_PAD), DTYPE),
        grid_spec=pltpu.PrefetchScalarGridSpec(
            num_scalar_prefetch=0,
            grid=(2,),                       # program 0: posterior, 1: prior
            in_specs=in_specs,
            out_specs=out_specs,
        ),
        compiler_params=pltpu.CompilerParams(
            dimension_semantics=("parallel",),          # 2 TCs on v7x
            vmem_limit_bytes=16 * 1024 * 1024,
        ),
        cost_estimate=cost,
    )(za, x, h0, wi, wh, bi, bh, w1, b1, w2q, w2s, b2, w3, b3, gumbel)


# ------------------------------ parameters ------------------------------------
def init_params(key):
    """Deterministic PyTorch-style uniform(-1/sqrt(fan), 1/sqrt(fan)) init (f32)."""
    keys = iter(jax.random.split(key, 40))

    def unif(shape, fan):
        bound = 1.0 / float(np.sqrt(fan))
        return jax.random.uniform(next(keys), shape, DTYPE, -bound, bound)

    gru_in = Z_DIM + A_DIM
    p = {}
    # GRUCell per-gate transposed weights; PyTorch init bound = 1/sqrt(H_DIM)
    p["wir"] = unif((gru_in, H_DIM), H_DIM); p["wiz"] = unif((gru_in, H_DIM), H_DIM)
    p["win"] = unif((gru_in, H_DIM), H_DIM)
    p["whr"] = unif((H_DIM, H_DIM), H_DIM);  p["whz"] = unif((H_DIM, H_DIM), H_DIM)
    p["whn"] = unif((H_DIM, H_DIM), H_DIM)
    p["bir"] = unif((1, H_DIM), H_DIM); p["biz"] = unif((1, H_DIM), H_DIM)
    p["bin"] = unif((1, H_DIM), H_DIM)
    p["bhr"] = unif((1, H_DIM), H_DIM); p["bhz"] = unif((1, H_DIM), H_DIM)
    p["bhn"] = unif((1, H_DIM), H_DIM)

    # representation MLP: Linear(X+H,1024), ELU, Linear(1024,1024), ELU, Linear(1024,Z)
    rep_in = X_DIM + H_DIM
    p["r1x"] = unif((X_DIM, HID), rep_in); p["r1h"] = unif((H_DIM, HID), rep_in)
    p["rb1"] = unif((1, HID), rep_in)
    p["r2"] = unif((HID, HID), HID); p["rb2"] = unif((1, HID), HID)
    p["r3"] = unif((HID, Z_DIM), HID); p["rb3"] = unif((1, Z_DIM), HID)

    # transition MLP: Linear(H,1024), ELU, Linear(1024,1024), ELU, Linear(1024,Z)
    p["t1"] = unif((H_DIM, HID), H_DIM); p["tb1"] = unif((1, HID), H_DIM)
    p["t2"] = unif((HID, HID), HID); p["tb2"] = unif((1, HID), HID)
    p["t3"] = unif((HID, Z_DIM), HID); p["tb3"] = unif((1, Z_DIM), HID)
    return p


def _to_category_major(w):
    # Reorder the Z_DIM output columns from var-major (v*Z_VAR_DIM + d) to
    # category-major (d*Z_NUM_VAR + v), so per-variable argmax is slab-wise.
    lead = w.shape[0]
    return w.reshape(lead, Z_NUM_VAR, Z_VAR_DIM).transpose(0, 2, 1).reshape(lead, Z_DIM)


def _quant_i8_per_col(w):
    # Symmetric per-output-column int8 quantization; dequant is folded in
    # after the matmul inside the kernel (y = (x @ q) * scale + b).
    amax = jnp.max(jnp.abs(w), axis=0, keepdims=True)          # (1, out)
    scale = jnp.maximum(amax, 1e-8) / 127.0
    q = jnp.clip(jnp.round(w / scale), -127.0, 127.0).astype(jnp.int8)
    return q, scale.astype(DTYPE)


def pack_params(p):
    """Pack / stack / cast / quantize the per-layer params into the kernel layout."""
    wi = jnp.concatenate([p["wir"], p["wiz"], p["win"]], axis=1).astype(WDTYPE)
    wh = jnp.concatenate([p["whr"], p["whz"], p["whn"]], axis=1).astype(WDTYPE)
    bi = jnp.concatenate([p["bir"], p["biz"], p["bin"]], axis=1)
    bh = jnp.concatenate([p["bhr"], p["bhz"], p["bhn"]], axis=1)

    # first layer merged to a single (X+H, HID) block per program; the
    # transition program only consumes h, so its x-rows are zero.
    w1_rep = jnp.concatenate([p["r1x"], p["r1h"]], axis=0)
    w1_tr = jnp.concatenate([jnp.zeros((X_DIM, HID), DTYPE), p["t1"]], axis=0)
    w1 = jnp.stack([w1_rep, w1_tr]).astype(WDTYPE)                # (2, X+H, HID)
    b1 = jnp.stack([p["rb1"], p["tb1"]])                          # (2, 1, HID) f32

    # dominant 1024x1024 weights -> int8 + per-output-column f32 scales.
    rq, rs = _quant_i8_per_col(p["r2"])
    tq, ts = _quant_i8_per_col(p["t2"])
    w2q = jnp.stack([rq, tq])                                     # (2, HID, HID) i8
    w2s = jnp.stack([rs, ts])                                     # (2, 1, HID) f32
    b2 = jnp.stack([p["rb2"], p["tb2"]])                          # (2, 1, HID) f32

    w3 = jnp.stack([_to_category_major(p["r3"]),
                    _to_category_major(p["t3"])]).astype(WDTYPE)  # (2, HID, Z)
    b3 = jnp.stack([_to_category_major(p["rb3"]),
                    _to_category_major(p["tb3"])])                # (2, 1, Z) f32
    return (wi, wh, bi, bh, w1, b1, w2q, w2s, b2, w3, b3)


# ------------------------------ forward --------------------------------------
def rssm_forward(kparams, x, action, states=None, *, key):
    """Matches RSSM.forward: returns (h, z, z_hat); z / z_hat are hard one-hot
       samples of shape (B, Z_NUM_VAR, Z_VAR_DIM)."""
    B = x.shape[0]
    if states is None:
        h0 = jnp.zeros((B, H_DIM), DTYPE)
        z0 = jnp.zeros((B, Z_DIM), DTYPE)
    else:
        h0, z0 = states
        z0 = z0.reshape(B, Z_DIM)

    za = jnp.concatenate([z0, action], axis=1)          # torch.cat([z, a], dim=1)

    # Gumbel noise (plain-JAX glue; the RNG stream cannot match torch anyway).
    # Row 0 -> posterior sample, row 1 -> prior sample.  iid, so the
    # category-major layout used by the kernel is statistically identical.
    # TODO(synk): the straight-through gradient path (probs - probs.detach())
    # is backward-only; the forward value is exactly the hard one-hot sample.
    k1, k2 = jax.random.split(key)
    g = jnp.stack([jax.random.gumbel(k1, (B, Z_DIM), DTYPE),
                   jax.random.gumbel(k2, (B, Z_DIM), DTYPE)])

    out = rssm_fused(za, x, h0, kparams, g)             # (2, B, 128)

    h = out[0, :, :H_DIM]

    def unpermute(zp):   # category-major (B, Z) -> (B, Z_NUM_VAR, Z_VAR_DIM)
        return zp.reshape(B, Z_VAR_DIM, Z_NUM_VAR).transpose(0, 2, 1)

    z = unpermute(out[0, :, H_DIM:OUT_W])
    z_hat = unpermute(out[1, :, H_DIM:OUT_W])
    return h, z, z_hat


# ------------------------------ main -----------------------------------------
if __name__ == "__main__":
    root = jax.random.PRNGKey(0)
    k_param, k_x, k_a, k_sample = jax.random.split(root, 4)

    params = init_params(k_param)
    kparams = pack_params(params)

    x = jax.random.normal(k_x, (BATCH, X_DIM), DTYPE)
    action = jax.random.normal(k_a, (BATCH, A_DIM), DTYPE)

    h, z, z_hat = rssm_forward(kparams, x, action, states=None, key=k_sample)
    jax.block_until_ready((h, z, z_hat))

    assert h.shape == (BATCH, H_DIM)
    assert z.shape == (BATCH, Z_NUM_VAR, Z_VAR_DIM)
    assert z_hat.shape == (BATCH, Z_NUM_VAR, Z_VAR_DIM)
    # each categorical variable must be a strict one-hot vector
    assert bool(jnp.all(jnp.sum(z, axis=-1) == 1.0))
    assert bool(jnp.all(jnp.sum(z_hat, axis=-1) == 1.0))
    assert bool(jnp.all((z == 0.0) | (z == 1.0)))
    assert bool(jnp.all((z_hat == 0.0) | (z_hat == 1.0)))
    assert bool(jnp.all(jnp.isfinite(h)))

    print("KERNEL_OK")
</pallas_src>

<mosaic_0001>
module attributes {stable_mosaic.version = 11 : i64} {
  func.func @rssm_fused_kernel(%arg0: i32, %arg1: memref<8x40xf32, #tpu.memory_space<vmem>>, %arg2: memref<8x32xf32, #tpu.memory_space<vmem>>, %arg3: memref<8x32xf32, #tpu.memory_space<vmem>>, %arg4: memref<40x96xbf16, #tpu.memory_space<vmem>>, %arg5: memref<32x96xbf16, #tpu.memory_space<vmem>>, %arg6: memref<1x96xf32, #tpu.memory_space<vmem>>, %arg7: memref<1x96xf32, #tpu.memory_space<vmem>>, %arg8: memref<1x64x1024xbf16, #tpu.memory_space<vmem>>, %arg9: memref<1x1x1024xf32, #tpu.memory_space<vmem>>, %arg10: memref<1x1024x1024xi8, #tpu.memory_space<vmem>>, %arg11: memref<1x1x1024xf32, #tpu.memory_space<vmem>>, %arg12: memref<1x1x1024xf32, #tpu.memory_space<vmem>>, %arg13: memref<1x1024x32xbf16, #tpu.memory_space<vmem>>, %arg14: memref<1x1x32xf32, #tpu.memory_space<vmem>>, %arg15: memref<1x8x32xf32, #tpu.memory_space<vmem>>, %arg16: memref<1x8x128xf32, #tpu.memory_space<vmem>>) attributes {dimension_semantics = [#tpu.dimension_semantics<parallel>], iteration_bounds = array<i64: 2>, scalar_prefetch = 0 : i64, scratch_operands = 0 : i64, tpu.core_type = #tpu.core_type<tc>, window_params = [{pipeline_mode = #tpu.pipeline_mode<synchronous>, transform_indices = @transform_0, window_bounds = array<i64: 8, 40>}, {pipeline_mode = #tpu.pipeline_mode<synchronous>, transform_indices = @transform_1, window_bounds = array<i64: 8, 32>}, {pipeline_mode = #tpu.pipeline_mode<synchronous>, transform_indices = @transform_2, window_bounds = array<i64: 8, 32>}, {pipeline_mode = #tpu.pipeline_mode<synchronous>, transform_indices = @transform_3, window_bounds = array<i64: 40, 96>}, {pipeline_mode = #tpu.pipeline_mode<synchronous>, transform_indices = @transform_4, window_bounds = array<i64: 32, 96>}, {pipeline_mode = #tpu.pipeline_mode<synchronous>, transform_indices = @transform_5, window_bounds = array<i64: 1, 96>}, {pipeline_mode = #tpu.pipeline_mode<synchronous>, transform_indices = @transform_6, window_bounds = array<i64: 1, 96>}, {transform_indices = @transform_7, window_bounds = array<i64: 1, 64, 1024>}, {transform_indices = @transform_8, window_bounds = array<i64: 1, 1, 1024>}, {transform_indices = @transform_9, window_bounds = array<i64: 1, 1024, 1024>}, {transform_indices = @transform_10, window_bounds = array<i64: 1, 1, 1024>}, {transform_indices = @transform_11, window_bounds = array<i64: 1, 1, 1024>}, {transform_indices = @transform_12, window_bounds = array<i64: 1, 1024, 32>}, {transform_indices = @transform_13, window_bounds = array<i64: 1, 1, 32>}, {transform_indices = @transform_14, window_bounds = array<i64: 1, 8, 32>}, {transform_indices = @transform_15, window_bounds = array<i64: 1, 8, 128>}]} {
    %c0 = arith.constant 0 : index
    %c0_0 = arith.constant 0 : index
    %0 = vector.load %arg1[%c0, %c0_0] : memref<8x40xf32, #tpu.memory_space<vmem>>, vector<8x40xf32>
    %1 = arith.truncf %0 : vector<8x40xf32> to vector<8x40xbf16>
    %c0_1 = arith.constant 0 : index
    %c0_2 = arith.constant 0 : index
    %2 = vector.load %arg2[%c0_1, %c0_2] : memref<8x32xf32, #tpu.memory_space<vmem>>, vector<8x32xf32>
    %3 = arith.truncf %2 : vector<8x32xf32> to vector<8x32xbf16>
    %c0_3 = arith.constant 0 : index
    %c0_4 = arith.constant 0 : index
    %4 = vector.load %arg3[%c0_3, %c0_4] : memref<8x32xf32, #tpu.memory_space<vmem>>, vector<8x32xf32>
    %c0_5 = arith.constant 0 : index
    %c0_6 = arith.constant 0 : index
    %5 = vector.load %arg4[%c0_5, %c0_6] : memref<40x96xbf16, #tpu.memory_space<vmem>>, vector<40x96xbf16>
    %cst = arith.constant dense<0.000000e+00> : vector<8x96xf32>
    %6 = tpu.matmul %1, %5, %cst {dimension_numbers = #tpu.dot_dimension_numbers<[1], [0], [0], [1], [0, 0, 1, 1], [], []>} : vector<8x40xbf16>, vector<40x96xbf16>, vector<8x96xf32> -> vector<8x96xf32>
    %c0_7 = arith.constant 0 : index
    %c0_8 = arith.constant 0 : index
    %7 = vector.load %arg6[%c0_7, %c0_8] : memref<1x96xf32, #tpu.memory_space<vmem>>, vector<1x96xf32>
    %8 = vector.broadcast %7 : vector<1x96xf32> to vector<8x96xf32>
    %9 = arith.addf %6, %8 : vector<8x96xf32>
    %10 = arith.truncf %4 : vector<8x32xf32> to vector<8x32xbf16>
    %c0_9 = arith.constant 0 : index
    %c0_10 = arith.constant 0 : index
    %11 = vector.load %arg5[%c0_9, %c0_10] : memref<32x96xbf16, #tpu.memory_space<vmem>>, vector<32x96xbf16>
    %cst_11 = arith.constant dense<0.000000e+00> : vector<8x96xf32>
    %12 = tpu.matmul %10, %11, %cst_11 {dimension_numbers = #tpu.dot_dimension_numbers<[1], [0], [0], [1], [0, 0, 1, 1], [], []>} : vector<8x32xbf16>, vector<32x96xbf16>, vector<8x96xf32> -> vector<8x96xf32>
    %c0_12 = arith.constant 0 : index
    %c0_13 = arith.constant 0 : index
    %13 = vector.load %arg7[%c0_12, %c0_13] : memref<1x96xf32, #tpu.memory_space<vmem>>, vector<1x96xf32>
    %14 = vector.broadcast %13 : vector<1x96xf32> to vector<8x96xf32>
    %15 = arith.addf %12, %14 : vector<8x96xf32>
    %16 = vector.extract_strided_slice %9 {offsets = [0, 0], sizes = [8, 32], strides = [1, 1]} : vector<8x96xf32> to vector<8x32xf32>
    %17 = vector.extract_strided_slice %15 {offsets = [0, 0], sizes = [8, 32], strides = [1, 1]} : vector<8x96xf32> to vector<8x32xf32>
    %18 = arith.addf %16, %17 : vector<8x32xf32>
    %19 = arith.negf %18 : vector<8x32xf32>
    %20 = math.exp %19 : vector<8x32xf32>
    %cst_14 = arith.constant 1.000000e+00 : f32
    %21 = vector.broadcast %cst_14 : f32 to vector<8x32xf32>
    %22 = arith.addf %21, %20 : vector<8x32xf32>
    %23 = arith.divf %21, %22 : vector<8x32xf32>
    %24 = vector.extract_strided_slice %9 {offsets = [0, 32], sizes = [8, 32], strides = [1, 1]} : vector<8x96xf32> to vector<8x32xf32>
    %25 = vector.extract_strided_slice %15 {offsets = [0, 32], sizes = [8, 32], strides = [1, 1]} : vector<8x96xf32> to vector<8x32xf32>
    %26 = arith.addf %24, %25 : vector<8x32xf32>
    %27 = arith.negf %26 : vector<8x32xf32>
    %28 = math.exp %27 : vector<8x32xf32>
    %cst_15 = arith.constant 1.000000e+00 : f32
    %29 = vector.broadcast %cst_15 : f32 to vector<8x32xf32>
    %30 = arith.addf %29, %28 : vector<8x32xf32>
    %31 = arith.divf %29, %30 : vector<8x32xf32>
    %32 = vector.extract_strided_slice %9 {offsets = [0, 64], sizes = [8, 32], strides = [1, 1]} : vector<8x96xf32> to vector<8x32xf32>
    %33 = vector.extract_strided_slice %15 {offsets = [0, 64], sizes = [8, 32], strides = [1, 1]} : vector<8x96xf32> to vector<8x32xf32>
    %34 = arith.mulf %23, %33 : vector<8x32xf32>
    %35 = arith.addf %32, %34 : vector<8x32xf32>
    %36 = math.tanh %35 : vector<8x32xf32>
    %cst_16 = arith.constant 1.000000e+00 : f32
    %37 = vector.broadcast %cst_16 : f32 to vector<8x32xf32>
    %38 = arith.subf %37, %31 : vector<8x32xf32>
    %39 = arith.mulf %38, %36 : vector<8x32xf32>
    %40 = arith.mulf %31, %4 : vector<8x32xf32>
    %41 = arith.addf %39, %40 : vector<8x32xf32>
    %42 = arith.truncf %41 : vector<8x32xf32> to vector<8x32xbf16>
    %43 = tpu.concatenate %3, %42 in 1 : vector<8x32xbf16>, vector<8x32xbf16> -> vector<8x64xbf16>
    %c0_17 = arith.constant 0 : index
    %c0_18 = arith.constant 0 : index
    %c0_19 = arith.constant 0 : index
    %44 = vector.load %arg8[%c0_17, %c0_18, %c0_19] : memref<1x64x1024xbf16, #tpu.memory_space<vmem>>, vector<1x64x1024xbf16>
    %45 = vector.shape_cast %44 : vector<1x64x1024xbf16> to vector<64x1024xbf16>
    %cst_20 = arith.constant dense<0.000000e+00> : vector<8x1024xf32>
    %46 = tpu.matmul %43, %45, %cst_20 {dimension_numbers = #tpu.dot_dimension_numbers<[1], [0], [0], [1], [0, 0, 1, 1], [], []>} : vector<8x64xbf16>, vector<64x1024xbf16>, vector<8x1024xf32> -> vector<8x1024xf32>
    %c0_21 = arith.constant 0 : index
    %c0_22 = arith.constant 0 : index
    %c0_23 = arith.constant 0 : index
    %47 = vector.load %arg9[%c0_21, %c0_22, %c0_23] : memref<1x1x1024xf32, #tpu.memory_space<vmem>>, vector<1x1x1024xf32>
    %48 = vector.shape_cast %47 : vector<1x1x1024xf32> to vector<1x1024xf32>
    %49 = vector.broadcast %48 : vector<1x1024xf32> to vector<8x1024xf32>
    %50 = arith.addf %46, %49 : vector<8x1024xf32>
    %cst_24 = arith.constant 0.000000e+00 : f32
    %51 = vector.broadcast %cst_24 : f32 to vector<8x1024xf32>
    %52 = arith.cmpf ogt, %50, %51 : vector<8x1024xf32>
    %cst_25 = arith.constant 0.000000e+00 : f32
    %53 = vector.broadcast %cst_25 : f32 to vector<8x1024xf32>
    %54 = arith.minimumf %50, %53 : vector<8x1024xf32>
    %55 = math.exp %54 : vector<8x1024xf32>
    %cst_26 = arith.constant 1.000000e+00 : f32
    %56 = vector.broadcast %cst_26 : f32 to vector<8x1024xf32>
    %57 = arith.subf %55, %56 : vector<8x1024xf32>
    %58 = arith.select %52, %50, %57 : vector<8x1024xi1>, vector<8x1024xf32>
    %c0_27 = arith.constant 0 : index
    %c0_28 = arith.constant 0 : index
    %c0_29 = arith.constant 0 : index
    %59 = vector.load %arg10[%c0_27, %c0_28, %c0_29] : memref<1x1024x1024xi8, #tpu.memory_space<vmem>>, vector<1x1024x1024xi8>
    %60 = vector.shape_cast %59 : vector<1x1024x1024xi8> to vector<1024x1024xi8>
    %61 = arith.sitofp %60 : vector<1024x1024xi8> to vector<1024x1024xbf16>
    %62 = arith.truncf %58 : vector<8x1024xf32> to vector<8x1024xbf16>
    %cst_30 = arith.constant dense<0.000000e+00> : vector<8x1024xf32>
    %63 = tpu.matmul %62, %61, %cst_30 {dimension_numbers = #tpu.dot_dimension_numbers<[1], [0], [0], [1], [0, 0, 1, 1], [], []>} : vector<8x1024xbf16>, vector<1024x1024xbf16>, vector<8x1024xf32> -> vector<8x1024xf32>
    %c0_31 = arith.constant 0 : index
    %c0_32 = arith.constant 0 : index
    %c0_33 = arith.constant 0 : index
    %64 = vector.load %arg11[%c0_31, %c0_32, %c0_33] : memref<1x1x1024xf32, #tpu.memory_space<vmem>>, vector<1x1x1024xf32>
    %65 = vector.shape_cast %64 : vector<1x1x1024xf32> to vector<1x1024xf32>
    %66 = vector.broadcast %65 : vector<1x1024xf32> to vector<8x1024xf32>
    %67 = arith.mulf %63, %66 : vector<8x1024xf32>
    %c0_34 = arith.constant 0 : index
    %c0_35 = arith.constant 0 : index
    %c0_36 = arith.constant 0 : index
    %68 = vector.load %arg12[%c0_34, %c0_35, %c0_36] : memref<1x1x1024xf32, #tpu.memory_space<vmem>>, vector<1x1x1024xf32>
    %69 = vector.shape_cast %68 : vector<1x1x1024xf32> to vector<1x1024xf32>
    %70 = vector.broadcast %69 : vector<1x1024xf32> to vector<8x1024xf32>
    %71 = arith.addf %67, %70 : vector<8x1024xf32>
    %cst_37 = arith.constant 0.000000e+00 : f32
    %72 = vector.broadcast %cst_37 : f32 to vector<8x1024xf32>
    %73 = arith.cmpf ogt, %71, %72 : vector<8x1024xf32>
    %cst_38 = arith.constant 0.000000e+00 : f32
    %74 = vector.broadcast %cst_38 : f32 to vector<8x1024xf32>
    %75 = arith.minimumf %71, %74 : vector<8x1024xf32>
    %76 = math.exp %75 : vector<8x1024xf32>
    %cst_39 = arith.constant 1.000000e+00 : f32
    %77 = vector.broadcast %cst_39 : f32 to vector<8x1024xf32>
    %78 = arith.subf %76, %77 : vector<8x1024xf32>
    %79 = arith.select %73, %71, %78 : vector<8x1024xi1>, vector<8x1024xf32>
    %80 = arith.truncf %79 : vector<8x1024xf32> to vector<8x1024xbf16>
    %c0_40 = arith.constant 0 : index
    %c0_41 = arith.constant 0 : index
    %c0_42 = arith.constant 0 : index
    %81 = vector.load %arg13[%c0_40, %c0_41, %c0_42] : memref<1x1024x32xbf16, #tpu.memory_space<vmem>>, vector<1x1024x32xbf16>
    %82 = vector.shape_cast %81 : vector<1x1024x32xbf16> to vector<1024x32xbf16>
    %cst_43 = arith.constant dense<0.000000e+00> : vector<8x32xf32>
    %83 = tpu.matmul %80, %82, %cst_43 {dimension_numbers = #tpu.dot_dimension_numbers<[1], [0], [0], [1], [0, 0, 1, 1], [], []>} : vector<8x1024xbf16>, vector<1024x32xbf16>, vector<8x32xf32> -> vector<8x32xf32>
    %c0_44 = arith.constant 0 : index
    %c0_45 = arith.constant 0 : index
    %c0_46 = arith.constant 0 : index
    %84 = vector.load %arg14[%c0_44, %c0_45, %c0_46] : memref<1x1x32xf32, #tpu.memory_space<vmem>>, vector<1x1x32xf32>
    %85 = vector.shape_cast %84 : vector<1x1x32xf32> to vector<1x32xf32>
    %86 = vector.broadcast %85 : vector<1x32xf32> to vector<8x32xf32>
    %87 = arith.addf %83, %86 : vector<8x32xf32>
    %c0_47 = arith.constant 0 : index
    %c0_48 = arith.constant 0 : index
    %c0_49 = arith.constant 0 : index
    %88 = vector.load %arg15[%c0_47, %c0_48, %c0_49] : memref<1x8x32xf32, #tpu.memory_space<vmem>>, vector<1x8x32xf32>
    %89 = vector.shape_cast %88 : vector<1x8x32xf32> to vector<8x32xf32>
    %90 = arith.addf %87, %89 : vector<8x32xf32>
    %91 = vector.extract_strided_slice %90 {offsets = [0, 0], sizes = [8, 8], strides = [1, 1]} : vector<8x32xf32> to vector<8x8xf32>
    %92 = vector.extract_strided_slice %90 {offsets = [0, 8], sizes = [8, 8], strides = [1, 1]} : vector<8x32xf32> to vector<8x8xf32>
    %93 = vector.extract_strided_slice %90 {offsets = [0, 16], sizes = [8, 8], strides = [1, 1]} : vector<8x32xf32> to vector<8x8xf32>
    %94 = vector.extract_strided_slice %90 {offsets = [0, 24], sizes = [8, 8], strides = [1, 1]} : vector<8x32xf32> to vector<8x8xf32>
    %95 = arith.maximumf %91, %92 : vector<8x8xf32>
    %96 = arith.maximumf %93, %94 : vector<8x8xf32>
    %97 = arith.maximumf %95, %96 : vector<8x8xf32>
    %98 = arith.cmpf oge, %91, %97 : vector<8x8xf32>
    %c0_i32 = arith.constant 0 : i32
    %c4_i32 = arith.constant 4 : i32
    %99 = vector.broadcast %c0_i32 : i32 to vector<8x8xi32>
    %100 = vector.broadcast %c4_i32 : i32 to vector<8x8xi32>
    %101 = arith.select %98, %99, %100 : vector<8x8xi1>, vector<8x8xi32>
    %102 = arith.cmpf oge, %92, %97 : vector<8x8xf32>
    %c1_i32 = arith.constant 1 : i32
    %c4_i32_50 = arith.constant 4 : i32
    %103 = vector.broadcast %c1_i32 : i32 to vector<8x8xi32>
    %104 = vector.broadcast %c4_i32_50 : i32 to vector<8x8xi32>
    %105 = arith.select %102, %103, %104 : vector<8x8xi1>, vector<8x8xi32>
    %106 = arith.cmpf oge, %93, %97 : vector<8x8xf32>
    %c2_i32 = arith.constant 2 : i32
    %c4_i32_51 = arith.constant 4 : i32
    %107 = vector.broadcast %c2_i32 : i32 to vector<8x8xi32>
    %108 = vector.broadcast %c4_i32_51 : i32 to vector<8x8xi32>
    %109 = arith.select %106, %107, %108 : vector<8x8xi1>, vector<8x8xi32>
    %110 = arith.cmpf oge, %94, %97 : vector<8x8xf32>
    %c3_i32 = arith.constant 3 : i32
    %c4_i32_52 = arith.constant 4 : i32
    %111 = vector.broadcast %c3_i32 : i32 to vector<8x8xi32>
    %112 = vector.broadcast %c4_i32_52 : i32 to vector<8x8xi32>
    %113 = arith.select %110, %111, %112 : vector<8x8xi1>, vector<8x8xi32>
    %114 = arith.minsi %101, %105 : vector<8x8xi32>
    %115 = arith.minsi %109, %113 : vector<8x8xi32>
    %116 = arith.minsi %114, %115 : vector<8x8xi32>
    %c0_i32_53 = arith.constant 0 : i32
    %117 = vector.broadcast %c0_i32_53 : i32 to vector<8x8xi32>
    %118 = arith.cmpi eq, %116, %117 : vector<8x8xi32>
    %119 = arith.extui %118 : vector<8x8xi1> to vector<8x8xi32>
    %120 = arith.sitofp %119 : vector<8x8xi32> to vector<8x8xf32>
    %c1_i32_54 = arith.constant 1 : i32
    %121 = vector.broadcast %c1_i32_54 : i32 to vector<8x8xi32>
    %122 = arith.cmpi eq, %116, %121 : vector<8x8xi32>
    %123 = arith.extui %122 : vector<8x8xi1> to vector<8x8xi32>
    %124 = arith.sitofp %123 : vector<8x8xi32> to vector<8x8xf32>
    %c2_i32_55 = arith.constant 2 : i32
    %125 = vector.broadcast %c2_i32_55 : i32 to vector<8x8xi32>
    %126 = arith.cmpi eq, %116, %125 : vector<8x8xi32>
    %127 = arith.extui %126 : vector<8x8xi1> to vector<8x8xi32>
    %128 = arith.sitofp %127 : vector<8x8xi32> to vector<8x8xf32>
    %c3_i32_56 = arith.constant 3 : i32
    %129 = vector.broadcast %c3_i32_56 : i32 to vector<8x8xi32>
    %130 = arith.cmpi eq, %116, %129 : vector<8x8xi32>
    %131 = arith.extui %130 : vector<8x8xi1> to vector<8x8xi32>
    %132 = arith.sitofp %131 : vector<8x8xi32> to vector<8x8xf32>
    %cst_57 = arith.constant 0.000000e+00 : f32
    %133 = vector.broadcast %cst_57 : f32 to vector<8x64xf32>
    %134 = tpu.concatenate %41, %120, %124, %128, %132, %133 in 1 : vector<8x32xf32>, vector<8x8xf32>, vector<8x8xf32>, vector<8x8xf32>, vector<8x8xf32>, vector<8x64xf32> -> vector<8x128xf32>
    %c0_58 = arith.constant 0 : index
    %c0_59 = arith.constant 0 : index
    %c0_60 = arith.constant 0 : index
    %135 = vector.load %arg16[%c0_58, %c0_59, %c0_60] : memref<1x8x128xf32, #tpu.memory_space<vmem>>, vector<1x8x128xf32>
    %136 = vector.shape_cast %135 : vector<1x8x128xf32> to vector<8x128xf32>
    %137 = vector.shape_cast %134 : vector<8x128xf32> to vector<1x8x128xf32>
    tpu.vector_store %arg16[%c0_58, %c0_59, %c0_60], %137 {strides = array<i32>} : memref<1x8x128xf32, #tpu.memory_space<vmem>>, vector<1x8x128xf32>,
    return
  }
  func.func @transform_0(%arg0: i32) -> (i32, i32) {
    %c0_i32 = arith.constant 0 : i32
    %c0_i32_0 = arith.constant 0 : i32
    %c0_i32_1 = arith.constant 0 : i32
    return %c0_i32, %c0_i32_0 : i32, i32
  }
  func.func @transform_1(%arg0: i32) -> (i32, i32) {
    %c0_i32 = arith.constant 0 : i32
    %c0_i32_0 = arith.constant 0 : i32
    %c0_i32_1 = arith.constant 0 : i32
    return %c0_i32, %c0_i32_0 : i32, i32
  }
  func.func @transform_2(%arg0: i32) -> (i32, i32) {
    %c0_i32 = arith.constant 0 : i32
    %c0_i32_0 = arith.constant 0 : i32
    %c0_i32_1 = arith.constant 0 : i32
    return %c0_i32, %c0_i32_0 : i32, i32
  }
  func.func @transform_3(%arg0: i32) -> (i32, i32) {
    %c0_i32 = arith.constant 0 : i32
    %c0_i32_0 = arith.constant 0 : i32
    %c0_i32_1 = arith.constant 0 : i32
    return %c0_i32, %c0_i32_0 : i32, i32
  }
  func.func @transform_4(%arg0: i32) -> (i32, i32) {
    %c0_i32 = arith.constant 0 : i32
    %c0_i32_0 = arith.constant 0 : i32
    %c0_i32_1 = arith.constant 0 : i32
    return %c0_i32, %c0_i32_0 : i32, i32
  }
  func.func @transform_5(%arg0: i32) -> (i32, i32) {
    %c0_i32 = arith.constant 0 : i32
    %c0_i32_0 = arith.constant 0 : i32
    %c0_i32_1 = arith.constant 0 : i32
    return %c0_i32, %c0_i32_0 : i32, i32
  }
  func.func @transform_6(%arg0: i32) -> (i32, i32) {
    %c0_i32 = arith.constant 0 : i32
    %c0_i32_0 = arith.constant 0 : i32
    %c0_i32_1 = arith.constant 0 : i32
    return %c0_i32, %c0_i32_0 : i32, i32
  }
  func.func @transform_7(%arg0: i32) -> (i32, i32, i32) {
    %c0_i32 = arith.constant 0 : i32
    %c0_i32_0 = arith.constant 0 : i32
    %c0_i32_1 = arith.constant 0 : i32
    return %arg0, %c0_i32, %c0_i32_0 : i32, i32, i32
  }
  func.func @transform_8(%arg0: i32) -> (i32, i32, i32) {
    %c0_i32 = arith.constant 0 : i32
    %c0_i32_0 = arith.constant 0 : i32
    %c0_i32_1 = arith.constant 0 : i32
    return %arg0, %c0_i32, %c0_i32_0 : i32, i32, i32
  }
  func.func @transform_9(%arg0: i32) -> (i32, i32, i32) {
    %c0_i32 = arith.constant 0 : i32
    %c0_i32_0 = arith.constant 0 : i32
    %c0_i32_1 = arith.constant 0 : i32
    return %arg0, %c0_i32, %c0_i32_0 : i32, i32, i32
  }
  func.func @transform_10(%arg0: i32) -> (i32, i32, i32) {
    %c0_i32 = arith.constant 0 : i32
    %c0_i32_0 = arith.constant 0 : i32
    %c0_i32_1 = arith.constant 0 : i32
    return %arg0, %c0_i32, %c0_i32_0 : i32, i32, i32
  }
  func.func @transform_11(%arg0: i32) -> (i32, i32, i32) {
    %c0_i32 = arith.constant 0 : i32
    %c0_i32_0 = arith.constant 0 : i32
    %c0_i32_1 = arith.constant 0 : i32
    return %arg0, %c0_i32, %c0_i32_0 : i32, i32, i32
  }
  func.func @transform_12(%arg0: i32) -> (i32, i32, i32) {
    %c0_i32 = arith.constant 0 : i32
    %c0_i32_0 = arith.constant 0 : i32
    %c0_i32_1 = arith.constant 0 : i32
    return %arg0, %c0_i32, %c0_i32_0 : i32, i32, i32
  }
  func.func @transform_13(%arg0: i32) -> (i32, i32, i32) {
    %c0_i32 = arith.constant 0 : i32
    %c0_i32_0 = arith.constant 0 : i32
    %c0_i32_1 = arith.constant 0 : i32
    return %arg0, %c0_i32, %c0_i32_0 : i32, i32, i32
  }
  func.func @transform_14(%arg0: i32) -> (i32, i32, i32) {
    %c0_i32 = arith.constant 0 : i32
    %c0_i32_0 = arith.constant 0 : i32
    %c0_i32_1 = arith.constant 0 : i32
    return %arg0, %c0_i32, %c0_i32_0 : i32, i32, i32
  }
  func.func @transform_15(%arg0: i32) -> (i32, i32, i32) {
    %c0_i32 = arith.constant 0 : i32
    %c0_i32_0 = arith.constant 0 : i32
    %c0_i32_1 = arith.constant 0 : i32
    return %arg0, %c0_i32, %c0_i32_0 : i32, i32, i32
  }
}

</mosaic_0001>

<llo_original>
// kernel: tpu_custom_call.1
$region0: #{tpu_custom_call.1}
  #allocation0 [shape = 'u32[]', space=smem, size = 0x4, offset = 0x4, fixed_abs, tag = 'smem constant byte address 0x4 - core index']
  #allocation1 [shape = 'u32[144,128]{1,0:T(1,128)}', space=vmem, size = 0x12000, scoped, tag = 'internal scratch']
  %s0 = inlined_call_operand.hbm [shape: f32[8,40], index: 0, kind: input, shape index: {}]
  %s1 = inlined_call_operand.hbm [shape: f32[8,32], index: 1, kind: input, shape index: {}]
  %s2 = inlined_call_operand.hbm [shape: f32[8,32], index: 2, kind: input, shape index: {}]
  %s3 = inlined_call_operand.hbm [shape: bf16[40,96], index: 3, kind: input, shape index: {}]
  %s4 = inlined_call_operand.hbm [shape: bf16[32,96], index: 4, kind: input, shape index: {}]
  %s5 = inlined_call_operand.hbm [shape: f32[1,96], index: 5, kind: input, shape index: {}]
  %s6 = inlined_call_operand.hbm [shape: f32[1,96], index: 6, kind: input, shape index: {}]
  %s7 = inlined_call_operand.hbm [shape: bf16[2,64,1024], index: 7, kind: input, shape index: {}]
  %s8 = inlined_call_operand.hbm [shape: f32[2,1,1024], index: 8, kind: input, shape index: {}]
  %s9 = inlined_call_operand.hbm [shape: s8[2,1024,1024], index: 9, kind: input, shape index: {}]
  %s10 = inlined_call_operand.hbm [shape: f32[2,1,1024], index: 10, kind: input, shape index: {}]
  %s11 = inlined_call_operand.hbm [shape: f32[2,1,1024], index: 11, kind: input, shape index: {}]
  %s12 = inlined_call_operand.vmem [shape: bf16[2,1024,32], index: 12, kind: input, shape index: {}]
  %s13 = inlined_call_operand.hbm [shape: f32[2,1,32], index: 13, kind: input, shape index: {}]
  %s14 = inlined_call_operand.hbm [shape: f32[2,8,32], index: 14, kind: input, shape index: {}]
  %s15 = inlined_call_operand.hbm [shape: f32[2,8,128], index: 15, kind: output, shape index: {}]
  %s16 = sld [smem:[#allocation0]]
  $region149: #{tpu_custom_call.1} parent=0
    _
  %s18 = ssub.s32 1, %s16
  %s19 = scalar_select 0, %s18, %s16
  $region1: #{tpu_custom_call.1} parent=0
    #allocation2 [shape = 'u8[4096]{0}', space=vmem, size = 0x1000, scoped, tag = 'input window, operand 0, single buffered']
    #allocation3 [shape = 's32[2]{0}', space=sflag, size = 0x8, scoped, tag = 'scoped memory for tpu_custom_call.1']
    #allocation4 [shape = 's32[2]{0}', space=sflag, size = 0x8, scoped, tag = 'scoped memory for tpu_custom_call.1']
    #allocation5 [shape = 'u8[4096]{0}', space=vmem, size = 0x1000, scoped, tag = 'input window, operand 1, single buffered']
    #allocation6 [shape = 's32[1]{0}', space=sflag, size = 0x4, scoped, tag = 'scoped memory for tpu_custom_call.1']
    #allocation7 [shape = 'u8[4096]{0}', space=vmem, size = 0x1000, scoped, tag = 'input window, operand 2, single buffered']
    #allocation8 [shape = 'u8[10240]{0}', space=vmem, size = 0x2800, scoped, tag = 'input window, operand 3, single buffered']
    #allocation9 [shape = 's32[1]{0}', space=sflag, size = 0x4, scoped, tag = 'scoped memory for tpu_custom_call.1']
    #allocation10 [shape = 'u8[8192]{0}', space=vmem, size = 0x2000, scoped, tag = 'input window, operand 4, single buffered']
    #allocation11 [shape = 'u8[512]{0}', space=vmem, size = 0x400, scoped, tag = 'input window, operand 5, single buffered']
    #allocation12 [shape = 's32[1]{0}', space=sflag, size = 0x4, scoped, tag = 'scoped memory for tpu_custom_call.1']
    #allocation13 [shape = 'u8[512]{0}', space=vmem, size = 0x400, scoped, tag = 'input window, operand 6, single buffered']
    #allocation14 [shape = 'u8[262144]{0}', space=vmem, size = 0x40000, scoped, tag = 'input window, operand 7']
    #allocation15 [shape = 's32[2]{0}', space=sflag, size = 0x8, scoped, tag = 'scoped memory for tpu_custom_call.1']
    #allocation16 [shape = 'u8[8192]{0}', space=vmem, size = 0x2000, scoped, tag = 'input window, operand 8']
    #allocation17 [shape = 'u8[2097152]{0}', space=vmem, size = 0x200000, scoped, tag = 'input window, operand 9']
    #allocation18 [shape = 's32[2]{0}', space=sflag, size = 0x8, scoped, tag = 'scoped memory for tpu_custom_call.1']
    #allocation19 [shape = 'u8[8192]{0}', space=vmem, size = 0x2000, scoped, tag = 'input window, operand 10']
    #allocation20 [shape = 'u8[8192]{0}', space=vmem, size = 0x2000, scoped, tag = 'input window, operand 11']
    #allocation21 [shape = 's32[2]{0}', space=sflag, size = 0x8, scoped, tag = 'scoped memory for tpu_custom_call.1']
    #allocation22 [shape = 'u8[1024]{0}', space=vmem, size = 0x400, scoped, tag = 'input window, operand 13']
    #allocation23 [shape = 'u8[8192]{0}', space=vmem, size = 0x2000, scoped, tag = 'input window, operand 14']
    #allocation24 [shape = 's32[2]{0}', space=sflag, size = 0x8, scoped, tag = 'scoped memory for tpu_custom_call.1']
    #allocation25 [shape = 'u8[8192]{0}', space=vmem, size = 0x2000, scoped, tag = 'output window, operand 0']
    %20 = vsyncpa [#allocation3], 0
    %21 = vsyncpa [#allocation6], 0
    %22 = vsyncpa [#allocation9], 0
    %23 = vsyncpa [#allocation12], 0
    %24 = vsyncpa [#allocation15], 0
    %s25 = scalar_lea.sflag [#allocation15], 1
    %26 = vsyncpa %s25, 0
    %27 = vsyncpa [#allocation18], 0
    %s28 = scalar_lea.sflag [#allocation18], 1
    %29 = vsyncpa %s28, 0
    %30 = vsyncpa [#allocation21], 0
    %s31 = scalar_lea.sflag [#allocation21], 1
    %32 = vsyncpa %s31, 0
    %33 = vsyncpa [#allocation24], 0
    %s34 = scalar_lea.sflag [#allocation24], 1
    %35 = vsyncpa %s34, 0
    %36 = vsyncpa [#allocation4], 0
    %s37 = scalar_lea.sflag [#allocation4], 1
    %38 = vsyncpa %s37, 0
    loop: start=0, step=1, limit=4
    $region2: #{tpu_custom_call.1} parent=1 // loop_pre_header
      _
    $region3: #{tpu_custom_call.1} parent=1 // loop_header
      %s40 = sphi 0, %s44
      %p41 = scmp.ge.s32.totalorder %s40, 4
      %s48 = sphi 0, %s48
      %s50 = sphi 0, %s48
      %s51 = sphi 0, %s50
      %s65 = sphi 0, %s51
      %s69 = sphi 0, %s69
      %s71 = sphi 0, %s69
      %s72 = sphi 0, %s71
      %s86 = sphi 0, %s72
      %s90 = sphi 0, %s90
      %s92 = sphi 0, %s90
      %s93 = sphi 0, %s92
      %s107 = sphi 0, %s93
      %s111 = sphi 0, %s111
      %s113 = sphi 0, %s111
      %s114 = sphi 0, %s113
      %s128 = sphi 0, %s114
      %s132 = sphi 0, %s132
      %s134 = sphi 0, %s132
      %s135 = sphi 0, %s134
      %s149 = sphi 0, %s135
      %s153 = sphi 0, %s153
      %s155 = sphi 0, %s153
      %s156 = sphi 0, %s155
      %s170 = sphi 0, %s156
      %s174 = sphi 0, %s174
      %s176 = sphi 0, %s174
      %s177 = sphi 0, %s176
      %s191 = sphi 0, %s177
      %s197 = sphi 0, %s199
      %s200 = sphi 0, %s197
      %s201 = sphi 0, %s200
      %s217 = sphi 0, %s201
      %s223 = sphi 0, %s225
      %s226 = sphi 0, %s223
      %s227 = sphi 0, %s226
      %s243 = sphi 0, %s227
      %s249 = sphi 0, %s251
      %s252 = sphi 0, %s249
      %s253 = sphi 0, %s252
      %s269 = sphi 0, %s253
      %s275 = sphi 0, %s277
      %s278 = sphi 0, %s275
      %s279 = sphi 0, %s278
      %s295 = sphi 0, %s279
      %s301 = sphi 0, %s303
      %s304 = sphi 0, %s301
      %s305 = sphi 0, %s304
      %s321 = sphi 0, %s305
      %s327 = sphi 0, %s329
      %s330 = sphi 0, %s327
      %s331 = sphi 0, %s330
      %s347 = sphi 0, %s331
      %s353 = sphi 0, %s355
      %s356 = sphi 0, %s353
      %s357 = sphi 0, %s356
      %s373 = sphi 0, %s357
      %s379 = sphi 0, %s381
      %s382 = sphi 0, %s379
      %s383 = sphi 0, %s382
      %s399 = sphi 0, %s383
      %s405 = sphi 0, %s407
      %s408 = sphi 0, %s405
      %s409 = sphi 0, %s408
      %s425 = sphi 0, %s409
    $region4: #{tpu_custom_call.1} parent=1 // loop_header_branch
      %43 = sbr.rel (%p41) target = $region8
    $region5: #{tpu_custom_call.1} parent=1 // loop_body
      %s45 = ssub.s32 %s40, 1
      %s46 = ssub.s32 %s40, 2
      %s47 = sadd.s32 %s40, 1
      %s49 = sadd.s32 %s48, 1
      %p52 = scmp.eq.s32.totalorder %s40, 1
      %p53 = scmp.ne.s32.totalorder %s48, %s50
      %p54 = scmp.eq.s32.totalorder %s40, 0
      %p55 = por %p53, %p54
      %p56 = scmp.ne.s32.totalorder %s48, %s50
      %p57 = scmp.eq.s32.totalorder %s45, 1
      %p58 = por %p56, %p57
      %p59 = scmp.ne.s32.totalorder %s50, %s51
      %p60 = scmp.eq.s32.totalorder %s45, 0
      %p61 = por %p59, %p60
      %p62 = scmp.ne.s32.totalorder %s50, %s51
      %p63 = scmp.eq.s32.totalorder %s46, 1
      %p64 = por %p62, %p63
      %p66 = scmp.ne.s32.totalorder %s51, %s65
      %p67 = scmp.eq.s32.totalorder %s46, 0
      %p68 = por %p66, %p67
      %s70 = sadd.s32 %s69, 1
      %p73 = scmp.eq.s32.totalorder %s40, 1
      %p74 = scmp.ne.s32.totalorder %s69, %s71
      %p75 = scmp.eq.s32.totalorder %s40, 0
      %p76 = por %p74, %p75
      %p77 = scmp.ne.s32.totalorder %s69, %s71
      %p78 = scmp.eq.s32.totalorder %s45, 1
      %p79 = por %p77, %p78
      %p80 = scmp.ne.s32.totalorder %s71, %s72
      %p81 = scmp.eq.s32.totalorder %s45, 0
      %p82 = por %p80, %p81
      %p83 = scmp.ne.s32.totalorder %s71, %s72
      %p84 = scmp.eq.s32.totalorder %s46, 1
      %p85 = por %p83, %p84
      %p87 = scmp.ne.s32.totalorder %s72, %s86
      %p88 = scmp.eq.s32.totalorder %s46, 0
      %p89 = por %p87, %p88
      %s91 = sadd.s32 %s90, 1
      %p94 = scmp.eq.s32.totalorder %s40, 1
      %p95 = scmp.ne.s32.totalorder %s90, %s92
      %p96 = scmp.eq.s32.totalorder %s40, 0
      %p97 = por %p95, %p96
      %p98 = scmp.ne.s32.totalorder %s90, %s92
      %p99 = scmp.eq.s32.totalorder %s45, 1
      %p100 = por %p98, %p99
      %p101 = scmp.ne.s32.totalorder %s92, %s93
      %p102 = scmp.eq.s32.totalorder %s45, 0
      %p103 = por %p101, %p102
      %p104 = scmp.ne.s32.totalorder %s92, %s93
      %p105 = scmp.eq.s32.totalorder %s46, 1
      %p106 = por %p104, %p105
      %p108 = scmp.ne.s32.totalorder %s93, %s107
      %p109 = scmp.eq.s32.totalorder %s46, 0
      %p110 = por %p108, %p109
      %s112 = sadd.s32 %s111, 1
      %p115 = scmp.eq.s32.totalorder %s40, 1
      %p116 = scmp.ne.s32.totalorder %s111, %s113
      %p117 = scmp.eq.s32.totalorder %s40, 0
      %p118 = por %p116, %p117
      %p119 = scmp.ne.s32.totalorder %s111, %s113
      %p120 = scmp.eq.s32.totalorder %s45, 1
      %p121 = por %p119, %p120
      %p122 = scmp.ne.s32.totalorder %s113, %s114
      %p123 = scmp.eq.s32.totalorder %s45, 0
      %p124 = por %p122, %p123
      %p125 = scmp.ne.s32.totalorder %s113, %s114
      %p126 = scmp.eq.s32.totalorder %s46, 1
      %p127 = por %p125, %p126
      %p129 = scmp.ne.s32.totalorder %s114, %s128
      %p130 = scmp.eq.s32.totalorder %s46, 0
      %p131 = por %p129, %p130
      %s133 = sadd.s32 %s132, 1
      %p136 = scmp.eq.s32.totalorder %s40, 1
      %p137 = scmp.ne.s32.totalorder %s132, %s134
      %p138 = scmp.eq.s32.totalorder %s40, 0
      %p139 = por %p137, %p138
      %p140 = scmp.ne.s32.totalorder %s132, %s134
      %p141 = scmp.eq.s32.totalorder %s45, 1
      %p142 = por %p140, %p141
      %p143 = scmp.ne.s32.totalorder %s134, %s135
      %p144 = scmp.eq.s32.totalorder %s45, 0
      %p145 = por %p143, %p144
      %p146 = scmp.ne.s32.totalorder %s134, %s135
      %p147 = scmp.eq.s32.totalorder %s46, 1
      %p148 = por %p146, %p147
      %p150 = scmp.ne.s32.totalorder %s135, %s149
      %p151 = scmp.eq.s32.totalorder %s46, 0
      %p152 = por %p150, %p151
      %s154 = sadd.s32 %s153, 1
      %p157 = scmp.eq.s32.totalorder %s40, 1
      %p158 = scmp.ne.s32.totalorder %s153, %s155
      %p159 = scmp.eq.s32.totalorder %s40, 0
      %p160 = por %p158, %p159
      %p161 = scmp.ne.s32.totalorder %s153, %s155
      %p162 = scmp.eq.s32.totalorder %s45, 1
      %p163 = por %p161, %p162
      %p164 = scmp.ne.s32.totalorder %s155, %s156
      %p165 = scmp.eq.s32.totalorder %s45, 0
      %p166 = por %p164, %p165
      %p167 = scmp.ne.s32.totalorder %s155, %s156
      %p168 = scmp.eq.s32.totalorder %s46, 1
      %p169 = por %p167, %p168
      %p171 = scmp.ne.s32.totalorder %s156, %s170
      %p172 = scmp.eq.s32.totalorder %s46, 0
      %p173 = por %p171, %p172
      %s175 = sadd.s32 %s174, 1
      %p178 = scmp.eq.s32.totalorder %s40, 1
      %p179 = scmp.ne.s32.totalorder %s174, %s176
      %p180 = scmp.eq.s32.totalorder %s40, 0
      %p181 = por %p179, %p180
      %p182 = scmp.ne.s32.totalorder %s174, %s176
      %p183 = scmp.eq.s32.totalorder %s45, 1
      %p184 = por %p182, %p183
      %p185 = scmp.ne.s32.totalorder %s176, %s177
      %p186 = scmp.eq.s32.totalorder %s45, 0
      %p187 = por %p185, %p186
      %p188 = scmp.ne.s32.totalorder %s176, %s177
      %p189 = scmp.eq.s32.totalorder %s46, 1
      %p190 = por %p188, %p189
      %p192 = scmp.ne.s32.totalorder %s177, %s191
      %p193 = scmp.eq.s32.totalorder %s46, 0
      %p194 = por %p192, %p193
      %s195 = ssub.s32 %s40, %s47
      %p196 = scmp.eq.s32.totalorder %s195, 0
      %s198 = sadd.s32 %s197, 1
      %s199 = scalar_select %p196, %s197, %s198
      %p202 = pneg %p196
      %p203 = scmp.eq.s32.totalorder %s40, 1
      %p204 = por %p202, %p203
      %p205 = scmp.ne.s32.totalorder %s197, %s200
      %p206 = scmp.eq.s32.totalorder %s40, 0
      %p207 = por %p205, %p206
      %p208 = scmp.ne.s32.totalorder %s197, %s200
      %p209 = scmp.eq.s32.totalorder %s45, 1
      %p210 = por %p208, %p209
      %p211 = scmp.ne.s32.totalorder %s200, %s201
      %p212 = scmp.eq.s32.totalorder %s45, 0
      %p213 = por %p211, %p212
      %p214 = scmp.ne.s32.totalorder %s200, %s201
      %p215 = scmp.eq.s32.totalorder %s46, 1
      %p216 = por %p214, %p215
      %p218 = scmp.ne.s32.totalorder %s201, %s217
      %p219 = scmp.eq.s32.totalorder %s46, 0
      %p220 = por %p218, %p219
      %s221 = ssub.s32 %s40, %s47
      %p222 = scmp.eq.s32.totalorder %s221, 0
      %s224 = sadd.s32 %s223, 1
      %s225 = scalar_select %p222, %s223, %s224
      %p228 = pneg %p222
      %p229 = scmp.eq.s32.totalorder %s40, 1
      %p230 = por %p228, %p229
      %p231 = scmp.ne.s32.totalorder %s223, %s226
      %p232 = scmp.eq.s32.totalorder %s40, 0
      %p233 = por %p231, %p232
      %p234 = scmp.ne.s32.totalorder %s223, %s226
      %p235 = scmp.eq.s32.totalorder %s45, 1
      %p236 = por %p234, %p235
      %p237 = scmp.ne.s32.totalorder %s226, %s227
      %p238 = scmp.eq.s32.totalorder %s45, 0
      %p239 = por %p237, %p238
      %p240 = scmp.ne.s32.totalorder %s226, %s227
      %p241 = scmp.eq.s32.totalorder %s46, 1
      %p242 = por %p240, %p241
      %p244 = scmp.ne.s32.totalorder %s227, %s243
      %p245 = scmp.eq.s32.totalorder %s46, 0
      %p246 = por %p244, %p245
      %s247 = ssub.s32 %s40, %s47
      %p248 = scmp.eq.s32.totalorder %s247, 0
      %s250 = sadd.s32 %s249, 1
      %s251 = scalar_select %p248, %s249, %s250
      %p254 = pneg %p248
      %p255 = scmp.eq.s32.totalorder %s40, 1
      %p256 = por %p254, %p255
      %p257 = scmp.ne.s32.totalorder %s249, %s252
      %p258 = scmp.eq.s32.totalorder %s40, 0
      %p259 = por %p257, %p258
      %p260 = scmp.ne.s32.totalorder %s249, %s252
      %p261 = scmp.eq.s32.totalorder %s45, 1
      %p262 = por %p260, %p261
      %p263 = scmp.ne.s32.totalorder %s252, %s253
      %p264 = scmp.eq.s32.totalorder %s45, 0
      %p265 = por %p263, %p264
      %p266 = scmp.ne.s32.totalorder %s252, %s253
      %p267 = scmp.eq.s32.totalorder %s46, 1
      %p268 = por %p266, %p267
      %p270 = scmp.ne.s32.totalorder %s253, %s269
      %p271 = scmp.eq.s32.totalorder %s46, 0
      %p272 = por %p270, %p271
      %s273 = ssub.s32 %s40, %s47
      %p274 = scmp.eq.s32.totalorder %s273, 0
      %s276 = sadd.s32 %s275, 1
      %s277 = scalar_select %p274, %s275, %s276
      %p280 = pneg %p274
      %p281 = scmp.eq.s32.totalorder %s40, 1
      %p282 = por %p280, %p281
      %p283 = scmp.ne.s32.totalorder %s275, %s278
      %p284 = scmp.eq.s32.totalorder %s40, 0
      %p285 = por %p283, %p284
      %p286 = scmp.ne.s32.totalorder %s275, %s278
      %p287 = scmp.eq.s32.totalorder %s45, 1
      %p288 = por %p286, %p287
      %p289 = scmp.ne.s32.totalorder %s278, %s279
      %p290 = scmp.eq.s32.totalorder %s45, 0
      %p291 = por %p289, %p290
      %p292 = scmp.ne.s32.totalorder %s278, %s279
      %p293 = scmp.eq.s32.totalorder %s46, 1
      %p294 = por %p292, %p293
      %p296 = scmp.ne.s32.totalorder %s279, %s295
      %p297 = scmp.eq.s32.totalorder %s46, 0
      %p298 = por %p296, %p297
      %s299 = ssub.s32 %s40, %s47
      %p300 = scmp.eq.s32.totalorder %s299, 0
      %s302 = sadd.s32 %s301, 1
      %s303 = scalar_select %p300, %s301, %s302
      %p306 = pneg %p300
      %p307 = scmp.eq.s32.totalorder %s40, 1
      %p308 = por %p306, %p307
      %p309 = scmp.ne.s32.totalorder %s301, %s304
      %p310 = scmp.eq.s32.totalorder %s40, 0
      %p311 = por %p309, %p310
      %p312 = scmp.ne.s32.totalorder %s301, %s304
      %p313 = scmp.eq.s32.totalorder %s45, 1
      %p314 = por %p312, %p313
      %p315 = scmp.ne.s32.totalorder %s304, %s305
      %p316 = scmp.eq.s32.totalorder %s45, 0
      %p317 = por %p315, %p316
      %p318 = scmp.ne.s32.totalorder %s304, %s305
      %p319 = scmp.eq.s32.totalorder %s46, 1
      %p320 = por %p318, %p319
      %p322 = scmp.ne.s32.totalorder %s305, %s321
      %p323 = scmp.eq.s32.totalorder %s46, 0
      %p324 = por %p322, %p323
      %s325 = ssub.s32 %s40, %s47
      %p326 = scmp.eq.s32.totalorder %s325, 0
      %s328 = sadd.s32 %s327, 1
      %s329 = scalar_select %p326, %s327, %s328
      %p332 = pneg %p326
      %p333 = scmp.eq.s32.totalorder %s40, 1
      %p334 = por %p332, %p333
      %p335 = scmp.ne.s32.totalorder %s327, %s330
      %p336 = scmp.eq.s32.totalorder %s40, 0
      %p337 = por %p335, %p336
      %p338 = scmp.ne.s32.totalorder %s327, %s330
      %p339 = scmp.eq.s32.totalorder %s45, 1
      %p340 = por %p338, %p339
      %p341 = scmp.ne.s32.totalorder %s330, %s331
      %p342 = scmp.eq.s32.totalorder %s45, 0
      %p343 = por %p341, %p342
      %p344 = scmp.ne.s32.totalorder %s330, %s331
      %p345 = scmp.eq.s32.totalorder %s46, 1
      %p346 = por %p344, %p345
      %p348 = scmp.ne.s32.totalorder %s331, %s347
      %p349 = scmp.eq.s32.totalorder %s46, 0
      %p350 = por %p348, %p349
      %s351 = ssub.s32 %s40, %s47
      %p352 = scmp.eq.s32.totalorder %s351, 0
      %s354 = sadd.s32 %s353, 1
      %s355 = scalar_select %p352, %s353, %s354
      %p358 = pneg %p352
      %p359 = scmp.eq.s32.totalorder %s40, 1
      %p360 = por %p358, %p359
      %p361 = scmp.ne.s32.totalorder %s353, %s356
      %p362 = scmp.eq.s32.totalorder %s40, 0
      %p363 = por %p361, %p362
      %p364 = scmp.ne.s32.totalorder %s353, %s356
      %p365 = scmp.eq.s32.totalorder %s45, 1
      %p366 = por %p364, %p365
      %p367 = scmp.ne.s32.totalorder %s356, %s357
      %p368 = scmp.eq.s32.totalorder %s45, 0
      %p369 = por %p367, %p368
      %p370 = scmp.ne.s32.totalorder %s356, %s357
      %p371 = scmp.eq.s32.totalorder %s46, 1
      %p372 = por %p370, %p371
      %p374 = scmp.ne.s32.totalorder %s357, %s373
      %p375 = scmp.eq.s32.totalorder %s46, 0
      %p376 = por %p374, %p375
      %s377 = ssub.s32 %s40, %s47
      %p378 = scmp.eq.s32.totalorder %s377, 0
      %s380 = sadd.s32 %s379, 1
      %s381 = scalar_select %p378, %s379, %s380
      %p384 = pneg %p378
      %p385 = scmp.eq.s32.totalorder %s40, 1
      %p386 = por %p384, %p385
      %p387 = scmp.ne.s32.totalorder %s379, %s382
      %p388 = scmp.eq.s32.totalorder %s40, 0
      %p389 = por %p387, %p388
      %p390 = scmp.ne.s32.totalorder %s379, %s382
      %p391 = scmp.eq.s32.totalorder %s45, 1
      %p392 = por %p390, %p391
      %p393 = scmp.ne.s32.totalorder %s382, %s383
      %p394 = scmp.eq.s32.totalorder %s45, 0
      %p395 = por %p393, %p394
      %p396 = scmp.ne.s32.totalorder %s382, %s383
      %p397 = scmp.eq.s32.totalorder %s46, 1
      %p398 = por %p396, %p397
      %p400 = scmp.ne.s32.totalorder %s383, %s399
      %p401 = scmp.eq.s32.totalorder %s46, 0
      %p402 = por %p400, %p401
      %s403 = ssub.s32 %s40, %s47
      %p404 = scmp.eq.s32.totalorder %s403, 0
      %s406 = sadd.s32 %s405, 1
      %s407 = scalar_select %p404, %s405, %s406
      %p410 = pneg %p404
      %p411 = scmp.eq.s32.totalorder %s40, 1
      %p412 = por %p410, %p411
      %p413 = scmp.ne.s32.totalorder %s405, %s408
      %p414 = scmp.eq.s32.totalorder %s40, 0
      %p415 = por %p413, %p414
      %p416 = scmp.ne.s32.totalorder %s405, %s408
      %p417 = scmp.eq.s32.totalorder %s45, 1
      %p418 = por %p416, %p417
      %p419 = scmp.ne.s32.totalorder %s408, %s409
      %p420 = scmp.eq.s32.totalorder %s45, 0
      %p421 = por %p419, %p420
      %p422 = scmp.ne.s32.totalorder %s408, %s409
      %p423 = scmp.eq.s32.totalorder %s46, 1
      %p424 = por %p422, %p423
      %p426 = scmp.ne.s32.totalorder %s409, %s425
      %p427 = scmp.eq.s32.totalorder %s46, 0
      %p428 = por %p426, %p427
      %p429 = scmp.le.s32.totalorder 1, %s40
      %p430 = scmp.lt.s32.totalorder %s40, 3
      %p431 = pnand %p429, %p430
      %p432 = pneg %p431
      // Predicated region
      $region9: #{tpu_custom_call.1} parent=5 // pred_check
        _
      $region10: #{tpu_custom_call.1} parent=5 // pred_check_branch
        %434 = sbr.rel (%p431) target = $region12
      $region11: #{tpu_custom_call.1} parent=5 // pred_region
        %s435 = ssub.s32 %s40, 1
        // Predicated region
        $region13: #{tpu_custom_call.1} parent=11 // pred_check
          %p436 = pneg %p61
        $region14: #{tpu_custom_call.1} parent=11 // pred_check_branch
          %438 = sbr.rel (%p436) target = $region16
        $region15: #{tpu_custom_call.1} parent=11 // pred_region
          %s440 = ssub.s32 128, 128
          %441 = vsyncadd [#allocation3], %s440
          %s443 = sshll.u32 [#allocation2], 4
          %s444 = int_to_ptr.vmem [resolvable:$true] %s443
          %446 = dma.hbm_to_vmem [thread:$0]  %s0, 128, %s444, [#allocation3]
        $region16: #{tpu_custom_call.1} parent=11 // pred_fallthru
          _
        // Predicated region
        $region17: #{tpu_custom_call.1} parent=11 // pred_check
          %p447 = pneg %p82
        $region18: #{tpu_custom_call.1} parent=11 // pred_check_branch
          %449 = sbr.rel (%p447) target = $region20
        $region19: #{tpu_custom_call.1} parent=11 // pred_region
          %s451 = ssub.s32 128, 128
          %452 = vsyncadd [#allocation6], %s451
          %s454 = sshll.u32 [#allocation5], 4
          %s455 = int_to_ptr.vmem [resolvable:$true] %s454
          %457 = dma.hbm_to_vmem [thread:$0]  %s1, 128, %s455, [#allocation6]
        $region20: #{tpu_custom_call.1} parent=11 // pred_fallthru
          _
        // Predicated region
        $region21: #{tpu_custom_call.1} parent=11 // pred_check
          %p458 = pneg %p103
        $region22: #{tpu_custom_call.1} parent=11 // pred_check_branch
          %460 = sbr.rel (%p458) target = $region24
        $region23: #{tpu_custom_call.1} parent=11 // pred_region
          %s462 = ssub.s32 128, 128
          %463 = vsyncadd [#allocation6], %s462
          %s465 = sshll.u32 [#allocation7], 4
          %s466 = int_to_ptr.vmem [resolvable:$true] %s465
          %468 = dma.hbm_to_vmem [thread:$0]  %s2, 128, %s466, [#allocation6]
        $region24: #{tpu_custom_call.1} parent=11 // pred_fallthru
          _
        // Predicated region
        $region25: #{tpu_custom_call.1} parent=11 // pred_check
          %p469 = pneg %p124
        $region26: #{tpu_custom_call.1} parent=11 // pred_check_branch
          %471 = sbr.rel (%p469) target = $region28
        $region27: #{tpu_custom_call.1} parent=11 // pred_region
          %s473 = ssub.s32 320, 320
          %474 = vsyncadd [#allocation9], %s473
          %s475 = sshll.u32 [#allocation8], 4
          %s476 = int_to_ptr.vmem [resolvable:$true] %s475
          %481 = dma.hbm_to_vmem [thread:$0]  %s3, 320, %s476, [#allocation9], 64, 64, 4
        $region28: #{tpu_custom_call.1} parent=11 // pred_fallthru
          _
        // Predicated region
        $region29: #{tpu_custom_call.1} parent=11 // pred_check
          %p482 = pneg %p145
        $region30: #{tpu_custom_call.1} parent=11 // pred_check_branch
          %484 = sbr.rel (%p482) target = $region32
        $region31: #{tpu_custom_call.1} parent=11 // pred_region
          %s486 = ssub.s32 256, 256
          %487 = vsyncadd [#allocation9], %s486
          %s488 = sshll.u32 [#allocation10], 4
          %s489 = int_to_ptr.vmem [resolvable:$true] %s488
          %494 = dma.hbm_to_vmem [thread:$0]  %s4, 256, %s489, [#allocation9], 64, 64, 4
        $region32: #{tpu_custom_call.1} parent=11 // pred_fallthru
          _
        // Predicated region
        $region33: #{tpu_custom_call.1} parent=11 // pred_check
          %p495 = pneg %p166
        $region34: #{tpu_custom_call.1} parent=11 // pred_check_branch
          %497 = sbr.rel (%p495) target = $region36
        $region35: #{tpu_custom_call.1} parent=11 // pred_region
          %s499 = ssub.s32 16, 16
          %500 = vsyncadd [#allocation12], %s499
          %s502 = sshll.u32 [#allocation11], 4
          %s503 = int_to_ptr.vmem [resolvable:$true] %s502
          %505 = dma.hbm_to_vmem [thread:$0]  %s5, 16, %s503, [#allocation12]
        $region36: #{tpu_custom_call.1} parent=11 // pred_fallthru
          _
        // Predicated region
        $region37: #{tpu_custom_call.1} parent=11 // pred_check
          %p506 = pneg %p187
        $region38: #{tpu_custom_call.1} parent=11 // pred_check_branch
          %508 = sbr.rel (%p506) target = $region40
        $region39: #{tpu_custom_call.1} parent=11 // pred_region
          %s510 = ssub.s32 16, 16
          %511 = vsyncadd [#allocation12], %s510
          %s513 = sshll.u32 [#allocation13], 4
          %s514 = int_to_ptr.vmem [resolvable:$true] %s513
          %516 = dma.hbm_to_vmem [thread:$0]  %s6, 16, %s514, [#allocation12]
        $region40: #{tpu_custom_call.1} parent=11 // pred_fallthru
          _
      $region12: #{tpu_custom_call.1} parent=5 // pred_fallthru
        _
      %p517 = scmp.lt.s32.totalorder %s40, 2
      // Predicated region
      $region41: #{tpu_custom_call.1} parent=5 // pred_check
        %p518 = pneg %p517
      $region42: #{tpu_custom_call.1} parent=5 // pred_check_branch
        %520 = sbr.rel (%p518) target = $region44
      $region43: #{tpu_custom_call.1} parent=5 // pred_region
        // Predicated region
        $region45: #{tpu_custom_call.1} parent=43 // pred_check
          %p521 = pneg %p207
        $region46: #{tpu_custom_call.1} parent=43 // pred_check_branch
          %523 = sbr.rel (%p521) target = $region48
        $region47: #{tpu_custom_call.1} parent=43 // pred_region
          %s524 = sand.u32 %s40, 1
          %s525 = scalar_lea.sflag [#allocation15], %s524
          %s526 = sand.u32 %s197, 1
          %s527 = smul.addr %s526, 256
          %s528 = scalar_lea.vmem [#allocation14], %s527
          %s530 = ssub.s32 4096, 4096
          %531 = vsyncadd %s525, %s530
          %s532 = smul.addr %s40, 64
          %s533 = smul.addr %s532, 64
          %s534 = scalar_lea.hbm %s7, %s533
          %s535 = sshll.u32 %s528, 4
          %s536 = int_to_ptr.vmem [resolvable:$true] %s535
          %541 = dma.hbm_to_vmem [thread:$0]  %s534, 4096, %s536, %s525, 512, 512, 32
        $region48: #{tpu_custom_call.1} parent=43 // pred_fallthru
          _
        // Predicated region
        $region49: #{tpu_custom_call.1} parent=43 // pred_check
          %p542 = pneg %p233
        $region50: #{tpu_custom_call.1} parent=43 // pred_check_branch
          %544 = sbr.rel (%p542) target = $region52
        $region51: #{tpu_custom_call.1} parent=43 // pred_region
          %s545 = sand.u32 %s40, 1
          %s546 = scalar_lea.sflag [#allocation15], %s545
          %s547 = sand.u32 %s223, 1
          %s548 = smul.addr %s547, 8
          %s549 = scalar_lea.vmem [#allocation16], %s548
          %s551 = ssub.s32 128, 128
          %552 = vsyncadd %s546, %s551
          %s553 = smul.addr %s40, 8
          %s554 = smul.addr %s553, 16
          %s555 = scalar_lea.hbm %s8, %s554
          %s557 = sshll.u32 %s549, 4
          %s558 = int_to_ptr.vmem [resolvable:$true] %s557
          %560 = dma.hbm_to_vmem [thread:$0]  %s555, 128, %s558, %s546
        $region52: #{tpu_custom_call.1} parent=43 // pred_fallthru
          _
        // Predicated region
        $region53: #{tpu_custom_call.1} parent=43 // pred_check
          %p561 = pneg %p259
        $region54: #{tpu_custom_call.1} parent=43 // pred_check_branch
          %563 = sbr.rel (%p561) target = $region56
        $region55: #{tpu_custom_call.1} parent=43 // pred_region
          %s564 = sand.u32 %s40, 1
          %s565 = scalar_lea.sflag [#allocation18], %s564
          %s566 = sand.u32 %s249, 1
          %s567 = smul.addr %s566, 2048
          %s568 = scalar_lea.vmem [#allocation17], %s567
          %s570 = ssub.s32 32768, 32768
          %571 = vsyncadd %s565, %s570
          %s572 = smul.addr %s40, 256
          %s573 = smul.addr %s572, 128
          %s574 = scalar_lea.hbm %s9, %s573
          %s575 = sshll.u32 %s568, 4
          %s576 = int_to_ptr.vmem [resolvable:$true] %s575
          %581 = dma.hbm_to_vmem [thread:$0]  %s574, 32768, %s576, %s565, 1024, 1024, 64
        $region56: #{tpu_custom_call.1} parent=43 // pred_fallthru
          _
        // Predicated region
        $region57: #{tpu_custom_call.1} parent=43 // pred_check
          %p582 = pneg %p285
        $region58: #{tpu_custom_call.1} parent=43 // pred_check_branch
          %584 = sbr.rel (%p582) target = $region60
        $region59: #{tpu_custom_call.1} parent=43 // pred_region
          %s585 = sand.u32 %s40, 1
          %s586 = scalar_lea.sflag [#allocation18], %s585
          %s587 = sand.u32 %s275, 1
          %s588 = smul.addr %s587, 8
          %s589 = scalar_lea.vmem [#allocation19], %s588
          %s591 = ssub.s32 128, 128
          %592 = vsyncadd %s586, %s591
          %s593 = smul.addr %s40, 8
          %s594 = smul.addr %s593, 16
          %s595 = scalar_lea.hbm %s10, %s594
          %s597 = sshll.u32 %s589, 4
          %s598 = int_to_ptr.vmem [resolvable:$true] %s597
          %600 = dma.hbm_to_vmem [thread:$0]  %s595, 128, %s598, %s586
        $region60: #{tpu_custom_call.1} parent=43 // pred_fallthru
          _
        // Predicated region
        $region61: #{tpu_custom_call.1} parent=43 // pred_check
          %p601 = pneg %p311
        $region62: #{tpu_custom_call.1} parent=43 // pred_check_branch
          %603 = sbr.rel (%p601) target = $region64
        $region63: #{tpu_custom_call.1} parent=43 // pred_region
          %s604 = sand.u32 %s40, 1
          %s605 = scalar_lea.sflag [#allocation21], %s604
          %s606 = sand.u32 %s301, 1
          %s607 = smul.addr %s606, 8
          %s608 = scalar_lea.vmem [#allocation20], %s607
          %s610 = ssub.s32 128, 128
          %611 = vsyncadd %s605, %s610
          %s612 = smul.addr %s40, 8
          %s613 = smul.addr %s612, 16
          %s614 = scalar_lea.hbm %s11, %s613
          %s616 = sshll.u32 %s608, 4
          %s617 = int_to_ptr.vmem [resolvable:$true] %s616
          %619 = dma.hbm_to_vmem [thread:$0]  %s614, 128, %s617, %s605
        $region64: #{tpu_custom_call.1} parent=43 // pred_fallthru
          _
        // Predicated region
        $region65: #{tpu_custom_call.1} parent=43 // pred_check
          %p620 = pneg %p337
        $region66: #{tpu_custom_call.1} parent=43 // pred_check_branch
          %622 = sbr.rel (%p620) target = $region68
        $region67: #{tpu_custom_call.1} parent=43 // pred_region
          %p623 = scmp.lt.s32.totalorder %s40, 1
          %s624 = scalar_select %p623, %s40, 1
          %s625 = smul.addr %s624, 128
          %s626 = smul.addr %s625, 4
          %s627 = scalar_lea.vmem %s12, %s626
        $region68: #{tpu_custom_call.1} parent=43 // pred_fallthru
          _
        // Predicated region
        $region69: #{tpu_custom_call.1} parent=43 // pred_check
          %p628 = pneg %p363
        $region70: #{tpu_custom_call.1} parent=43 // pred_check_branch
          %630 = sbr.rel (%p628) target = $region72
        $region71: #{tpu_custom_call.1} parent=43 // pred_region
          %s631 = sand.u32 %s40, 1
          %s632 = scalar_lea.sflag [#allocation21], %s631
          %s633 = sand.u32 %s353, 1
          %s634 = scalar_lea.vmem [#allocation22], %s633
          %s636 = ssub.s32 16, 16
          %637 = vsyncadd %s632, %s636
          %s638 = smul.addr %s40, 16
          %s639 = scalar_lea.hbm %s13, %s638
          %s641 = sshll.u32 %s634, 4
          %s642 = int_to_ptr.vmem [resolvable:$true] %s641
          %644 = dma.hbm_to_vmem [thread:$0]  %s639, 16, %s642, %s632
        $region72: #{tpu_custom_call.1} parent=43 // pred_fallthru
          _
        // Predicated region
        $region73: #{tpu_custom_call.1} parent=43 // pred_check
          %p645 = pneg %p389
        $region74: #{tpu_custom_call.1} parent=43 // pred_check_branch
          %647 = sbr.rel (%p645) target = $region76
        $region75: #{tpu_custom_call.1} parent=43 // pred_region
          %s648 = sand.u32 %s379, 1
          %s649 = scalar_lea.sflag [#allocation24], %s648
          %s650 = sand.u32 %s379, 1
          %s651 = smul.addr %s650, 8
          %s652 = scalar_lea.vmem [#allocation23], %s651
          %s654 = ssub.s32 128, 128
          %655 = vsyncadd %s649, %s654
          %s656 = smul.addr %s40, 128
          %s657 = scalar_lea.hbm %s14, %s656
          %s659 = sshll.u32 %s652, 4
          %s660 = int_to_ptr.vmem [resolvable:$true] %s659
          %662 = dma.hbm_to_vmem [thread:$0]  %s657, 128, %s660, %s649
        $region76: #{tpu_custom_call.1} parent=43 // pred_fallthru
          _
      $region44: #{tpu_custom_call.1} parent=5 // pred_fallthru
        _
      %p663 = scmp.le.s32.totalorder 1, %s40
      %p664 = scmp.lt.s32.totalorder %s40, 3
      %p665 = pnand %p663, %p664
      %p666 = pneg %p665
      // Predicated region
      $region77: #{tpu_custom_call.1} parent=5 // pred_check
        _
      $region78: #{tpu_custom_call.1} parent=5 // pred_check_branch
        %668 = sbr.rel (%p665) target = $region80
      $region79: #{tpu_custom_call.1} parent=5 // pred_region
        %s669 = ssub.s32 %s40, 1
        // Predicated region
        $region81: #{tpu_custom_call.1} parent=79 // pred_check
          %p670 = pneg %p61
        $region82: #{tpu_custom_call.1} parent=79 // pred_check_branch
          %672 = sbr.rel (%p670) target = $region84
        $region83: #{tpu_custom_call.1} parent=79 // pred_region
          %673 = dma.done [#allocation3], 128
        $region84: #{tpu_custom_call.1} parent=79 // pred_fallthru
          _
        // Predicated region
        $region85: #{tpu_custom_call.1} parent=79 // pred_check
          %p674 = pneg %p82
        $region86: #{tpu_custom_call.1} parent=79 // pred_check_branch
          %676 = sbr.rel (%p674) target = $region88
        $region87: #{tpu_custom_call.1} parent=79 // pred_region
          %677 = dma.done [#allocation6], 128
        $region88: #{tpu_custom_call.1} parent=79 // pred_fallthru
          _
        // Predicated region
        $region89: #{tpu_custom_call.1} parent=79 // pred_check
          %p678 = pneg %p103
        $region90: #{tpu_custom_call.1} parent=79 // pred_check_branch
          %680 = sbr.rel (%p678) target = $region92
        $region91: #{tpu_custom_call.1} parent=79 // pred_region
          %681 = dma.done [#allocation6], 128
        $region92: #{tpu_custom_call.1} parent=79 // pred_fallthru
          _
        // Predicated region
        $region93: #{tpu_custom_call.1} parent=79 // pred_check
          %p682 = pneg %p124
        $region94: #{tpu_custom_call.1} parent=79 // pred_check_branch
          %684 = sbr.rel (%p682) target = $region96
        $region95: #{tpu_custom_call.1} parent=79 // pred_region
          %685 = dma.done [#allocation9], 320
        $region96: #{tpu_custom_call.1} parent=79 // pred_fallthru
          _
        // Predicated region
        $region97: #{tpu_custom_call.1} parent=79 // pred_check
          %p686 = pneg %p145
        $region98: #{tpu_custom_call.1} parent=79 // pred_check_branch
          %688 = sbr.rel (%p686) target = $region100
        $region99: #{tpu_custom_call.1} parent=79 // pred_region
          %689 = dma.done [#allocation9], 256
        $region100: #{tpu_custom_call.1} parent=79 // pred_fallthru
          _
        // Predicated region
        $region101: #{tpu_custom_call.1} parent=79 // pred_check
          %p690 = pneg %p166
        $region102: #{tpu_custom_call.1} parent=79 // pred_check_branch
          %692 = sbr.rel (%p690) target = $region104
        $region103: #{tpu_custom_call.1} parent=79 // pred_region
          %693 = dma.done [#allocation12], 16
        $region104: #{tpu_custom_call.1} parent=79 // pred_fallthru
          _
        // Predicated region
        $region105: #{tpu_custom_call.1} parent=79 // pred_check
          %p694 = pneg %p187
        $region106: #{tpu_custom_call.1} parent=79 // pred_check_branch
          %696 = sbr.rel (%p694) target = $region108
        $region107: #{tpu_custom_call.1} parent=79 // pred_region
          %697 = dma.done [#allocation12], 16
        $region108: #{tpu_custom_call.1} parent=79 // pred_fallthru
          _
        %s698 = sand.u32 %s45, 1
        %s699 = scalar_lea.sflag [#allocation15], %s698
        %s700 = sand.u32 %s200, 1
        %s701 = smul.addr %s700, 256
        %s702 = scalar_lea.vmem [#allocation14], %s701
        // Predicated region
        $region109: #{tpu_custom_call.1} parent=79 // pred_check
          %p703 = pneg %p213
        $region110: #{tpu_custom_call.1} parent=79 // pred_check_branch
          %705 = sbr.rel (%p703) target = $region112
        $region111: #{tpu_custom_call.1} parent=79 // pred_region
          %706 = dma.done %s699, 4096
        $region112: #{tpu_custom_call.1} parent=79 // pred_fallthru
          _
        %s707 = sand.u32 %s45, 1
        %s708 = scalar_lea.sflag [#allocation15], %s707
        %s709 = sand.u32 %s226, 1
        %s710 = smul.addr %s709, 8
        %s711 = scalar_lea.vmem [#allocation16], %s710
        // Predicated region
        $region113: #{tpu_custom_call.1} parent=79 // pred_check
          %p712 = pneg %p239
        $region114: #{tpu_custom_call.1} parent=79 // pred_check_branch
          %714 = sbr.rel (%p712) target = $region116
        $region115: #{tpu_custom_call.1} parent=79 // pred_region
          %715 = dma.done %s708, 128
        $region116: #{tpu_custom_call.1} parent=79 // pred_fallthru
          _
        %s716 = sand.u32 %s45, 1
        %s717 = scalar_lea.sflag [#allocation18], %s716
        %s718 = sand.u32 %s252, 1
        %s719 = smul.addr %s718, 2048
        %s720 = scalar_lea.vmem [#allocation17], %s719
        // Predicated region
        $region117: #{tpu_custom_call.1} parent=79 // pred_check
          %p721 = pneg %p265
        $region118: #{tpu_custom_call.1} parent=79 // pred_check_branch
          %723 = sbr.rel (%p721) target = $region120
        $region119: #{tpu_custom_call.1} parent=79 // pred_region
          %724 = dma.done %s717, 32768
        $region120: #{tpu_custom_call.1} parent=79 // pred_fallthru
          _
        %s725 = sand.u32 %s45, 1
        %s726 = scalar_lea.sflag [#allocation18], %s725
        %s727 = sand.u32 %s278, 1
        %s728 = smul.addr %s727, 8
        %s729 = scalar_lea.vmem [#allocation19], %s728
        // Predicated region
        $region121: #{tpu_custom_call.1} parent=79 // pred_check
          %p730 = pneg %p291
        $region122: #{tpu_custom_call.1} parent=79 // pred_check_branch
          %732 = sbr.rel (%p730) target = $region124
        $region123: #{tpu_custom_call.1} parent=79 // pred_region
          %733 = dma.done %s726, 128
        $region124: #{tpu_custom_call.1} parent=79 // pred_fallthru
          _
        %s734 = sand.u32 %s45, 1
        %s735 = scalar_lea.sflag [#allocation21], %s734
        %s736 = sand.u32 %s304, 1
        %s737 = smul.addr %s736, 8
        %s738 = scalar_lea.vmem [#allocation20], %s737
        // Predicated region
        $region125: #{tpu_custom_call.1} parent=79 // pred_check
          %p739 = pneg %p317
        $region126: #{tpu_custom_call.1} parent=79 // pred_check_branch
          %741 = sbr.rel (%p739) target = $region128
        $region127: #{tpu_custom_call.1} parent=79 // pred_region
          %742 = dma.done %s735, 128
        $region128: #{tpu_custom_call.1} parent=79 // pred_fallthru
          _
        %s743 = sand.u32 %s45, 1
        %s744 = scalar_lea.sflag [#allocation21], %s743
        %s745 = sand.u32 %s356, 1
        %s746 = scalar_lea.vmem [#allocation22], %s745
        // Predicated region
        $region129: #{tpu_custom_call.1} parent=79 // pred_check
          %p747 = pneg %p369
        $region130: #{tpu_custom_call.1} parent=79 // pred_check_branch
          %749 = sbr.rel (%p747) target = $region132
        $region131: #{tpu_custom_call.1} parent=79 // pred_region
          %750 = dma.done %s744, 16
        $region132: #{tpu_custom_call.1} parent=79 // pred_fallthru
          _
        %s751 = sand.u32 %s382, 1
        %s752 = scalar_lea.sflag [#allocation24], %s751
        %s753 = sand.u32 %s382, 1
        %s754 = smul.addr %s753, 8
        %s755 = scalar_lea.vmem [#allocation23], %s754
        // Predicated region
        $region133: #{tpu_custom_call.1} parent=79 // pred_check
          %p756 = pneg %p395
        $region134: #{tpu_custom_call.1} parent=79 // pred_check_branch
          %758 = sbr.rel (%p756) target = $region136
        $region135: #{tpu_custom_call.1} parent=79 // pred_region
          %759 = dma.done %s752, 128
        $region136: #{tpu_custom_call.1} parent=79 // pred_fallthru
          _
        %p760 = pneg %p61
        %p761 = pneg %p58
        %p762 = pneg %p82
        %p763 = pneg %p79
        %p764 = pneg %p103
        %p765 = pneg %p100
        %p766 = pneg %p124
        %p767 = pneg %p121
        %p768 = pneg %p145
        %p769 = pneg %p142
        %p770 = pneg %p166
        %p771 = pneg %p163
        %p772 = pneg %p187
        %p773 = pneg %p184
        %s774 = sand.u32 %s45, 1
        %s775 = scalar_lea.sflag [#allocation15], %s774
        %s776 = sand.u32 %s200, 1
        %s777 = smul.addr %s776, 256
        %s778 = scalar_lea.vmem [#allocation14], %s777
        %p779 = pneg %p213
        %p780 = pneg %p210
        %s781 = sand.u32 %s45, 1
        %s782 = scalar_lea.sflag [#allocation15], %s781
        %s783 = sand.u32 %s226, 1
        %s784 = smul.addr %s783, 8
        %s785 = scalar_lea.vmem [#allocation16], %s784
        %p786 = pneg %p239
        %p787 = pneg %p236
        %s788 = sand.u32 %s45, 1
        %s789 = scalar_lea.sflag [#allocation18], %s788
        %s790 = sand.u32 %s252, 1
        %s791 = smul.addr %s790, 2048
        %s792 = scalar_lea.vmem [#allocation17], %s791
        %p793 = pneg %p265
        %p794 = pneg %p262
        %s795 = sand.u32 %s45, 1
        %s796 = scalar_lea.sflag [#allocation18], %s795
        %s797 = sand.u32 %s278, 1
        %s798 = smul.addr %s797, 8
        %s799 = scalar_lea.vmem [#allocation19], %s798
        %p800 = pneg %p291
        %p801 = pneg %p288
        %s802 = sand.u32 %s45, 1
        %s803 = scalar_lea.sflag [#allocation21], %s802
        %s804 = sand.u32 %s304, 1
        %s805 = smul.addr %s804, 8
        %s806 = scalar_lea.vmem [#allocation20], %s805
        %p807 = pneg %p317
        %p808 = pneg %p314
        %p809 = scmp.lt.s32.totalorder %s45, 1
        %s810 = scalar_select %p809, %s45, 1
        %s811 = smul.addr %s810, 128
        %s812 = smul.addr %s811, 4
        %s813 = scalar_lea.vmem %s12, %s812
        %p814 = pneg %p343
        %p815 = pneg %p340
        %s816 = sand.u32 %s45, 1
        %s817 = scalar_lea.sflag [#allocation21], %s816
        %s818 = sand.u32 %s356, 1
        %s819 = scalar_lea.vmem [#allocation22], %s818
        %p820 = pneg %p369
        %p821 = pneg %p366
        %s822 = sand.u32 %s382, 1
        %s823 = scalar_lea.sflag [#allocation24], %s822
        %s824 = sand.u32 %s382, 1
        %s825 = smul.addr %s824, 8
        %s826 = scalar_lea.vmem [#allocation23], %s825
        %p827 = pneg %p395
        %p828 = pneg %p392
        %p829 = pneg %p421
        %p830 = pneg %p418
        %s831 = sand.u32 %s408, 1
        %s832 = scalar_lea.sflag [#allocation4], %s831
        %s833 = sand.u32 %s408, 1
        %s834 = smul.addr %s833, 8
        %s835 = scalar_lea.vmem [#allocation25], %s834
        %p836 = scmp.lt.s32.totalorder %s45, 1
        %s837 = scalar_select %p836, %s45, 1
        %s838 = smul.addr %s837, 128
        %s839 = smul.addr %s838, 4
        %s840 = scalar_lea.vmem %s12, %s839
        %v842 = vld [vmem:[#allocation2] sm:$0xff]
        %v843 = vpack.c.bf16 %v842, %v842
        %v844 = vld [vmem:[#allocation5] sm:$0xff]
        %v845 = vpack.c.bf16 %v844, %v844
        %v846 = vld [vmem:[#allocation7] sm:$0xff]
        %v847 = vld [vmem:[#allocation8] sm:$0xf]
        %v848 = vld [vmem:[#allocation8 + $0x4] sm:$0xf]
        %v849 = vld [vmem:[#allocation8 + $0x8] sm:$0xf]
        %v850 = vld [vmem:[#allocation8 + $0xc] sm:$0xf]
        %v851 = vld [vmem:[#allocation8 + $0x10] sm:$0xf]
        %v852 = vld [vmem:[#allocation11] sm:$0x1]
        %v854 = vlaneseq
        %v855 = vshrl.u32 %v854, 7
        %v856 = vsub.s32 0, %v855
        %v857 = vrot.slane %v852, %v856
        %v864 = vunpack.c.l.b16 %v847
        %v865 = vunpack.c.l.b16 %v848
        %v866 = vunpack.c.l.b16 %v849
        %v867 = vunpack.c.l.b16 %v850
        %v868 = vunpack.c.l.b16 %v851
        %v869 = vpack.c.b16 %v865, %v864
        %v870 = vpack.c.b16 %v867, %v866
        %v871 = vpack.c.b16 %v868, %v868
        %vm874 = vcmask 326656
        %v876 = vsel %vm874, %v843, 0
        %vm878 = vcmask 1043456
        %v880 = vsel %vm878, %v871, 0
        %882 = vmatprep.subr.bf16.mxu0 0
        %883 = vmatpush1.bf16.msra.mxu0 %v869
        %884 = vmatprep.subr.bf16.mxu0 0
        %885 = vmatpush1.bf16.msra.mxu0 %v870
        %886 = vmatprep.subr.bf16.mxu0 0
        %887 = vmatpush1.bf16.msra.mxu0 %v880
        %888 = vmatprep.subr.bf16.mxu0 0
        %889 = vmatpush1.bf16.msra.mxu0 0
        %890 = vmatprep.subr.bf16.mxu0 0
        %891 = vmatpush1.bf16.msra.mxu0 0
        %892 = vmatprep.subr.bf16.mxu0 0
        %893 = vmatpush1.bf16.msra.mxu0 0
        %894 = vmatprep.subr.bf16.mxu0 0
        %895 = vmatpush1.bf16.msra.mxu0 0
        %896 = vmatprep.subr.bf16.mxu0 0
        %897 = vmatpush1.bf16.msra.mxu0 0
        %898 = vmatprep.subr.bf16.mxu0 0
        %899 = vmatpush1.bf16.msra.mxu0 0
        %900 = vmatprep.subr.bf16.mxu0 0
        %901 = vmatpush1.bf16.msra.mxu0 0
        %902 = vmatprep.subr.bf16.mxu0 0
        %903 = vmatpush1.bf16.msra.mxu0 0
        %904 = vmatprep.subr.bf16.mxu0 0
        %905 = vmatpush1.bf16.msra.mxu0 0
        %906 = vmatprep.subr.bf16.mxu0 0
        %907 = vmatpush1.bf16.msra.mxu0 0
        %908 = vmatprep.subr.bf16.mxu0 0
        %909 = vmatpush1.bf16.msra.mxu0 0
        %910 = vmatprep.subr.bf16.mxu0 0
        %911 = vmatpush1.bf16.msra.mxu0 0
        %912 = vmatprep.subr.bf16.mxu0 0
        %913 = vmatpush1.bf16.msra.mxu0 0
        %914 = vmatprep.mubr.bf16.mxu0 0
        %915 = vmatmul.mubr.bf16.gmra.mrb[0].mxu0 %v876
        %v916 = vpop.f32.mrb[0].mxu0
        %v917 = vadd.f32 %v857, %v916
        %v918 = vpop.f32.mrb[0].mxu0
        %v919 = vpop.f32.mrb[0].mxu0
        %v920 = vpop.f32.mrb[0].mxu0
        %921 = vdwg.mxu0
        %v922 = vpack.c.bf16 %v846, %v846
        %v923 = vld [vmem:[#allocation10] sm:$0xf]
        %v924 = vld [vmem:[#allocation10 + $0x4] sm:$0xf]
        %v925 = vld [vmem:[#allocation10 + $0x8] sm:$0xf]
        %v926 = vld [vmem:[#allocation10 + $0xc] sm:$0xf]
        %v927 = vld [vmem:[#allocation13] sm:$0x1]
        %v929 = vlaneseq
        %v930 = vshrl.u32 %v929, 7
        %v931 = vsub.s32 0, %v930
        %v932 = vrot.slane %v927, %v931
        %v938 = vunpack.c.l.b16 %v923
        %v939 = vunpack.c.l.b16 %v924
        %v940 = vunpack.c.l.b16 %v925
        %v941 = vunpack.c.l.b16 %v926
        %v942 = vpack.c.b16 %v939, %v938
        %v943 = vpack.c.b16 %v941, %v940
        %vm946 = vcmask 261120
        %v948 = vsel %vm946, %v922, 0
        %950 = vmatprep.subr.bf16.mxu0 0
        %951 = vmatpush1.bf16.msra.mxu0 %v942
        %952 = vmatprep.subr.bf16.mxu0 0
        %953 = vmatpush1.bf16.msra.mxu0 %v943
        %954 = vmatprep.subr.bf16.mxu0 0
        %955 = vmatpush1.bf16.msra.mxu0 0
        %956 = vmatprep.subr.bf16.mxu0 0
        %957 = vmatpush1.bf16.msra.mxu0 0
        %958 = vmatprep.subr.bf16.mxu0 0
        %959 = vmatpush1.bf16.msra.mxu0 0
        %960 = vmatprep.subr.bf16.mxu0 0
        %961 = vmatpush1.bf16.msra.mxu0 0
        %962 = vmatprep.subr.bf16.mxu0 0
        %963 = vmatpush1.bf16.msra.mxu0 0
        %964 = vmatprep.subr.bf16.mxu0 0
        %965 = vmatpush1.bf16.msra.mxu0 0
        %966 = vmatprep.subr.bf16.mxu0 0
        %967 = vmatpush1.bf16.msra.mxu0 0
        %968 = vmatprep.subr.bf16.mxu0 0
        %969 = vmatpush1.bf16.msra.mxu0 0
        %970 = vmatprep.subr.bf16.mxu0 0
        %971 = vmatpush1.bf16.msra.mxu0 0
        %972 = vmatprep.subr.bf16.mxu0 0
        %973 = vmatpush1.bf16.msra.mxu0 0
        %974 = vmatprep.subr.bf16.mxu0 0
        %975 = vmatpush1.bf16.msra.mxu0 0
        %976 = vmatprep.subr.bf16.mxu0 0
        %977 = vmatpush1.bf16.msra.mxu0 0
        %978 = vmatprep.subr.bf16.mxu0 0
        %979 = vmatpush1.bf16.msra.mxu0 0
        %980 = vmatprep.subr.bf16.mxu0 0
        %981 = vmatpush1.bf16.msra.mxu0 0
        %982 = vmatprep.mubr.bf16.mxu0 0
        %983 = vmatmul.mubr.bf16.gmra.mrb[0].mxu0 %v948
        %v984 = vpop.f32.mrb[0].mxu0
        %v985 = vadd.f32 %v932, %v984
        %v986 = vpop.f32.mrb[0].mxu0
        %v987 = vpop.f32.mrb[0].mxu0
        %v988 = vpop.f32.mrb[0].mxu0
        %989 = vdwg.mxu0
        %v990 = vadd.f32 %v917, %v985
        %v991 = vxor.u32 %v990, 2147483648
        %v992 = vmul.f32 %v991, 1.442695
        %v993 = vpow.pop %v992
        %v994 = vadd.f32 %v993, 1.0
        %v995 = vrcp.pop %v994
        %v996 = vmul.f32 1.0, %v995
        %998 = vrot.lane.b32.xlu0 %v985, 64
        %v999 = vpop.permute.xlu0 %998
        %v1001 = vmul.f32 %v996, %v999
        %1003 = vrot.lane.b32.xlu0 %v1001, 64
        %v1004 = vpop.permute.xlu0 %1003
        %v1006 = vadd.f32 %v917, %v1004
        %v1007 = vtanh.pop %v1006
        %v1008 = vsub.f32 1.0, %v996
        %1010 = vrot.lane.b32.xlu0 %v1007, 96
        %v1011 = vpop.permute.xlu0 %1010
        %v1013 = vmul.f32 %v1008, %v1011
        %1015 = vrot.lane.b32.xlu0 %v846, 32
        %v1016 = vpop.permute.xlu0 %1015
        %v1018 = vmul.f32 %v996, %v1016
        %v1019 = vadd.f32 %v1013, %v1018
        %v1020 = vpack.c.bf16 %v1019, %v1019
        %v1023 = vsel %vm946, %v845, %v1020
        %v1024 = vld [vmem:[%s702] sm:$0xff]
        %v1025 = vld [vmem:[%s702 + $0x8] sm:$0xff]
        %v1026 = vld [vmem:[%s702 + $0x10] sm:$0xff]
        %v1027 = vld [vmem:[%s702 + $0x18] sm:$0xff]
        %v1028 = vld [vmem:[%s702 + $0x20] sm:$0xff]
        %v1029 = vld [vmem:[%s702 + $0x28] sm:$0xff]
        %v1030 = vld [vmem:[%s702 + $0x30] sm:$0xff]
        %v1031 = vld [vmem:[%s702 + $0x38] sm:$0xff]
        %v1032 = vld [vmem:[%s702 + $0x40] sm:$0xff]
        %v1033 = vld [vmem:[%s702 + $0x48] sm:$0xff]
        %v1034 = vld [vmem:[%s702 + $0x50] sm:$0xff]
        %v1035 = vld [vmem:[%s702 + $0x58] sm:$0xff]
        %v1036 = vld [vmem:[%s702 + $0x60] sm:$0xff]
        %v1037 = vld [vmem:[%s702 + $0x68] sm:$0xff]
        %v1038 = vld [vmem:[%s702 + $0x70] sm:$0xff]
        %v1039 = vld [vmem:[%s702 + $0x78] sm:$0xff]
        %v1040 = vld [vmem:[%s702 + $0x80] sm:$0xff]
        %v1041 = vld [vmem:[%s702 + $0x88] sm:$0xff]
        %v1042 = vld [vmem:[%s702 + $0x90] sm:$0xff]
        %v1043 = vld [vmem:[%s702 + $0x98] sm:$0xff]
        %v1044 = vld [vmem:[%s702 + $0xa0] sm:$0xff]
        %v1045 = vld [vmem:[%s702 + $0xa8] sm:$0xff]
        %v1046 = vld [vmem:[%s702 + $0xb0] sm:$0xff]
        %v1047 = vld [vmem:[%s702 + $0xb8] sm:$0xff]
        %v1048 = vld [vmem:[%s702 + $0xc0] sm:$0xff]
        %v1049 = vld [vmem:[%s702 + $0xc8] sm:$0xff]
        %v1050 = vld [vmem:[%s702 + $0xd0] sm:$0xff]
        %v1051 = vld [vmem:[%s702 + $0xd8] sm:$0xff]
        %v1052 = vld [vmem:[%s702 + $0xe0] sm:$0xff]
        %v1053 = vld [vmem:[%s702 + $0xe8] sm:$0xff]
        %v1054 = vld [vmem:[%s702 + $0xf0] sm:$0xff]
        %v1055 = vld [vmem:[%s702 + $0xf8] sm:$0xff]
        %v1056 = vld [vmem:[%s711] sm:$0xff]
        %v1058 = vlaneseq
        %v1059 = vshrl.u32 %v1058, 7
        %v1060 = vsub.s32 0, %v1059
        %v1061 = vrot.slane %v1056, %v1060
        %v1062 = vlaneseq
        %v1063 = vshrl.u32 %v1062, 7
        %v1064 = vsub.s32 1, %v1063
        %v1065 = vrot.slane %v1056, %v1064
        %v1066 = vlaneseq
        %v1067 = vshrl.u32 %v1066, 7
        %v1068 = vsub.s32 2, %v1067
        %v1069 = vrot.slane %v1056, %v1068
        %v1070 = vlaneseq
        %v1071 = vshrl.u32 %v1070, 7
        %v1072 = vsub.s32 3, %v1071
        %v1073 = vrot.slane %v1056, %v1072
        %v1074 = vlaneseq
        %v1075 = vshrl.u32 %v1074, 7
        %v1076 = vsub.s32 4, %v1075
        %v1077 = vrot.slane %v1056, %v1076
        %v1078 = vlaneseq
        %v1079 = vshrl.u32 %v1078, 7
        %v1080 = vsub.s32 5, %v1079
        %v1081 = vrot.slane %v1056, %v1080
        %v1082 = vlaneseq
        %v1083 = vshrl.u32 %v1082, 7
        %v1084 = vsub.s32 6, %v1083
        %v1085 = vrot.slane %v1056, %v1084
        %v1086 = vlaneseq
        %v1087 = vshrl.u32 %v1086, 7
        %v1088 = vsub.s32 7, %v1087
        %v1089 = vrot.slane %v1056, %v1088
        %v1130 = vunpack.c.l.b16 %v1024
        %v1131 = vunpack.c.h.b16 %v1024
        %v1132 = vunpack.c.l.b16 %v1025
        %v1133 = vunpack.c.h.b16 %v1025
        %v1134 = vunpack.c.l.b16 %v1026
        %v1135 = vunpack.c.h.b16 %v1026
        %v1136 = vunpack.c.l.b16 %v1027
        %v1137 = vunpack.c.h.b16 %v1027
        %v1138 = vunpack.c.l.b16 %v1028
        %v1139 = vunpack.c.h.b16 %v1028
        %v1140 = vunpack.c.l.b16 %v1029
        %v1141 = vunpack.c.h.b16 %v1029
        %v1142 = vunpack.c.l.b16 %v1030
        %v1143 = vunpack.c.h.b16 %v1030
        %v1144 = vunpack.c.l.b16 %v1031
        %v1145 = vunpack.c.h.b16 %v1031
        %v1146 = vunpack.c.l.b16 %v1032
        %v1147 = vunpack.c.h.b16 %v1032
        %v1148 = vunpack.c.l.b16 %v1033
        %v1149 = vunpack.c.h.b16 %v1033
        %v1150 = vunpack.c.l.b16 %v1034
        %v1151 = vunpack.c.h.b16 %v1034
        %v1152 = vunpack.c.l.b16 %v1035
        %v1153 = vunpack.c.h.b16 %v1035
        %v1154 = vunpack.c.l.b16 %v1036
        %v1155 = vunpack.c.h.b16 %v1036
        %v1156 = vunpack.c.l.b16 %v1037
        %v1157 = vunpack.c.h.b16 %v1037
        %v1158 = vunpack.c.l.b16 %v1038
        %v1159 = vunpack.c.h.b16 %v1038
        %v1160 = vunpack.c.l.b16 %v1039
        %v1161 = vunpack.c.h.b16 %v1039
        %v1162 = vunpack.c.l.b16 %v1040
        %v1163 = vunpack.c.h.b16 %v1040
        %v1164 = vunpack.c.l.b16 %v1041
        %v1165 = vunpack.c.h.b16 %v1041
        %v1166 = vunpack.c.l.b16 %v1042
        %v1167 = vunpack.c.h.b16 %v1042
        %v1168 = vunpack.c.l.b16 %v1043
        %v1169 = vunpack.c.h.b16 %v1043
        %v1170 = vunpack.c.l.b16 %v1044
        %v1171 = vunpack.c.h.b16 %v1044
        %v1172 = vunpack.c.l.b16 %v1045
        %v1173 = vunpack.c.h.b16 %v1045
        %v1174 = vunpack.c.l.b16 %v1046
        %v1175 = vunpack.c.h.b16 %v1046
        %v1176 = vunpack.c.l.b16 %v1047
        %v1177 = vunpack.c.h.b16 %v1047
        %v1178 = vunpack.c.l.b16 %v1048
        %v1179 = vunpack.c.h.b16 %v1048
        %v1180 = vunpack.c.l.b16 %v1049
        %v1181 = vunpack.c.h.b16 %v1049
        %v1182 = vunpack.c.l.b16 %v1050
        %v1183 = vunpack.c.h.b16 %v1050
        %v1184 = vunpack.c.l.b16 %v1051
        %v1185 = vunpack.c.h.b16 %v1051
        %v1186 = vunpack.c.l.b16 %v1052
        %v1187 = vunpack.c.h.b16 %v1052
        %v1188 = vunpack.c.l.b16 %v1053
        %v1189 = vunpack.c.h.b16 %v1053
        %v1190 = vunpack.c.l.b16 %v1054
        %v1191 = vunpack.c.h.b16 %v1054
        %v1192 = vunpack.c.l.b16 %v1055
        %v1193 = vunpack.c.h.b16 %v1055
        %v1194 = vpack.c.b16 %v1138, %v1130
        %v1195 = vpack.c.b16 %v1139, %v1131
        %v1196 = vpack.c.b16 %v1140, %v1132
        %v1197 = vpack.c.b16 %v1141, %v1133
        %v1198 = vpack.c.b16 %v1142, %v1134
        %v1199 = vpack.c.b16 %v1143, %v1135
        %v1200 = vpack.c.b16 %v1144, %v1136
        %v1201 = vpack.c.b16 %v1145, %v1137
        %v1202 = vpack.c.b16 %v1154, %v1146
        %v1203 = vpack.c.b16 %v1155, %v1147
        %v1204 = vpack.c.b16 %v1156, %v1148
        %v1205 = vpack.c.b16 %v1157, %v1149
        %v1206 = vpack.c.b16 %v1158, %v1150
        %v1207 = vpack.c.b16 %v1159, %v1151
        %v1208 = vpack.c.b16 %v1160, %v1152
        %v1209 = vpack.c.b16 %v1161, %v1153
        %v1210 = vpack.c.b16 %v1170, %v1162
        %v1211 = vpack.c.b16 %v1171, %v1163
        %v1212 = vpack.c.b16 %v1172, %v1164
        %v1213 = vpack.c.b16 %v1173, %v1165
        %v1214 = vpack.c.b16 %v1174, %v1166
        %v1215 = vpack.c.b16 %v1175, %v1167
        %v1216 = vpack.c.b16 %v1176, %v1168
        %v1217 = vpack.c.b16 %v1177, %v1169
        %v1218 = vpack.c.b16 %v1186, %v1178
        %v1219 = vpack.c.b16 %v1187, %v1179
        %v1220 = vpack.c.b16 %v1188, %v1180
        %v1221 = vpack.c.b16 %v1189, %v1181
        %v1222 = vpack.c.b16 %v1190, %v1182
        %v1223 = vpack.c.b16 %v1191, %v1183
        %v1224 = vpack.c.b16 %v1192, %v1184
        %v1225 = vpack.c.b16 %v1193, %v1185
        %vm1258 = vcmask 523264
        %v1259 = vsel %vm1258, %v1023, 0
        %1261 = vmatprep.subr.bf16.mxu0 %v1195
        %1262 = vmatpush1.bf16.msra.mxu0 %v1194
        %1263 = vmatprep.subr.bf16.mxu0 %v1203
        %1264 = vmatpush1.bf16.msra.mxu0 %v1202
        %1265 = vmatprep.subr.bf16.mxu0 %v1211
        %1266 = vmatpush1.bf16.msra.mxu0 %v1210
        %1267 = vmatprep.subr.bf16.mxu0 %v1219
        %1268 = vmatpush1.bf16.msra.mxu0 %v1218
        %1269 = vmatprep.subr.bf16.mxu0 0
        %1270 = vmatpush1.bf16.msra.mxu0 0
        %1271 = vmatprep.subr.bf16.mxu0 0
        %1272 = vmatpush1.bf16.msra.mxu0 0
        %1273 = vmatprep.subr.bf16.mxu0 0
        %1274 = vmatpush1.bf16.msra.mxu0 0
        %1275 = vmatprep.subr.bf16.mxu0 0
        %1276 = vmatpush1.bf16.msra.mxu0 0
        %1277 = vmatprep.subr.bf16.mxu0 0
        %1278 = vmatpush1.bf16.msra.mxu0 0
        %1279 = vmatprep.subr.bf16.mxu0 0
        %1280 = vmatpush1.bf16.msra.mxu0 0
        %1281 = vmatprep.subr.bf16.mxu0 0
        %1282 = vmatpush1.bf16.msra.mxu0 0
        %1283 = vmatprep.subr.bf16.mxu0 0
        %1284 = vmatpush1.bf16.msra.mxu0 0
        %1285 = vmatprep.subr.bf16.mxu0 0
        %1286 = vmatpush1.bf16.msra.mxu0 0
        %1287 = vmatprep.subr.bf16.mxu0 0
        %1288 = vmatpush1.bf16.msra.mxu0 0
        %1289 = vmatprep.subr.bf16.mxu0 0
        %1290 = vmatpush1.bf16.msra.mxu0 0
        %1291 = vmatprep.subr.bf16.mxu0 0
        %1292 = vmatpush1.bf16.msra.mxu0 0
        %1293 = vmatprep.mubr.bf16.mxu0 0
        %1294 = vmatmul.mubr.bf16.gmra.mrb[0].mxu0 %v1259
        %v1295 = vpop.f32.mrb[0].mxu0
        %v1296 = vadd.f32 %v1061, %v1295
        %v1297 = vpop.f32.mrb[0].mxu0
        %v1298 = vadd.f32 %v1065, %v1297
        %v1299 = vpop.f32.mrb[0].mxu0
        %v1300 = vpop.f32.mrb[0].mxu0
        %1301 = vdwg.mxu0
        %1302 = vmatprep.subr.bf16.mxu0 %v1197
        %1303 = vmatpush1.bf16.msra.mxu0 %v1196
        %1304 = vmatprep.subr.bf16.mxu0 %v1205
        %1305 = vmatpush1.bf16.msra.mxu0 %v1204
        %1306 = vmatprep.subr.bf16.mxu0 %v1213
        %1307 = vmatpush1.bf16.msra.mxu0 %v1212
        %1308 = vmatprep.subr.bf16.mxu0 %v1221
        %1309 = vmatpush1.bf16.msra.mxu0 %v1220
        %1310 = vmatprep.subr.bf16.mxu0 0
        %1311 = vmatpush1.bf16.msra.mxu0 0
        %1312 = vmatprep.subr.bf16.mxu0 0
        %1313 = vmatpush1.bf16.msra.mxu0 0
        %1314 = vmatprep.subr.bf16.mxu0 0
        %1315 = vmatpush1.bf16.msra.mxu0 0
        %1316 = vmatprep.subr.bf16.mxu0 0
        %1317 = vmatpush1.bf16.msra.mxu0 0
        %1318 = vmatprep.subr.bf16.mxu0 0
        %1319 = vmatpush1.bf16.msra.mxu0 0
        %1320 = vmatprep.subr.bf16.mxu0 0
        %1321 = vmatpush1.bf16.msra.mxu0 0
        %1322 = vmatprep.subr.bf16.mxu0 0
        %1323 = vmatpush1.bf16.msra.mxu0 0
        %1324 = vmatprep.subr.bf16.mxu0 0
        %1325 = vmatpush1.bf16.msra.mxu0 0
        %1326 = vmatprep.subr.bf16.mxu0 0
        %1327 = vmatpush1.bf16.msra.mxu0 0
        %1328 = vmatprep.subr.bf16.mxu0 0
        %1329 = vmatpush1.bf16.msra.mxu0 0
        %1330 = vmatprep.subr.bf16.mxu0 0
        %1331 = vmatpush1.bf16.msra.mxu0 0
        %1332 = vmatprep.subr.bf16.mxu0 0
        %1333 = vmatpush1.bf16.msra.mxu0 0
        %1334 = vmatprep.mubr.bf16.mxu0 0
        %1335 = vmatmul.mubr.bf16.gmra.mrb[0].mxu0 %v1259
        %v1336 = vpop.f32.mrb[0].mxu0
        %v1337 = vadd.f32 %v1069, %v1336
        %v1338 = vpop.f32.mrb[0].mxu0
        %v1339 = vadd.f32 %v1073, %v1338
        %v1340 = vpop.f32.mrb[0].mxu0
        %v1341 = vpop.f32.mrb[0].mxu0
        %1342 = vdwg.mxu0
        %1343 = vmatprep.subr.bf16.mxu0 %v1199
        %1344 = vmatpush1.bf16.msra.mxu0 %v1198
        %1345 = vmatprep.subr.bf16.mxu0 %v1207
        %1346 = vmatpush1.bf16.msra.mxu0 %v1206
        %1347 = vmatprep.subr.bf16.mxu0 %v1215
        %1348 = vmatpush1.bf16.msra.mxu0 %v1214
        %1349 = vmatprep.subr.bf16.mxu0 %v1223
        %1350 = vmatpush1.bf16.msra.mxu0 %v1222
        %1351 = vmatprep.subr.bf16.mxu0 0
        %1352 = vmatpush1.bf16.msra.mxu0 0
        %1353 = vmatprep.subr.bf16.mxu0 0
        %1354 = vmatpush1.bf16.msra.mxu0 0
        %1355 = vmatprep.subr.bf16.mxu0 0
        %1356 = vmatpush1.bf16.msra.mxu0 0
        %1357 = vmatprep.subr.bf16.mxu0 0
        %1358 = vmatpush1.bf16.msra.mxu0 0
        %1359 = vmatprep.subr.bf16.mxu0 0
        %1360 = vmatpush1.bf16.msra.mxu0 0
        %1361 = vmatprep.subr.bf16.mxu0 0
        %1362 = vmatpush1.bf16.msra.mxu0 0
        %1363 = vmatprep.subr.bf16.mxu0 0
        %1364 = vmatpush1.bf16.msra.mxu0 0
        %1365 = vmatprep.subr.bf16.mxu0 0
        %1366 = vmatpush1.bf16.msra.mxu0 0
        %1367 = vmatprep.subr.bf16.mxu0 0
        %1368 = vmatpush1.bf16.msra.mxu0 0
        %1369 = vmatprep.subr.bf16.mxu0 0
        %1370 = vmatpush1.bf16.msra.mxu0 0
        %1371 = vmatprep.subr.bf16.mxu0 0
        %1372 = vmatpush1.bf16.msra.mxu0 0
        %1373 = vmatprep.subr.bf16.mxu0 0
        %1374 = vmatpush1.bf16.msra.mxu0 0
        %1375 = vmatprep.mubr.bf16.mxu0 0
        %1376 = vmatmul.mubr.bf16.gmra.mrb[0].mxu0 %v1259
        %v1377 = vpop.f32.mrb[0].mxu0
        %v1378 = vadd.f32 %v1077, %v1377
        %v1379 = vpop.f32.mrb[0].mxu0
        %v1380 = vadd.f32 %v1081, %v1379
        %v1381 = vpop.f32.mrb[0].mxu0
        %v1382 = vpop.f32.mrb[0].mxu0
        %1383 = vdwg.mxu0
        %1384 = vmatprep.subr.bf16.mxu0 %v1201
        %1385 = vmatpush1.bf16.msra.mxu0 %v1200
        %1386 = vmatprep.subr.bf16.mxu0 %v1209
        %1387 = vmatpush1.bf16.msra.mxu0 %v1208
        %1388 = vmatprep.subr.bf16.mxu0 %v1217
        %1389 = vmatpush1.bf16.msra.mxu0 %v1216
        %1390 = vmatprep.subr.bf16.mxu0 %v1225
        %1391 = vmatpush1.bf16.msra.mxu0 %v1224
        %1392 = vmatprep.subr.bf16.mxu0 0
        %1393 = vmatpush1.bf16.msra.mxu0 0
        %1394 = vmatprep.subr.bf16.mxu0 0
        %1395 = vmatpush1.bf16.msra.mxu0 0
        %1396 = vmatprep.subr.bf16.mxu0 0
        %1397 = vmatpush1.bf16.msra.mxu0 0
        %1398 = vmatprep.subr.bf16.mxu0 0
        %1399 = vmatpush1.bf16.msra.mxu0 0
        %1400 = vmatprep.subr.bf16.mxu0 0
        %1401 = vmatpush1.bf16.msra.mxu0 0
        %1402 = vmatprep.subr.bf16.mxu0 0
        %1403 = vmatpush1.bf16.msra.mxu0 0
        %1404 = vmatprep.subr.bf16.mxu0 0
        %1405 = vmatpush1.bf16.msra.mxu0 0
        %1406 = vmatprep.subr.bf16.mxu0 0
        %1407 = vmatpush1.bf16.msra.mxu0 0
        %1408 = vmatprep.subr.bf16.mxu0 0
        %1409 = vmatpush1.bf16.msra.mxu0 0
        %1410 = vmatprep.subr.bf16.mxu0 0
        %1411 = vmatpush1.bf16.msra.mxu0 0
        %1412 = vmatprep.subr.bf16.mxu0 0
        %1413 = vmatpush1.bf16.msra.mxu0 0
        %1414 = vmatprep.subr.bf16.mxu0 0
        %1415 = vmatpush1.bf16.msra.mxu0 0
        %1416 = vmatprep.mubr.bf16.mxu0 0
        %1417 = vmatmul.mubr.bf16.gmra.mrb[0].mxu0 %v1259
        %v1418 = vpop.f32.mrb[0].mxu0
        %v1419 = vadd.f32 %v1085, %v1418
        %v1420 = vpop.f32.mrb[0].mxu0
        %v1421 = vadd.f32 %v1089, %v1420
        %v1422 = vpop.f32.mrb[0].mxu0
        %v1423 = vpop.f32.mrb[0].mxu0
        %1424 = vdwg.mxu0
        %vm1425 = vcmp.gt.f32.partialorder %v1296, 0.0
        %vm1426 = vcmp.gt.f32.partialorder %v1298, 0.0
        %vm1427 = vcmp.gt.f32.partialorder %v1337, 0.0
        %vm1428 = vcmp.gt.f32.partialorder %v1339, 0.0
        %vm1429 = vcmp.gt.f32.partialorder %v1378, 0.0
        %vm1430 = vcmp.gt.f32.partialorder %v1380, 0.0
        %vm1431 = vcmp.gt.f32.partialorder %v1419, 0.0
        %vm1432 = vcmp.gt.f32.partialorder %v1421, 0.0
        %v1433 = vmin.f32 %v1296, 0.0
        %v1434 = vmin.f32 %v1298, 0.0
        %v1435 = vmin.f32 %v1337, 0.0
        %v1436 = vmin.f32 %v1339, 0.0
        %v1437 = vmin.f32 %v1378, 0.0
        %v1438 = vmin.f32 %v1380, 0.0
        %v1439 = vmin.f32 %v1419, 0.0
        %v1440 = vmin.f32 %v1421, 0.0
        %v1441 = vmul.f32 %v1433, 1.442695
        %v1442 = vpow.pop %v1441
        %v1443 = vmul.f32 %v1434, 1.442695
        %v1444 = vpow.pop %v1443
        %v1445 = vmul.f32 %v1435, 1.442695
        %v1446 = vpow.pop %v1445
        %v1447 = vmul.f32 %v1436, 1.442695
        %v1448 = vpow.pop %v1447
        %v1449 = vmul.f32 %v1437, 1.442695
        %v1450 = vpow.pop %v1449
        %v1451 = vmul.f32 %v1438, 1.442695
        %v1452 = vpow.pop %v1451
        %v1453 = vmul.f32 %v1439, 1.442695
        %v1454 = vpow.pop %v1453
        %v1455 = vmul.f32 %v1440, 1.442695
        %v1456 = vpow.pop %v1455
        %v1457 = vsub.f32 %v1442, 1.0
        %v1458 = vsub.f32 %v1444, 1.0
        %v1459 = vsub.f32 %v1446, 1.0
        %v1460 = vsub.f32 %v1448, 1.0
        %v1461 = vsub.f32 %v1450, 1.0
        %v1462 = vsub.f32 %v1452, 1.0
        %v1463 = vsub.f32 %v1454, 1.0
        %v1464 = vsub.f32 %v1456, 1.0
        %v1465 = vsel %vm1425, %v1296, %v1457
        %v1466 = vsel %vm1426, %v1298, %v1458
        %v1467 = vsel %vm1427, %v1337, %v1459
        %v1468 = vsel %vm1428, %v1339, %v1460
        %v1469 = vsel %vm1429, %v1378, %v1461
        %v1470 = vsel %vm1430, %v1380, %v1462
        %v1471 = vsel %vm1431, %v1419, %v1463
        %v1472 = vsel %vm1432, %v1421, %v1464
        %v1473 = vld [vmem:[%s720] sm:$0xff]
        %v1474 = vld [vmem:[%s720 + $0x8] sm:$0xff]
        %v1475 = vld [vmem:[%s720 + $0x10] sm:$0xff]
        %v1476 = vld [vmem:[%s720 + $0x18] sm:$0xff]
        %v1477 = vld [vmem:[%s720 + $0x20] sm:$0xff]
        %v1478 = vld [vmem:[%s720 + $0x28] sm:$0xff]
        %v1479 = vld [vmem:[%s720 + $0x30] sm:$0xff]
        %v1480 = vld [vmem:[%s720 + $0x38] sm:$0xff]
        %v1481 = vld [vmem:[%s720 + $0x40] sm:$0xff]
        %v1482 = vld [vmem:[%s720 + $0x48] sm:$0xff]
        %v1483 = vld [vmem:[%s720 + $0x50] sm:$0xff]
        %v1484 = vld [vmem:[%s720 + $0x58] sm:$0xff]
        %v1485 = vld [vmem:[%s720 + $0x60] sm:$0xff]
        %v1486 = vld [vmem:[%s720 + $0x68] sm:$0xff]
        %v1487 = vld [vmem:[%s720 + $0x70] sm:$0xff]
        %v1488 = vld [vmem:[%s720 + $0x78] sm:$0xff]
        %v1489 = vld [vmem:[%s720 + $0x80] sm:$0xff]
        %v1490 = vld [vmem:[%s720 + $0x88] sm:$0xff]
        %v1491 = vld [vmem:[%s720 + $0x90] sm:$0xff]
        %v1492 = vld [vmem:[%s720 + $0x98] sm:$0xff]
        %v1493 = vld [vmem:[%s720 + $0xa0] sm:$0xff]
        %v1494 = vld [vmem:[%s720 + $0xa8] sm:$0xff]
        %v1495 = vld [vmem:[%s720 + $0xb0] sm:$0xff]
        %v1496 = vld [vmem:[%s720 + $0xb8] sm:$0xff]
        %v1497 = vld [vmem:[%s720 + $0xc0] sm:$0xff]
        %v1498 = vld [vmem:[%s720 + $0xc8] sm:$0xff]
        %v1499 = vld [vmem:[%s720 + $0xd0] sm:$0xff]
        %v1500 = vld [vmem:[%s720 + $0xd8] sm:$0xff]
        %v1501 = vld [vmem:[%s720 + $0xe0] sm:$0xff]
        %v1502 = vld [vmem:[%s720 + $0xe8] sm:$0xff]
        %v1503 = vld [vmem:[%s720 + $0xf0] sm:$0xff]
        %v1504 = vld [vmem:[%s720 + $0xf8] sm:$0xff]
        %v1505 = vld [vmem:[%s720 + $0x100] sm:$0xff]
        %v1506 = vld [vmem:[%s720 + $0x108] sm:$0xff]
        %v1507 = vld [vmem:[%s720 + $0x110] sm:$0xff]
        %v1508 = vld [vmem:[%s720 + $0x118] sm:$0xff]
        %v1509 = vld [vmem:[%s720 + $0x120] sm:$0xff]
        %v1510 = vld [vmem:[%s720 + $0x128] sm:$0xff]
        %v1511 = vld [vmem:[%s720 + $0x130] sm:$0xff]
        %v1512 = vld [vmem:[%s720 + $0x138] sm:$0xff]
        %v1513 = vld [vmem:[%s720 + $0x140] sm:$0xff]
        %v1514 = vld [vmem:[%s720 + $0x148] sm:$0xff]
        %v1515 = vld [vmem:[%s720 + $0x150] sm:$0xff]
        %v1516 = vld [vmem:[%s720 + $0x158] sm:$0xff]
        %v1517 = vld [vmem:[%s720 + $0x160] sm:$0xff]
        %v1518 = vld [vmem:[%s720 + $0x168] sm:$0xff]
        %v1519 = vld [vmem:[%s720 + $0x170] sm:$0xff]
        %v1520 = vld [vmem:[%s720 + $0x178] sm:$0xff]
        %v1521 = vld [vmem:[%s720 + $0x180] sm:$0xff]
        %v1522 = vld [vmem:[%s720 + $0x188] sm:$0xff]
        %v1523 = vld [vmem:[%s720 + $0x190] sm:$0xff]
        %v1524 = vld [vmem:[%s720 + $0x198] sm:$0xff]
        %v1525 = vld [vmem:[%s720 + $0x1a0] sm:$0xff]
        %v1526 = vld [vmem:[%s720 + $0x1a8] sm:$0xff]
        %v1527 = vld [vmem:[%s720 + $0x1b0] sm:$0xff]
        %v1528 = vld [vmem:[%s720 + $0x1b8] sm:$0xff]
        %v1529 = vld [vmem:[%s720 + $0x1c0] sm:$0xff]
        %v1530 = vld [vmem:[%s720 + $0x1c8] sm:$0xff]
        %v1531 = vld [vmem:[%s720 + $0x1d0] sm:$0xff]
        %v1532 = vld [vmem:[%s720 + $0x1d8] sm:$0xff]
        %v1533 = vld [vmem:[%s720 + $0x1e0] sm:$0xff]
        %v1534 = vld [vmem:[%s720 + $0x1e8] sm:$0xff]
        %v1535 = vld [vmem:[%s720 + $0x1f0] sm:$0xff]
        %v1536 = vld [vmem:[%s720 + $0x1f8] sm:$0xff]
        %v1537 = vld [vmem:[%s720 + $0x200] sm:$0xff]
        %v1538 = vld [vmem:[%s720 + $0x208] sm:$0xff]
        %v1539 = vld [vmem:[%s720 + $0x210] sm:$0xff]
        %v1540 = vld [vmem:[%s720 + $0x218] sm:$0xff]
        %v1541 = vld [vmem:[%s720 + $0x220] sm:$0xff]
        %v1542 = vld [vmem:[%s720 + $0x228] sm:$0xff]
        %v1543 = vld [vmem:[%s720 + $0x230] sm:$0xff]
        %v1544 = vld [vmem:[%s720 + $0x238] sm:$0xff]
        %v1545 = vld [vmem:[%s720 + $0x240] sm:$0xff]
        %v1546 = vld [vmem:[%s720 + $0x248] sm:$0xff]
        %v1547 = vld [vmem:[%s720 + $0x250] sm:$0xff]
        %v1548 = vld [vmem:[%s720 + $0x258] sm:$0xff]
        %v1549 = vld [vmem:[%s720 + $0x260] sm:$0xff]
        %v1550 = vld [vmem:[%s720 + $0x268] sm:$0xff]
        %v1551 = vld [vmem:[%s720 + $0x270] sm:$0xff]
        %v1552 = vld [vmem:[%s720 + $0x278] sm:$0xff]
        %v1553 = vld [vmem:[%s720 + $0x280] sm:$0xff]
        %v1554 = vld [vmem:[%s720 + $0x288] sm:$0xff]
        %v1555 = vld [vmem:[%s720 + $0x290] sm:$0xff]
        %v1556 = vld [vmem:[%s720 + $0x298] sm:$0xff]
        %v1557 = vld [vmem:[%s720 + $0x2a0] sm:$0xff]
        %v1558 = vld [vmem:[%s720 + $0x2a8] sm:$0xff]
        %v1559 = vld [vmem:[%s720 + $0x2b0] sm:$0xff]
        %v1560 = vld [vmem:[%s720 + $0x2b8] sm:$0xff]
        %v1561 = vld [vmem:[%s720 + $0x2c0] sm:$0xff]
        %v1562 = vld [vmem:[%s720 + $0x2c8] sm:$0xff]
        %v1563 = vld [vmem:[%s720 + $0x2d0] sm:$0xff]
        %v1564 = vld [vmem:[%s720 + $0x2d8] sm:$0xff]
        %v1565 = vld [vmem:[%s720 + $0x2e0] sm:$0xff]
        %v1566 = vld [vmem:[%s720 + $0x2e8] sm:$0xff]
        %v1567 = vld [vmem:[%s720 + $0x2f0] sm:$0xff]
        %v1568 = vld [vmem:[%s720 + $0x2f8] sm:$0xff]
        %v1569 = vld [vmem:[%s720 + $0x300] sm:$0xff]
        %v1570 = vld [vmem:[%s720 + $0x308] sm:$0xff]
        %v1571 = vld [vmem:[%s720 + $0x310] sm:$0xff]
        %v1572 = vld [vmem:[%s720 + $0x318] sm:$0xff]
        %v1573 = vld [vmem:[%s720 + $0x320] sm:$0xff]
        %v1574 = vld [vmem:[%s720 + $0x328] sm:$0xff]
        %v1575 = vld [vmem:[%s720 + $0x330] sm:$0xff]
        %v1576 = vld [vmem:[%s720 + $0x338] sm:$0xff]
        %v1577 = vld [vmem:[%s720 + $0x340] sm:$0xff]
        %v1578 = vld [vmem:[%s720 + $0x348] sm:$0xff]
        %v1579 = vld [vmem:[%s720 + $0x350] sm:$0xff]
        %v1580 = vld [vmem:[%s720 + $0x358] sm:$0xff]
        %v1581 = vld [vmem:[%s720 + $0x360] sm:$0xff]
        %v1582 = vld [vmem:[%s720 + $0x368] sm:$0xff]
        %v1583 = vld [vmem:[%s720 + $0x370] sm:$0xff]
        %v1584 = vld [vmem:[%s720 + $0x378] sm:$0xff]
        %v1585 = vld [vmem:[%s720 + $0x380] sm:$0xff]
        %v1586 = vld [vmem:[%s720 + $0x388] sm:$0xff]
        %v1587 = vld [vmem:[%s720 + $0x390] sm:$0xff]
        %v1588 = vld [vmem:[%s720 + $0x398] sm:$0xff]
        %v1589 = vld [vmem:[%s720 + $0x3a0] sm:$0xff]
        %v1590 = vld [vmem:[%s720 + $0x3a8] sm:$0xff]
        %v1591 = vld [vmem:[%s720 + $0x3b0] sm:$0xff]
        %v1592 = vld [vmem:[%s720 + $0x3b8] sm:$0xff]
        %v1593 = vld [vmem:[%s720 + $0x3c0] sm:$0xff]
        %v1594 = vld [vmem:[%s720 + $0x3c8] sm:$0xff]
        %v1595 = vld [vmem:[%s720 + $0x3d0] sm:$0xff]
        %v1596 = vld [vmem:[%s720 + $0x3d8] sm:$0xff]
        %v1597 = vld [vmem:[%s720 + $0x3e0] sm:$0xff]
        %v1598 = vld [vmem:[%s720 + $0x3e8] sm:$0xff]
        %v1599 = vld [vmem:[%s720 + $0x3f0] sm:$0xff]
        %v1600 = vld [vmem:[%s720 + $0x3f8] sm:$0xff]
        %v1601 = vld [vmem:[%s720 + $0x400] sm:$0xff]
        %v1602 = vld [vmem:[%s720 + $0x408] sm:$0xff]
        %v1603 = vld [vmem:[%s720 + $0x410] sm:$0xff]
        %v1604 = vld [vmem:[%s720 + $0x418] sm:$0xff]
        %v1605 = vld [vmem:[%s720 + $0x420] sm:$0xff]
        %v1606 = vld [vmem:[%s720 + $0x428] sm:$0xff]
        %v1607 = vld [vmem:[%s720 + $0x430] sm:$0xff]
        %v1608 = vld [vmem:[%s720 + $0x438] sm:$0xff]
        %v1609 = vld [vmem:[%s720 + $0x440] sm:$0xff]
        %v1610 = vld [vmem:[%s720 + $0x448] sm:$0xff]
        %v1611 = vld [vmem:[%s720 + $0x450] sm:$0xff]
        %v1612 = vld [vmem:[%s720 + $0x458] sm:$0xff]
        %v1613 = vld [vmem:[%s720 + $0x460] sm:$0xff]
        %v1614 = vld [vmem:[%s720 + $0x468] sm:$0xff]
        %v1615 = vld [vmem:[%s720 + $0x470] sm:$0xff]
        %v1616 = vld [vmem:[%s720 + $0x478] sm:$0xff]
        %v1617 = vld [vmem:[%s720 + $0x480] sm:$0xff]
        %v1618 = vld [vmem:[%s720 + $0x488] sm:$0xff]
        %v1619 = vld [vmem:[%s720 + $0x490] sm:$0xff]
        %v1620 = vld [vmem:[%s720 + $0x498] sm:$0xff]
        %v1621 = vld [vmem:[%s720 + $0x4a0] sm:$0xff]
        %v1622 = vld [vmem:[%s720 + $0x4a8] sm:$0xff]
        %v1623 = vld [vmem:[%s720 + $0x4b0] sm:$0xff]
        %v1624 = vld [vmem:[%s720 + $0x4b8] sm:$0xff]
        %v1625 = vld [vmem:[%s720 + $0x4c0] sm:$0xff]
        %v1626 = vld [vmem:[%s720 + $0x4c8] sm:$0xff]
        %v1627 = vld [vmem:[%s720 + $0x4d0] sm:$0xff]
        %v1628 = vld [vmem:[%s720 + $0x4d8] sm:$0xff]
        %v1629 = vld [vmem:[%s720 + $0x4e0] sm:$0xff]
        %v1630 = vld [vmem:[%s720 + $0x4e8] sm:$0xff]
        %v1631 = vld [vmem:[%s720 + $0x4f0] sm:$0xff]
        %v1632 = vld [vmem:[%s720 + $0x4f8] sm:$0xff]
        %v1633 = vld [vmem:[%s720 + $0x500] sm:$0xff]
        %v1634 = vld [vmem:[%s720 + $0x508] sm:$0xff]
        %v1635 = vld [vmem:[%s720 + $0x510] sm:$0xff]
        %v1636 = vld [vmem:[%s720 + $0x518] sm:$0xff]
        %v1637 = vld [vmem:[%s720 + $0x520] sm:$0xff]
        %v1638 = vld [vmem:[%s720 + $0x528] sm:$0xff]
        %v1639 = vld [vmem:[%s720 + $0x530] sm:$0xff]
        %v1640 = vld [vmem:[%s720 + $0x538] sm:$0xff]
        %v1641 = vld [vmem:[%s720 + $0x540] sm:$0xff]
        %v1642 = vld [vmem:[%s720 + $0x548] sm:$0xff]
        %v1643 = vld [vmem:[%s720 + $0x550] sm:$0xff]
        %v1644 = vld [vmem:[%s720 + $0x558] sm:$0xff]
        %v1645 = vld [vmem:[%s720 + $0x560] sm:$0xff]
        %v1646 = vld [vmem:[%s720 + $0x568] sm:$0xff]
        %v1647 = vld [vmem:[%s720 + $0x570] sm:$0xff]
        %v1648 = vld [vmem:[%s720 + $0x578] sm:$0xff]
        %v1649 = vld [vmem:[%s720 + $0x580] sm:$0xff]
        %v1650 = vld [vmem:[%s720 + $0x588] sm:$0xff]
        %v1651 = vld [vmem:[%s720 + $0x590] sm:$0xff]
        %v1652 = vld [vmem:[%s720 + $0x598] sm:$0xff]
        %v1653 = vld [vmem:[%s720 + $0x5a0] sm:$0xff]
        %v1654 = vld [vmem:[%s720 + $0x5a8] sm:$0xff]
        %v1655 = vld [vmem:[%s720 + $0x5b0] sm:$0xff]
        %v1656 = vld [vmem:[%s720 + $0x5b8] sm:$0xff]
        %v1657 = vld [vmem:[%s720 + $0x5c0] sm:$0xff]
        %v1658 = vld [vmem:[%s720 + $0x5c8] sm:$0xff]
        %v1659 = vld [vmem:[%s720 + $0x5d0] sm:$0xff]
        %v1660 = vld [vmem:[%s720 + $0x5d8] sm:$0xff]
        %v1661 = vld [vmem:[%s720 + $0x5e0] sm:$0xff]
        %v1662 = vld [vmem:[%s720 + $0x5e8] sm:$0xff]
        %v1663 = vld [vmem:[%s720 + $0x5f0] sm:$0xff]
        %v1664 = vld [vmem:[%s720 + $0x5f8] sm:$0xff]
        %v1665 = vld [vmem:[%s720 + $0x600] sm:$0xff]
        %v1666 = vld [vmem:[%s720 + $0x608] sm:$0xff]
        %v1667 = vld [vmem:[%s720 + $0x610] sm:$0xff]
        %v1668 = vld [vmem:[%s720 + $0x618] sm:$0xff]
        %v1669 = vld [vmem:[%s720 + $0x620] sm:$0xff]
        %v1670 = vld [vmem:[%s720 + $0x628] sm:$0xff]
        %v1671 = vld [vmem:[%s720 + $0x630] sm:$0xff]
        %v1672 = vld [vmem:[%s720 + $0x638] sm:$0xff]
        %v1673 = vld [vmem:[%s720 + $0x640] sm:$0xff]
        %v1674 = vld [vmem:[%s720 + $0x648] sm:$0xff]
        %v1675 = vld [vmem:[%s720 + $0x650] sm:$0xff]
        %v1676 = vld [vmem:[%s720 + $0x658] sm:$0xff]
        %v1677 = vld [vmem:[%s720 + $0x660] sm:$0xff]
        %v1678 = vld [vmem:[%s720 + $0x668] sm:$0xff]
        %v1679 = vld [vmem:[%s720 + $0x670] sm:$0xff]
        %v1680 = vld [vmem:[%s720 + $0x678] sm:$0xff]
        %v1681 = vld [vmem:[%s720 + $0x680] sm:$0xff]
        %v1682 = vld [vmem:[%s720 + $0x688] sm:$0xff]
        %v1683 = vld [vmem:[%s720 + $0x690] sm:$0xff]
        %v1684 = vld [vmem:[%s720 + $0x698] sm:$0xff]
        %v1685 = vld [vmem:[%s720 + $0x6a0] sm:$0xff]
        %v1686 = vld [vmem:[%s720 + $0x6a8] sm:$0xff]
        %v1687 = vld [vmem:[%s720 + $0x6b0] sm:$0xff]
        %v1688 = vld [vmem:[%s720 + $0x6b8] sm:$0xff]
        %v1689 = vld [vmem:[%s720 + $0x6c0] sm:$0xff]
        %v1690 = vld [vmem:[%s720 + $0x6c8] sm:$0xff]
        %v1691 = vld [vmem:[%s720 + $0x6d0] sm:$0xff]
        %v1692 = vld [vmem:[%s720 + $0x6d8] sm:$0xff]
        %v1693 = vld [vmem:[%s720 + $0x6e0] sm:$0xff]
        %v1694 = vld [vmem:[%s720 + $0x6e8] sm:$0xff]
        %v1695 = vld [vmem:[%s720 + $0x6f0] sm:$0xff]
        %v1696 = vld [vmem:[%s720 + $0x6f8] sm:$0xff]
        %v1697 = vld [vmem:[%s720 + $0x700] sm:$0xff]
        %v1698 = vld [vmem:[%s720 + $0x708] sm:$0xff]
        %v1699 = vld [vmem:[%s720 + $0x710] sm:$0xff]
        %v1700 = vld [vmem:[%s720 + $0x718] sm:$0xff]
        %v1701 = vld [vmem:[%s720 + $0x720] sm:$0xff]
        %v1702 = vld [vmem:[%s720 + $0x728] sm:$0xff]
        %v1703 = vld [vmem:[%s720 + $0x730] sm:$0xff]
        %v1704 = vld [vmem:[%s720 + $0x738] sm:$0xff]
        %v1705 = vld [vmem:[%s720 + $0x740] sm:$0xff]
        %v1706 = vld [vmem:[%s720 + $0x748] sm:$0xff]
        %v1707 = vld [vmem:[%s720 + $0x750] sm:$0xff]
        %v1708 = vld [vmem:[%s720 + $0x758] sm:$0xff]
        %v1709 = vld [vmem:[%s720 + $0x760] sm:$0xff]
        %v1710 = vld [vmem:[%s720 + $0x768] sm:$0xff]
        %v1711 = vld [vmem:[%s720 + $0x770] sm:$0xff]
        %v1712 = vld [vmem:[%s720 + $0x778] sm:$0xff]
        %v1713 = vld [vmem:[%s720 + $0x780] sm:$0xff]
        %v1714 = vld [vmem:[%s720 + $0x788] sm:$0xff]
        %v1715 = vld [vmem:[%s720 + $0x790] sm:$0xff]
        %v1716 = vld [vmem:[%s720 + $0x798] sm:$0xff]
        %v1717 = vld [vmem:[%s720 + $0x7a0] sm:$0xff]
        %v1718 = vld [vmem:[%s720 + $0x7a8] sm:$0xff]
        %v1719 = vld [vmem:[%s720 + $0x7b0] sm:$0xff]
        %v1720 = vld [vmem:[%s720 + $0x7b8] sm:$0xff]
        %v1721 = vld [vmem:[%s720 + $0x7c0] sm:$0xff]
        %v1722 = vld [vmem:[%s720 + $0x7c8] sm:$0xff]
        %v1723 = vld [vmem:[%s720 + $0x7d0] sm:$0xff]
        %v1724 = vld [vmem:[%s720 + $0x7d8] sm:$0xff]
        %v1725 = vld [vmem:[%s720 + $0x7e0] sm:$0xff]
        %v1726 = vld [vmem:[%s720 + $0x7e8] sm:$0xff]
        %v1727 = vld [vmem:[%s720 + $0x7f0] sm:$0xff]
        %v1728 = vld [vmem:[%s720 + $0x7f8] sm:$0xff]
        %v1729 = vunpack.c.l.s8.bf16 %v1473
        %v1730 = vunpack.c.l.s8.bf16 %v1474
        %v1731 = vunpack.c.l.s8.bf16 %v1475
        %v1732 = vunpack.c.l.s8.bf16 %v1476
        %v1733 = vunpack.c.l.s8.bf16 %v1477
        %v1734 = vunpack.c.l.s8.bf16 %v1478
        %v1735 = vunpack.c.l.s8.bf16 %v1479
        %v1736 = vunpack.c.l.s8.bf16 %v1480
        %v1737 = vunpack.c.h.s8.bf16 %v1473
        %v1738 = vunpack.c.h.s8.bf16 %v1474
        %v1739 = vunpack.c.h.s8.bf16 %v1475
        %v1740 = vunpack.c.h.s8.bf16 %v1476
        %v1741 = vunpack.c.h.s8.bf16 %v1477
        %v1742 = vunpack.c.h.s8.bf16 %v1478
        %v1743 = vunpack.c.h.s8.bf16 %v1479
        %v1744 = vunpack.c.h.s8.bf16 %v1480
        %v1745 = vunpack.c.l.s8.bf16 %v1481
        %v1746 = vunpack.c.l.s8.bf16 %v1482
        %v1747 = vunpack.c.l.s8.bf16 %v1483
        %v1748 = vunpack.c.l.s8.bf16 %v1484
        %v1749 = vunpack.c.l.s8.bf16 %v1485
        %v1750 = vunpack.c.l.s8.bf16 %v1486
        %v1751 = vunpack.c.l.s8.bf16 %v1487
        %v1752 = vunpack.c.l.s8.bf16 %v1488
        %v1753 = vunpack.c.h.s8.bf16 %v1481
        %v1754 = vunpack.c.h.s8.bf16 %v1482
        %v1755 = vunpack.c.h.s8.bf16 %v1483
        %v1756 = vunpack.c.h.s8.bf16 %v1484
        %v1757 = vunpack.c.h.s8.bf16 %v1485
        %v1758 = vunpack.c.h.s8.bf16 %v1486
        %v1759 = vunpack.c.h.s8.bf16 %v1487
        %v1760 = vunpack.c.h.s8.bf16 %v1488
        %v1761 = vunpack.c.l.s8.bf16 %v1489
        %v1762 = vunpack.c.l.s8.bf16 %v1490
        %v1763 = vunpack.c.l.s8.bf16 %v1491
        %v1764 = vunpack.c.l.s8.bf16 %v1492
        %v1765 = vunpack.c.l.s8.bf16 %v1493
        %v1766 = vunpack.c.l.s8.bf16 %v1494
        %v1767 = vunpack.c.l.s8.bf16 %v1495
        %v1768 = vunpack.c.l.s8.bf16 %v1496
        %v1769 = vunpack.c.h.s8.bf16 %v1489
        %v1770 = vunpack.c.h.s8.bf16 %v1490
        %v1771 = vunpack.c.h.s8.bf16 %v1491
        %v1772 = vunpack.c.h.s8.bf16 %v1492
        %v1773 = vunpack.c.h.s8.bf16 %v1493
        %v1774 = vunpack.c.h.s8.bf16 %v1494
        %v1775 = vunpack.c.h.s8.bf16 %v1495
        %v1776 = vunpack.c.h.s8.bf16 %v1496
        %v1777 = vunpack.c.l.s8.bf16 %v1497
        %v1778 = vunpack.c.l.s8.bf16 %v1498
        %v1779 = vunpack.c.l.s8.bf16 %v1499
        %v1780 = vunpack.c.l.s8.bf16 %v1500
        %v1781 = vunpack.c.l.s8.bf16 %v1501
        %v1782 = vunpack.c.l.s8.bf16 %v1502
        %v1783 = vunpack.c.l.s8.bf16 %v1503
        %v1784 = vunpack.c.l.s8.bf16 %v1504
        %v1785 = vunpack.c.h.s8.bf16 %v1497
        %v1786 = vunpack.c.h.s8.bf16 %v1498
        %v1787 = vunpack.c.h.s8.bf16 %v1499
        %v1788 = vunpack.c.h.s8.bf16 %v1500
        %v1789 = vunpack.c.h.s8.bf16 %v1501
        %v1790 = vunpack.c.h.s8.bf16 %v1502
        %v1791 = vunpack.c.h.s8.bf16 %v1503
        %v1792 = vunpack.c.h.s8.bf16 %v1504
        %v1793 = vunpack.c.l.s8.bf16 %v1505
        %v1794 = vunpack.c.l.s8.bf16 %v1506
        %v1795 = vunpack.c.l.s8.bf16 %v1507
        %v1796 = vunpack.c.l.s8.bf16 %v1508
        %v1797 = vunpack.c.l.s8.bf16 %v1509
        %v1798 = vunpack.c.l.s8.bf16 %v1510
        %v1799 = vunpack.c.l.s8.bf16 %v1511
        %v1800 = vunpack.c.l.s8.bf16 %v1512
        %v1801 = vunpack.c.h.s8.bf16 %v1505
        %v1802 = vunpack.c.h.s8.bf16 %v1506
        %v1803 = vunpack.c.h.s8.bf16 %v1507
        %v1804 = vunpack.c.h.s8.bf16 %v1508
        %v1805 = vunpack.c.h.s8.bf16 %v1509
        %v1806 = vunpack.c.h.s8.bf16 %v1510
        %v1807 = vunpack.c.h.s8.bf16 %v1511
        %v1808 = vunpack.c.h.s8.bf16 %v1512
        %v1809 = vunpack.c.l.s8.bf16 %v1513
        %v1810 = vunpack.c.l.s8.bf16 %v1514
        %v1811 = vunpack.c.l.s8.bf16 %v1515
        %v1812 = vunpack.c.l.s8.bf16 %v1516
        %v1813 = vunpack.c.l.s8.bf16 %v1517
        %v1814 = vunpack.c.l.s8.bf16 %v1518
        %v1815 = vunpack.c.l.s8.bf16 %v1519
        %v1816 = vunpack.c.l.s8.bf16 %v1520
        %v1817 = vunpack.c.h.s8.bf16 %v1513
        %v1818 = vunpack.c.h.s8.bf16 %v1514
        %v1819 = vunpack.c.h.s8.bf16 %v1515
        %v1820 = vunpack.c.h.s8.bf16 %v1516
        %v1821 = vunpack.c.h.s8.bf16 %v1517
        %v1822 = vunpack.c.h.s8.bf16 %v1518
        %v1823 = vunpack.c.h.s8.bf16 %v1519
        %v1824 = vunpack.c.h.s8.bf16 %v1520
        %v1825 = vunpack.c.l.s8.bf16 %v1521
        %v1826 = vunpack.c.l.s8.bf16 %v1522
        %v1827 = vunpack.c.l.s8.bf16 %v1523
        %v1828 = vunpack.c.l.s8.bf16 %v1524
        %v1829 = vunpack.c.l.s8.bf16 %v1525
        %v1830 = vunpack.c.l.s8.bf16 %v1526
        %v1831 = vunpack.c.l.s8.bf16 %v1527
        %v1832 = vunpack.c.l.s8.bf16 %v1528
        %v1833 = vunpack.c.h.s8.bf16 %v1521
        %v1834 = vunpack.c.h.s8.bf16 %v1522
        %v1835 = vunpack.c.h.s8.bf16 %v1523
        %v1836 = vunpack.c.h.s8.bf16 %v1524
        %v1837 = vunpack.c.h.s8.bf16 %v1525
        %v1838 = vunpack.c.h.s8.bf16 %v1526
        %v1839 = vunpack.c.h.s8.bf16 %v1527
        %v1840 = vunpack.c.h.s8.bf16 %v1528
        %v1841 = vunpack.c.l.s8.bf16 %v1529
        %v1842 = vunpack.c.l.s8.bf16 %v1530
        %v1843 = vunpack.c.l.s8.bf16 %v1531
        %v1844 = vunpack.c.l.s8.bf16 %v1532
        %v1845 = vunpack.c.l.s8.bf16 %v1533
        %v1846 = vunpack.c.l.s8.bf16 %v1534
        %v1847 = vunpack.c.l.s8.bf16 %v1535
        %v1848 = vunpack.c.l.s8.bf16 %v1536
        %v1849 = vunpack.c.h.s8.bf16 %v1529
        %v1850 = vunpack.c.h.s8.bf16 %v1530
        %v1851 = vunpack.c.h.s8.bf16 %v1531
        %v1852 = vunpack.c.h.s8.bf16 %v1532
        %v1853 = vunpack.c.h.s8.bf16 %v1533
        %v1854 = vunpack.c.h.s8.bf16 %v1534
        %v1855 = vunpack.c.h.s8.bf16 %v1535
        %v1856 = vunpack.c.h.s8.bf16 %v1536
        %v1857 = vunpack.c.l.s8.bf16 %v1537
        %v1858 = vunpack.c.l.s8.bf16 %v1538
        %v1859 = vunpack.c.l.s8.bf16 %v1539
        %v1860 = vunpack.c.l.s8.bf16 %v1540
        %v1861 = vunpack.c.l.s8.bf16 %v1541
        %v1862 = vunpack.c.l.s8.bf16 %v1542
        %v1863 = vunpack.c.l.s8.bf16 %v1543
        %v1864 = vunpack.c.l.s8.bf16 %v1544
        %v1865 = vunpack.c.h.s8.bf16 %v1537
        %v1866 = vunpack.c.h.s8.bf16 %v1538
        %v1867 = vunpack.c.h.s8.bf16 %v1539
        %v1868 = vunpack.c.h.s8.bf16 %v1540
        %v1869 = vunpack.c.h.s8.bf16 %v1541
        %v1870 = vunpack.c.h.s8.bf16 %v1542
        %v1871 = vunpack.c.h.s8.bf16 %v1543
        %v1872 = vunpack.c.h.s8.bf16 %v1544
        %v1873 = vunpack.c.l.s8.bf16 %v1545
        %v1874 = vunpack.c.l.s8.bf16 %v1546
        %v1875 = vunpack.c.l.s8.bf16 %v1547
        %v1876 = vunpack.c.l.s8.bf16 %v1548
        %v1877 = vunpack.c.l.s8.bf16 %v1549
        %v1878 = vunpack.c.l.s8.bf16 %v1550
        %v1879 = vunpack.c.l.s8.bf16 %v1551
        %v1880 = vunpack.c.l.s8.bf16 %v1552
        %v1881 = vunpack.c.h.s8.bf16 %v1545
        %v1882 = vunpack.c.h.s8.bf16 %v1546
        %v1883 = vunpack.c.h.s8.bf16 %v1547
        %v1884 = vunpack.c.h.s8.bf16 %v1548
        %v1885 = vunpack.c.h.s8.bf16 %v1549
        %v1886 = vunpack.c.h.s8.bf16 %v1550
        %v1887 = vunpack.c.h.s8.bf16 %v1551
        %v1888 = vunpack.c.h.s8.bf16 %v1552
        %v1889 = vunpack.c.l.s8.bf16 %v1553
        %v1890 = vunpack.c.l.s8.bf16 %v1554
        %v1891 = vunpack.c.l.s8.bf16 %v1555
        %v1892 = vunpack.c.l.s8.bf16 %v1556
        %v1893 = vunpack.c.l.s8.bf16 %v1557
        %v1894 = vunpack.c.l.s8.bf16 %v1558
        %v1895 = vunpack.c.l.s8.bf16 %v1559
        %v1896 = vunpack.c.l.s8.bf16 %v1560
        %v1897 = vunpack.c.h.s8.bf16 %v1553
        %v1898 = vunpack.c.h.s8.bf16 %v1554
        %v1899 = vunpack.c.h.s8.bf16 %v1555
        %v1900 = vunpack.c.h.s8.bf16 %v1556
        %v1901 = vunpack.c.h.s8.bf16 %v1557
        %v1902 = vunpack.c.h.s8.bf16 %v1558
        %v1903 = vunpack.c.h.s8.bf16 %v1559
        %v1904 = vunpack.c.h.s8.bf16 %v1560
        %v1905 = vunpack.c.l.s8.bf16 %v1561
        %v1906 = vunpack.c.l.s8.bf16 %v1562
        %v1907 = vunpack.c.l.s8.bf16 %v1563
        %v1908 = vunpack.c.l.s8.bf16 %v1564
        %v1909 = vunpack.c.l.s8.bf16 %v1565
        %v1910 = vunpack.c.l.s8.bf16 %v1566
        %v1911 = vunpack.c.l.s8.bf16 %v1567
        %v1912 = vunpack.c.l.s8.bf16 %v1568
        %v1913 = vunpack.c.h.s8.bf16 %v1561
        %v1914 = vunpack.c.h.s8.bf16 %v1562
        %v1915 = vunpack.c.h.s8.bf16 %v1563
        %v1916 = vunpack.c.h.s8.bf16 %v1564
        %v1917 = vunpack.c.h.s8.bf16 %v1565
        %v1918 = vunpack.c.h.s8.bf16 %v1566
        %v1919 = vunpack.c.h.s8.bf16 %v1567
        %v1920 = vunpack.c.h.s8.bf16 %v1568
        %v1921 = vunpack.c.l.s8.bf16 %v1569
        %v1922 = vunpack.c.l.s8.bf16 %v1570
        %v1923 = vunpack.c.l.s8.bf16 %v1571
        %v1924 = vunpack.c.l.s8.bf16 %v1572
        %v1925 = vunpack.c.l.s8.bf16 %v1573
        %v1926 = vunpack.c.l.s8.bf16 %v1574
        %v1927 = vunpack.c.l.s8.bf16 %v1575
        %v1928 = vunpack.c.l.s8.bf16 %v1576
        %v1929 = vunpack.c.h.s8.bf16 %v1569
        %v1930 = vunpack.c.h.s8.bf16 %v1570
        %v1931 = vunpack.c.h.s8.bf16 %v1571
        %v1932 = vunpack.c.h.s8.bf16 %v1572
        %v1933 = vunpack.c.h.s8.bf16 %v1573
        %v1934 = vunpack.c.h.s8.bf16 %v1574
        %v1935 = vunpack.c.h.s8.bf16 %v1575
        %v1936 = vunpack.c.h.s8.bf16 %v1576
        %v1937 = vunpack.c.l.s8.bf16 %v1577
        %v1938 = vunpack.c.l.s8.bf16 %v1578
        %v1939 = vunpack.c.l.s8.bf16 %v1579
        %v1940 = vunpack.c.l.s8.bf16 %v1580
        %v1941 = vunpack.c.l.s8.bf16 %v1581
        %v1942 = vunpack.c.l.s8.bf16 %v1582
        %v1943 = vunpack.c.l.s8.bf16 %v1583
        %v1944 = vunpack.c.l.s8.bf16 %v1584
        %v1945 = vunpack.c.h.s8.bf16 %v1577
        %v1946 = vunpack.c.h.s8.bf16 %v1578
        %v1947 = vunpack.c.h.s8.bf16 %v1579
        %v1948 = vunpack.c.h.s8.bf16 %v1580
        %v1949 = vunpack.c.h.s8.bf16 %v1581
        %v1950 = vunpack.c.h.s8.bf16 %v1582
        %v1951 = vunpack.c.h.s8.bf16 %v1583
        %v1952 = vunpack.c.h.s8.bf16 %v1584
        %v1953 = vunpack.c.l.s8.bf16 %v1585
        %v1954 = vunpack.c.l.s8.bf16 %v1586
        %v1955 = vunpack.c.l.s8.bf16 %v1587
        %v1956 = vunpack.c.l.s8.bf16 %v1588
        %v1957 = vunpack.c.l.s8.bf16 %v1589
        %v1958 = vunpack.c.l.s8.bf16 %v1590
        %v1959 = vunpack.c.l.s8.bf16 %v1591
        %v1960 = vunpack.c.l.s8.bf16 %v1592
        %v1961 = vunpack.c.h.s8.bf16 %v1585
        %v1962 = vunpack.c.h.s8.bf16 %v1586
        %v1963 = vunpack.c.h.s8.bf16 %v1587
        %v1964 = vunpack.c.h.s8.bf16 %v1588
        %v1965 = vunpack.c.h.s8.bf16 %v1589
        %v1966 = vunpack.c.h.s8.bf16 %v1590
        %v1967 = vunpack.c.h.s8.bf16 %v1591
        %v1968 = vunpack.c.h.s8.bf16 %v1592
        %v1969 = vunpack.c.l.s8.bf16 %v1593
        %v1970 = vunpack.c.l.s8.bf16 %v1594
        %v1971 = vunpack.c.l.s8.bf16 %v1595
        %v1972 = vunpack.c.l.s8.bf16 %v1596
        %v1973 = vunpack.c.l.s8.bf16 %v1597
        %v1974 = vunpack.c.l.s8.bf16 %v1598
        %v1975 = vunpack.c.l.s8.bf16 %v1599
        %v1976 = vunpack.c.l.s8.bf16 %v1600
        %v1977 = vunpack.c.h.s8.bf16 %v1593
        %v1978 = vunpack.c.h.s8.bf16 %v1594
        %v1979 = vunpack.c.h.s8.bf16 %v1595
        %v1980 = vunpack.c.h.s8.bf16 %v1596
        %v1981 = vunpack.c.h.s8.bf16 %v1597
        %v1982 = vunpack.c.h.s8.bf16 %v1598
        %v1983 = vunpack.c.h.s8.bf16 %v1599
        %v1984 = vunpack.c.h.s8.bf16 %v1600
        %v1985 = vunpack.c.l.s8.bf16 %v1601
        %v1986 = vunpack.c.l.s8.bf16 %v1602
        %v1987 = vunpack.c.l.s8.bf16 %v1603
        %v1988 = vunpack.c.l.s8.bf16 %v1604
        %v1989 = vunpack.c.l.s8.bf16 %v1605
        %v1990 = vunpack.c.l.s8.bf16 %v1606
        %v1991 = vunpack.c.l.s8.bf16 %v1607
        %v1992 = vunpack.c.l.s8.bf16 %v1608
        %v1993 = vunpack.c.h.s8.bf16 %v1601
        %v1994 = vunpack.c.h.s8.bf16 %v1602
        %v1995 = vunpack.c.h.s8.bf16 %v1603
        %v1996 = vunpack.c.h.s8.bf16 %v1604
        %v1997 = vunpack.c.h.s8.bf16 %v1605
        %v1998 = vunpack.c.h.s8.bf16 %v1606
        %v1999 = vunpack.c.h.s8.bf16 %v1607
        %v2000 = vunpack.c.h.s8.bf16 %v1608
        %v2001 = vunpack.c.l.s8.bf16 %v1609
        %v2002 = vunpack.c.l.s8.bf16 %v1610
        %v2003 = vunpack.c.l.s8.bf16 %v1611
        %v2004 = vunpack.c.l.s8.bf16 %v1612
        %v2005 = vunpack.c.l.s8.bf16 %v1613
        %v2006 = vunpack.c.l.s8.bf16 %v1614
        %v2007 = vunpack.c.l.s8.bf16 %v1615
        %v2008 = vunpack.c.l.s8.bf16 %v1616
        %v2009 = vunpack.c.h.s8.bf16 %v1609
        %v2010 = vunpack.c.h.s8.bf16 %v1610
        %v2011 = vunpack.c.h.s8.bf16 %v1611
        %v2012 = vunpack.c.h.s8.bf16 %v1612
        %v2013 = vunpack.c.h.s8.bf16 %v1613
        %v2014 = vunpack.c.h.s8.bf16 %v1614
        %v2015 = vunpack.c.h.s8.bf16 %v1615
        %v2016 = vunpack.c.h.s8.bf16 %v1616
        %v2017 = vunpack.c.l.s8.bf16 %v1617
        %v2018 = vunpack.c.l.s8.bf16 %v1618
        %v2019 = vunpack.c.l.s8.bf16 %v1619
        %v2020 = vunpack.c.l.s8.bf16 %v1620
        %v2021 = vunpack.c.l.s8.bf16 %v1621
        %v2022 = vunpack.c.l.s8.bf16 %v1622
        %v2023 = vunpack.c.l.s8.bf16 %v1623
        %v2024 = vunpack.c.l.s8.bf16 %v1624
        %v2025 = vunpack.c.h.s8.bf16 %v1617
        %v2026 = vunpack.c.h.s8.bf16 %v1618
        %v2027 = vunpack.c.h.s8.bf16 %v1619
        %v2028 = vunpack.c.h.s8.bf16 %v1620
        %v2029 = vunpack.c.h.s8.bf16 %v1621
        %v2030 = vunpack.c.h.s8.bf16 %v1622
        %v2031 = vunpack.c.h.s8.bf16 %v1623
        %v2032 = vunpack.c.h.s8.bf16 %v1624
        %v2033 = vunpack.c.l.s8.bf16 %v1625
        %v2034 = vunpack.c.l.s8.bf16 %v1626
        %v2035 = vunpack.c.l.s8.bf16 %v1627
        %v2036 = vunpack.c.l.s8.bf16 %v1628
        %v2037 = vunpack.c.l.s8.bf16 %v1629
        %v2038 = vunpack.c.l.s8.bf16 %v1630
        %v2039 = vunpack.c.l.s8.bf16 %v1631
        %v2040 = vunpack.c.l.s8.bf16 %v1632
        %v2041 = vunpack.c.h.s8.bf16 %v1625
        %v2042 = vunpack.c.h.s8.bf16 %v1626
        %v2043 = vunpack.c.h.s8.bf16 %v1627
        %v2044 = vunpack.c.h.s8.bf16 %v1628
        %v2045 = vunpack.c.h.s8.bf16 %v1629
        %v2046 = vunpack.c.h.s8.bf16 %v1630
        %v2047 = vunpack.c.h.s8.bf16 %v1631
        %v2048 = vunpack.c.h.s8.bf16 %v1632
        %v2049 = vunpack.c.l.s8.bf16 %v1633
        %v2050 = vunpack.c.l.s8.bf16 %v1634
        %v2051 = vunpack.c.l.s8.bf16 %v1635
        %v2052 = vunpack.c.l.s8.bf16 %v1636
        %v2053 = vunpack.c.l.s8.bf16 %v1637
        %v2054 = vunpack.c.l.s8.bf16 %v1638
        %v2055 = vunpack.c.l.s8.bf16 %v1639
        %v2056 = vunpack.c.l.s8.bf16 %v1640
        %v2057 = vunpack.c.h.s8.bf16 %v1633
        %v2058 = vunpack.c.h.s8.bf16 %v1634
        %v2059 = vunpack.c.h.s8.bf16 %v1635
        %v2060 = vunpack.c.h.s8.bf16 %v1636
        %v2061 = vunpack.c.h.s8.bf16 %v1637
        %v2062 = vunpack.c.h.s8.bf16 %v1638
        %v2063 = vunpack.c.h.s8.bf16 %v1639
        %v2064 = vunpack.c.h.s8.bf16 %v1640
        %v2065 = vunpack.c.l.s8.bf16 %v1641
        %v2066 = vunpack.c.l.s8.bf16 %v1642
        %v2067 = vunpack.c.l.s8.bf16 %v1643
        %v2068 = vunpack.c.l.s8.bf16 %v1644
        %v2069 = vunpack.c.l.s8.bf16 %v1645
        %v2070 = vunpack.c.l.s8.bf16 %v1646
        %v2071 = vunpack.c.l.s8.bf16 %v1647
        %v2072 = vunpack.c.l.s8.bf16 %v1648
        %v2073 = vunpack.c.h.s8.bf16 %v1641
        %v2074 = vunpack.c.h.s8.bf16 %v1642
        %v2075 = vunpack.c.h.s8.bf16 %v1643
        %v2076 = vunpack.c.h.s8.bf16 %v1644
        %v2077 = vunpack.c.h.s8.bf16 %v1645
        %v2078 = vunpack.c.h.s8.bf16 %v1646
        %v2079 = vunpack.c.h.s8.bf16 %v1647
        %v2080 = vunpack.c.h.s8.bf16 %v1648
        %v2081 = vunpack.c.l.s8.bf16 %v1649
        %v2082 = vunpack.c.l.s8.bf16 %v1650
        %v2083 = vunpack.c.l.s8.bf16 %v1651
        %v2084 = vunpack.c.l.s8.bf16 %v1652
        %v2085 = vunpack.c.l.s8.bf16 %v1653
        %v2086 = vunpack.c.l.s8.bf16 %v1654
        %v2087 = vunpack.c.l.s8.bf16 %v1655
        %v2088 = vunpack.c.l.s8.bf16 %v1656
        %v2089 = vunpack.c.h.s8.bf16 %v1649
        %v2090 = vunpack.c.h.s8.bf16 %v1650
        %v2091 = vunpack.c.h.s8.bf16 %v1651
        %v2092 = vunpack.c.h.s8.bf16 %v1652
        %v2093 = vunpack.c.h.s8.bf16 %v1653
        %v2094 = vunpack.c.h.s8.bf16 %v1654
        %v2095 = vunpack.c.h.s8.bf16 %v1655
        %v2096 = vunpack.c.h.s8.bf16 %v1656
        %v2097 = vunpack.c.l.s8.bf16 %v1657
        %v2098 = vunpack.c.l.s8.bf16 %v1658
        %v2099 = vunpack.c.l.s8.bf16 %v1659
        %v2100 = vunpack.c.l.s8.bf16 %v1660
        %v2101 = vunpack.c.l.s8.bf16 %v1661
        %v2102 = vunpack.c.l.s8.bf16 %v1662
        %v2103 = vunpack.c.l.s8.bf16 %v1663
        %v2104 = vunpack.c.l.s8.bf16 %v1664
        %v2105 = vunpack.c.h.s8.bf16 %v1657
        %v2106 = vunpack.c.h.s8.bf16 %v1658
        %v2107 = vunpack.c.h.s8.bf16 %v1659
        %v2108 = vunpack.c.h.s8.bf16 %v1660
        %v2109 = vunpack.c.h.s8.bf16 %v1661
        %v2110 = vunpack.c.h.s8.bf16 %v1662
        %v2111 = vunpack.c.h.s8.bf16 %v1663
        %v2112 = vunpack.c.h.s8.bf16 %v1664
        %v2113 = vunpack.c.l.s8.bf16 %v1665
        %v2114 = vunpack.c.l.s8.bf16 %v1666
        %v2115 = vunpack.c.l.s8.bf16 %v1667
        %v2116 = vunpack.c.l.s8.bf16 %v1668
        %v2117 = vunpack.c.l.s8.bf16 %v1669
        %v2118 = vunpack.c.l.s8.bf16 %v1670
        %v2119 = vunpack.c.l.s8.bf16 %v1671
        %v2120 = vunpack.c.l.s8.bf16 %v1672
        %v2121 = vunpack.c.h.s8.bf16 %v1665
        %v2122 = vunpack.c.h.s8.bf16 %v1666
        %v2123 = vunpack.c.h.s8.bf16 %v1667
        %v2124 = vunpack.c.h.s8.bf16 %v1668
        %v2125 = vunpack.c.h.s8.bf16 %v1669
        %v2126 = vunpack.c.h.s8.bf16 %v1670
        %v2127 = vunpack.c.h.s8.bf16 %v1671
        %v2128 = vunpack.c.h.s8.bf16 %v1672
        %v2129 = vunpack.c.l.s8.bf16 %v1673
        %v2130 = vunpack.c.l.s8.bf16 %v1674
        %v2131 = vunpack.c.l.s8.bf16 %v1675
        %v2132 = vunpack.c.l.s8.bf16 %v1676
        %v2133 = vunpack.c.l.s8.bf16 %v1677
        %v2134 = vunpack.c.l.s8.bf16 %v1678
        %v2135 = vunpack.c.l.s8.bf16 %v1679
        %v2136 = vunpack.c.l.s8.bf16 %v1680
        %v2137 = vunpack.c.h.s8.bf16 %v1673
        %v2138 = vunpack.c.h.s8.bf16 %v1674
        %v2139 = vunpack.c.h.s8.bf16 %v1675
        %v2140 = vunpack.c.h.s8.bf16 %v1676
        %v2141 = vunpack.c.h.s8.bf16 %v1677
        %v2142 = vunpack.c.h.s8.bf16 %v1678
        %v2143 = vunpack.c.h.s8.bf16 %v1679
        %v2144 = vunpack.c.h.s8.bf16 %v1680
        %v2145 = vunpack.c.l.s8.bf16 %v1681
        %v2146 = vunpack.c.l.s8.bf16 %v1682
        %v2147 = vunpack.c.l.s8.bf16 %v1683
        %v2148 = vunpack.c.l.s8.bf16 %v1684
        %v2149 = vunpack.c.l.s8.bf16 %v1685
        %v2150 = vunpack.c.l.s8.bf16 %v1686
        %v2151 = vunpack.c.l.s8.bf16 %v1687
        %v2152 = vunpack.c.l.s8.bf16 %v1688
        %v2153 = vunpack.c.h.s8.bf16 %v1681
        %v2154 = vunpack.c.h.s8.bf16 %v1682
        %v2155 = vunpack.c.h.s8.bf16 %v1683
        %v2156 = vunpack.c.h.s8.bf16 %v1684
        %v2157 = vunpack.c.h.s8.bf16 %v1685
        %v2158 = vunpack.c.h.s8.bf16 %v1686
        %v2159 = vunpack.c.h.s8.bf16 %v1687
        %v2160 = vunpack.c.h.s8.bf16 %v1688
        %v2161 = vunpack.c.l.s8.bf16 %v1689
        %v2162 = vunpack.c.l.s8.bf16 %v1690
        %v2163 = vunpack.c.l.s8.bf16 %v1691
        %v2164 = vunpack.c.l.s8.bf16 %v1692
        %v2165 = vunpack.c.l.s8.bf16 %v1693
        %v2166 = vunpack.c.l.s8.bf16 %v1694
        %v2167 = vunpack.c.l.s8.bf16 %v1695
        %v2168 = vunpack.c.l.s8.bf16 %v1696
        %v2169 = vunpack.c.h.s8.bf16 %v1689
        %v2170 = vunpack.c.h.s8.bf16 %v1690
        %v2171 = vunpack.c.h.s8.bf16 %v1691
        %v2172 = vunpack.c.h.s8.bf16 %v1692
        %v2173 = vunpack.c.h.s8.bf16 %v1693
        %v2174 = vunpack.c.h.s8.bf16 %v1694
        %v2175 = vunpack.c.h.s8.bf16 %v1695
        %v2176 = vunpack.c.h.s8.bf16 %v1696
        %v2177 = vunpack.c.l.s8.bf16 %v1697
        %v2178 = vunpack.c.l.s8.bf16 %v1698
        %v2179 = vunpack.c.l.s8.bf16 %v1699
        %v2180 = vunpack.c.l.s8.bf16 %v1700
        %v2181 = vunpack.c.l.s8.bf16 %v1701
        %v2182 = vunpack.c.l.s8.bf16 %v1702
        %v2183 = vunpack.c.l.s8.bf16 %v1703
        %v2184 = vunpack.c.l.s8.bf16 %v1704
        %v2185 = vunpack.c.h.s8.bf16 %v1697
        %v2186 = vunpack.c.h.s8.bf16 %v1698
        %v2187 = vunpack.c.h.s8.bf16 %v1699
        %v2188 = vunpack.c.h.s8.bf16 %v1700
        %v2189 = vunpack.c.h.s8.bf16 %v1701
        %v2190 = vunpack.c.h.s8.bf16 %v1702
        %v2191 = vunpack.c.h.s8.bf16 %v1703
        %v2192 = vunpack.c.h.s8.bf16 %v1704
        %v2193 = vunpack.c.l.s8.bf16 %v1705
        %v2194 = vunpack.c.l.s8.bf16 %v1706
        %v2195 = vunpack.c.l.s8.bf16 %v1707
        %v2196 = vunpack.c.l.s8.bf16 %v1708
        %v2197 = vunpack.c.l.s8.bf16 %v1709
        %v2198 = vunpack.c.l.s8.bf16 %v1710
        %v2199 = vunpack.c.l.s8.bf16 %v1711
        %v2200 = vunpack.c.l.s8.bf16 %v1712
        %v2201 = vunpack.c.h.s8.bf16 %v1705
        %v2202 = vunpack.c.h.s8.bf16 %v1706
        %v2203 = vunpack.c.h.s8.bf16 %v1707
        %v2204 = vunpack.c.h.s8.bf16 %v1708
        %v2205 = vunpack.c.h.s8.bf16 %v1709
        %v2206 = vunpack.c.h.s8.bf16 %v1710
        %v2207 = vunpack.c.h.s8.bf16 %v1711
        %v2208 = vunpack.c.h.s8.bf16 %v1712
        %v2209 = vunpack.c.l.s8.bf16 %v1713
        %v2210 = vunpack.c.l.s8.bf16 %v1714
        %v2211 = vunpack.c.l.s8.bf16 %v1715
        %v2212 = vunpack.c.l.s8.bf16 %v1716
        %v2213 = vunpack.c.l.s8.bf16 %v1717
        %v2214 = vunpack.c.l.s8.bf16 %v1718
        %v2215 = vunpack.c.l.s8.bf16 %v1719
        %v2216 = vunpack.c.l.s8.bf16 %v1720
        %v2217 = vunpack.c.h.s8.bf16 %v1713
        %v2218 = vunpack.c.h.s8.bf16 %v1714
        %v2219 = vunpack.c.h.s8.bf16 %v1715
        %v2220 = vunpack.c.h.s8.bf16 %v1716
        %v2221 = vunpack.c.h.s8.bf16 %v1717
        %v2222 = vunpack.c.h.s8.bf16 %v1718
        %v2223 = vunpack.c.h.s8.bf16 %v1719
        %v2224 = vunpack.c.h.s8.bf16 %v1720
        %v2225 = vunpack.c.l.s8.bf16 %v1721
        %v2226 = vunpack.c.l.s8.bf16 %v1722
        %v2227 = vunpack.c.l.s8.bf16 %v1723
        %v2228 = vunpack.c.l.s8.bf16 %v1724
        %v2229 = vunpack.c.l.s8.bf16 %v1725
        %v2230 = vunpack.c.l.s8.bf16 %v1726
        %v2231 = vunpack.c.l.s8.bf16 %v1727
        %v2232 = vunpack.c.l.s8.bf16 %v1728
        %v2233 = vunpack.c.h.s8.bf16 %v1721
        %v2234 = vunpack.c.h.s8.bf16 %v1722
        %v2235 = vunpack.c.h.s8.bf16 %v1723
        %v2236 = vunpack.c.h.s8.bf16 %v1724
        %v2237 = vunpack.c.h.s8.bf16 %v1725
        %v2238 = vunpack.c.h.s8.bf16 %v1726
        %v2239 = vunpack.c.h.s8.bf16 %v1727
        %v2240 = vunpack.c.h.s8.bf16 %v1728
        %v2241 = vpack.c.bf16 %v1465, %v1465
        %v2242 = vpack.c.bf16 %v1466, %v1466
        %v2243 = vpack.c.bf16 %v1467, %v1467
        %v2244 = vpack.c.bf16 %v1468, %v1468
        %v2245 = vpack.c.bf16 %v1469, %v1469
        %v2246 = vpack.c.bf16 %v1470, %v1470
        %v2247 = vpack.c.bf16 %v1471, %v1471
        %v2248 = vpack.c.bf16 %v1472, %v1472
        %2249 = vmatprep.subr.bf16.mxu0 %v1730
        %2250 = vmatpush1.bf16.msra.mxu0 %v1729
        %2251 = vmatprep.subr.bf16.mxu0 %v1738
        %2252 = vmatpush1.bf16.msra.mxu0 %v1737
        %2253 = vmatprep.subr.bf16.mxu0 %v1746
        %2254 = vmatpush1.bf16.msra.mxu0 %v1745
        %2255 = vmatprep.subr.bf16.mxu0 %v1754
        %2256 = vmatpush1.bf16.msra.mxu0 %v1753
        %2257 = vmatprep.subr.bf16.mxu0 %v1762
        %2258 = vmatpush1.bf16.msra.mxu0 %v1761
        %2259 = vmatprep.subr.bf16.mxu0 %v1770
        %2260 = vmatpush1.bf16.msra.mxu0 %v1769
        %2261 = vmatprep.subr.bf16.mxu0 %v1778
        %2262 = vmatpush1.bf16.msra.mxu0 %v1777
        %2263 = vmatprep.subr.bf16.mxu0 %v1786
        %2264 = vmatpush1.bf16.msra.mxu0 %v1785
        %2265 = vmatprep.subr.bf16.mxu0 %v1794
        %2266 = vmatpush1.bf16.msra.mxu0 %v1793
        %2267 = vmatprep.subr.bf16.mxu0 %v1802
        %2268 = vmatpush1.bf16.msra.mxu0 %v1801
        %2269 = vmatprep.subr.bf16.mxu0 %v1810
        %2270 = vmatpush1.bf16.msra.mxu0 %v1809
        %2271 = vmatprep.subr.bf16.mxu0 %v1818
        %2272 = vmatpush1.bf16.msra.mxu0 %v1817
        %2273 = vmatprep.subr.bf16.mxu0 %v1826
        %2274 = vmatpush1.bf16.msra.mxu0 %v1825
        %2275 = vmatprep.subr.bf16.mxu0 %v1834
        %2276 = vmatpush1.bf16.msra.mxu0 %v1833
        %2277 = vmatprep.subr.bf16.mxu0 %v1842
        %2278 = vmatpush1.bf16.msra.mxu0 %v1841
        %2279 = vmatprep.subr.bf16.mxu0 %v1850
        %2280 = vmatpush1.bf16.msra.mxu0 %v1849
        %2281 = vmatprep.mubr.bf16.mxu0 %v2242
        %2282 = vmatmul.mubr.bf16.gmra.mrb[0].mxu0 %v2241
        %v2283 = vpop.f32.mrb[0].mxu0
        %v2284 = vadd.f32 0.0, %v2283
        %v2285 = vpop.f32.mrb[0].mxu0
        %v2286 = vadd.f32 0.0, %v2285
        %v2287 = vpop.f32.mrb[0].mxu0
        %v2288 = vpop.f32.mrb[0].mxu0
        %2289 = vdwg.mxu0
        %2290 = vmatprep.subr.bf16.mxu0 %v1858
        %2291 = vmatpush1.bf16.msra.mxu0 %v1857
        %2292 = vmatprep.subr.bf16.mxu0 %v1866
        %2293 = vmatpush1.bf16.msra.mxu0 %v1865
        %2294 = vmatprep.subr.bf16.mxu0 %v1874
        %2295 = vmatpush1.bf16.msra.mxu0 %v1873
        %2296 = vmatprep.subr.bf16.mxu0 %v1882
        %2297 = vmatpush1.bf16.msra.mxu0 %v1881
        %2298 = vmatprep.subr.bf16.mxu0 %v1890
        %2299 = vmatpush1.bf16.msra.mxu0 %v1889
        %2300 = vmatprep.subr.bf16.mxu0 %v1898
        %2301 = vmatpush1.bf16.msra.mxu0 %v1897
        %2302 = vmatprep.subr.bf16.mxu0 %v1906
        %2303 = vmatpush1.bf16.msra.mxu0 %v1905
        %2304 = vmatprep.subr.bf16.mxu0 %v1914
        %2305 = vmatpush1.bf16.msra.mxu0 %v1913
        %2306 = vmatprep.subr.bf16.mxu0 %v1922
        %2307 = vmatpush1.bf16.msra.mxu0 %v1921
        %2308 = vmatprep.subr.bf16.mxu0 %v1930
        %2309 = vmatpush1.bf16.msra.mxu0 %v1929
        %2310 = vmatprep.subr.bf16.mxu0 %v1938
        %2311 = vmatpush1.bf16.msra.mxu0 %v1937
        %2312 = vmatprep.subr.bf16.mxu0 %v1946
        %2313 = vmatpush1.bf16.msra.mxu0 %v1945
        %2314 = vmatprep.subr.bf16.mxu0 %v1954
        %2315 = vmatpush1.bf16.msra.mxu0 %v1953
        %2316 = vmatprep.subr.bf16.mxu0 %v1962
        %2317 = vmatpush1.bf16.msra.mxu0 %v1961
        %2318 = vmatprep.subr.bf16.mxu0 %v1970
        %2319 = vmatpush1.bf16.msra.mxu0 %v1969
        %2320 = vmatprep.subr.bf16.mxu0 %v1978
        %2321 = vmatpush1.bf16.msra.mxu0 %v1977
        %2322 = vmatprep.mubr.bf16.mxu0 %v2244
        %2323 = vmatmul.mubr.bf16.gmra.mrb[0].mxu0 %v2243
        %v2324 = vpop.f32.mrb[0].mxu0
        %v2325 = vadd.f32 %v2284, %v2324
        %v2326 = vpop.f32.mrb[0].mxu0
        %v2327 = vadd.f32 %v2286, %v2326
        %v2328 = vpop.f32.mrb[0].mxu0
        %v2329 = vpop.f32.mrb[0].mxu0
        %2330 = vdwg.mxu0
        %2331 = vmatprep.subr.bf16.mxu0 %v1986
        %2332 = vmatpush1.bf16.msra.mxu0 %v1985
        %2333 = vmatprep.subr.bf16.mxu0 %v1994
        %2334 = vmatpush1.bf16.msra.mxu0 %v1993
        %2335 = vmatprep.subr.bf16.mxu0 %v2002
        %2336 = vmatpush1.bf16.msra.mxu0 %v2001
        %2337 = vmatprep.subr.bf16.mxu0 %v2010
        %2338 = vmatpush1.bf16.msra.mxu0 %v2009
        %2339 = vmatprep.subr.bf16.mxu0 %v2018
        %2340 = vmatpush1.bf16.msra.mxu0 %v2017
        %2341 = vmatprep.subr.bf16.mxu0 %v2026
        %2342 = vmatpush1.bf16.msra.mxu0 %v2025
        %2343 = vmatprep.subr.bf16.mxu0 %v2034
        %2344 = vmatpush1.bf16.msra.mxu0 %v2033
        %2345 = vmatprep.subr.bf16.mxu0 %v2042
        %2346 = vmatpush1.bf16.msra.mxu0 %v2041
        %2347 = vmatprep.subr.bf16.mxu0 %v2050
        %2348 = vmatpush1.bf16.msra.mxu0 %v2049
        %2349 = vmatprep.subr.bf16.mxu0 %v2058
        %2350 = vmatpush1.bf16.msra.mxu0 %v2057
        %2351 = vmatprep.subr.bf16.mxu0 %v2066
        %2352 = vmatpush1.bf16.msra.mxu0 %v2065
        %2353 = vmatprep.subr.bf16.mxu0 %v2074
        %2354 = vmatpush1.bf16.msra.mxu0 %v2073
        %2355 = vmatprep.subr.bf16.mxu0 %v2082
        %2356 = vmatpush1.bf16.msra.mxu0 %v2081
        %2357 = vmatprep.subr.bf16.mxu0 %v2090
        %2358 = vmatpush1.bf16.msra.mxu0 %v2089
        %2359 = vmatprep.subr.bf16.mxu0 %v2098
        %2360 = vmatpush1.bf16.msra.mxu0 %v2097
        %2361 = vmatprep.subr.bf16.mxu0 %v2106
        %2362 = vmatpush1.bf16.msra.mxu0 %v2105
        %2363 = vmatprep.mubr.bf16.mxu0 %v2246
        %2364 = vmatmul.mubr.bf16.gmra.mrb[0].mxu0 %v2245
        %v2365 = vpop.f32.mrb[0].mxu0
        %v2366 = vadd.f32 %v2325, %v2365
        %v2367 = vpop.f32.mrb[0].mxu0
        %v2368 = vadd.f32 %v2327, %v2367
        %v2369 = vpop.f32.mrb[0].mxu0
        %v2370 = vpop.f32.mrb[0].mxu0
        %2371 = vdwg.mxu0
        %2372 = vmatprep.subr.bf16.mxu0 %v2114
        %2373 = vmatpush1.bf16.msra.mxu0 %v2113
        %2374 = vmatprep.subr.bf16.mxu0 %v2122
        %2375 = vmatpush1.bf16.msra.mxu0 %v2121
        %2376 = vmatprep.subr.bf16.mxu0 %v2130
        %2377 = vmatpush1.bf16.msra.mxu0 %v2129
        %2378 = vmatprep.subr.bf16.mxu0 %v2138
        %2379 = vmatpush1.bf16.msra.mxu0 %v2137
        %2380 = vmatprep.subr.bf16.mxu0 %v2146
        %2381 = vmatpush1.bf16.msra.mxu0 %v2145
        %2382 = vmatprep.subr.bf16.mxu0 %v2154
        %2383 = vmatpush1.bf16.msra.mxu0 %v2153
        %2384 = vmatprep.subr.bf16.mxu0 %v2162
        %2385 = vmatpush1.bf16.msra.mxu0 %v2161
        %2386 = vmatprep.subr.bf16.mxu0 %v2170
        %2387 = vmatpush1.bf16.msra.mxu0 %v2169
        %2388 = vmatprep.subr.bf16.mxu0 %v2178
        %2389 = vmatpush1.bf16.msra.mxu0 %v2177
        %2390 = vmatprep.subr.bf16.mxu0 %v2186
        %2391 = vmatpush1.bf16.msra.mxu0 %v2185
        %2392 = vmatprep.subr.bf16.mxu0 %v2194
        %2393 = vmatpush1.bf16.msra.mxu0 %v2193
        %2394 = vmatprep.subr.bf16.mxu0 %v2202
        %2395 = vmatpush1.bf16.msra.mxu0 %v2201
        %2396 = vmatprep.subr.bf16.mxu0 %v2210
        %2397 = vmatpush1.bf16.msra.mxu0 %v2209
        %2398 = vmatprep.subr.bf16.mxu0 %v2218
        %2399 = vmatpush1.bf16.msra.mxu0 %v2217
        %2400 = vmatprep.subr.bf16.mxu0 %v2226
        %2401 = vmatpush1.bf16.msra.mxu0 %v2225
        %2402 = vmatprep.subr.bf16.mxu0 %v2234
        %2403 = vmatpush1.bf16.msra.mxu0 %v2233
        %2404 = vmatprep.mubr.bf16.mxu0 %v2248
        %2405 = vmatmul.mubr.bf16.gmra.mrb[0].mxu0 %v2247
        %v2406 = vpop.f32.mrb[0].mxu0
        %v2407 = vadd.f32 %v2366, %v2406
        %v2408 = vpop.f32.mrb[0].mxu0
        %v2409 = vadd.f32 %v2368, %v2408
        %v2410 = vpop.f32.mrb[0].mxu0
        %v2411 = vpop.f32.mrb[0].mxu0
        %2412 = vdwg.mxu0
        %2413 = vmatprep.subr.bf16.mxu0 %v1732
        %2414 = vmatpush1.bf16.msra.mxu0 %v1731
        %2415 = vmatprep.subr.bf16.mxu0 %v1740
        %2416 = vmatpush1.bf16.msra.mxu0 %v1739
        %2417 = vmatprep.subr.bf16.mxu0 %v1748
        %2418 = vmatpush1.bf16.msra.mxu0 %v1747
        %2419 = vmatprep.subr.bf16.mxu0 %v1756
        %2420 = vmatpush1.bf16.msra.mxu0 %v1755
        %2421 = vmatprep.subr.bf16.mxu0 %v1764
        %2422 = vmatpush1.bf16.msra.mxu0 %v1763
        %2423 = vmatprep.subr.bf16.mxu0 %v1772
        %2424 = vmatpush1.bf16.msra.mxu0 %v1771
        %2425 = vmatprep.subr.bf16.mxu0 %v1780
        %2426 = vmatpush1.bf16.msra.mxu0 %v1779
        %2427 = vmatprep.subr.bf16.mxu0 %v1788
        %2428 = vmatpush1.bf16.msra.mxu0 %v1787
        %2429 = vmatprep.subr.bf16.mxu0 %v1796
        %2430 = vmatpush1.bf16.msra.mxu0 %v1795
        %2431 = vmatprep.subr.bf16.mxu0 %v1804
        %2432 = vmatpush1.bf16.msra.mxu0 %v1803
        %2433 = vmatprep.subr.bf16.mxu0 %v1812
        %2434 = vmatpush1.bf16.msra.mxu0 %v1811
        %2435 = vmatprep.subr.bf16.mxu0 %v1820
        %2436 = vmatpush1.bf16.msra.mxu0 %v1819
        %2437 = vmatprep.subr.bf16.mxu0 %v1828
        %2438 = vmatpush1.bf16.msra.mxu0 %v1827
        %2439 = vmatprep.subr.bf16.mxu0 %v1836
        %2440 = vmatpush1.bf16.msra.mxu0 %v1835
        %2441 = vmatprep.subr.bf16.mxu0 %v1844
        %2442 = vmatpush1.bf16.msra.mxu0 %v1843
        %2443 = vmatprep.subr.bf16.mxu0 %v1852
        %2444 = vmatpush1.bf16.msra.mxu0 %v1851
        %2445 = vmatprep.mubr.bf16.mxu0 %v2242
        %2446 = vmatmul.mubr.bf16.gmra.mrb[0].mxu0 %v2241
        %v2447 = vpop.f32.mrb[0].mxu0
        %v2448 = vadd.f32 0.0, %v2447
        %v2449 = vpop.f32.mrb[0].mxu0
        %v2450 = vadd.f32 0.0, %v2449
        %v2451 = vpop.f32.mrb[0].mxu0
        %v2452 = vpop.f32.mrb[0].mxu0
        %2453 = vdwg.mxu0
        %2454 = vmatprep.subr.bf16.mxu0 %v1860
        %2455 = vmatpush1.bf16.msra.mxu0 %v1859
        %2456 = vmatprep.subr.bf16.mxu0 %v1868
        %2457 = vmatpush1.bf16.msra.mxu0 %v1867
        %2458 = vmatprep.subr.bf16.mxu0 %v1876
        %2459 = vmatpush1.bf16.msra.mxu0 %v1875
        %2460 = vmatprep.subr.bf16.mxu0 %v1884
        %2461 = vmatpush1.bf16.msra.mxu0 %v1883
        %2462 = vmatprep.subr.bf16.mxu0 %v1892
        %2463 = vmatpush1.bf16.msra.mxu0 %v1891
        %2464 = vmatprep.subr.bf16.mxu0 %v1900
        %2465 = vmatpush1.bf16.msra.mxu0 %v1899
        %2466 = vmatprep.subr.bf16.mxu0 %v1908
        %2467 = vmatpush1.bf16.msra.mxu0 %v1907
        %2468 = vmatprep.subr.bf16.mxu0 %v1916
        %2469 = vmatpush1.bf16.msra.mxu0 %v1915
        %2470 = vmatprep.subr.bf16.mxu0 %v1924
        %2471 = vmatpush1.bf16.msra.mxu0 %v1923
        %2472 = vmatprep.subr.bf16.mxu0 %v1932
        %2473 = vmatpush1.bf16.msra.mxu0 %v1931
        %2474 = vmatprep.subr.bf16.mxu0 %v1940
        %2475 = vmatpush1.bf16.msra.mxu0 %v1939
        %2476 = vmatprep.subr.bf16.mxu0 %v1948
        %2477 = vmatpush1.bf16.msra.mxu0 %v1947
        %2478 = vmatprep.subr.bf16.mxu0 %v1956
        %2479 = vmatpush1.bf16.msra.mxu0 %v1955
        %2480 = vmatprep.subr.bf16.mxu0 %v1964
        %2481 = vmatpush1.bf16.msra.mxu0 %v1963
        %2482 = vmatprep.subr.bf16.mxu0 %v1972
        %2483 = vmatpush1.bf16.msra.mxu0 %v1971
        %2484 = vmatprep.subr.bf16.mxu0 %v1980
        %2485 = vmatpush1.bf16.msra.mxu0 %v1979
        %2486 = vmatprep.mubr.bf16.mxu0 %v2244
        %2487 = vmatmul.mubr.bf16.gmra.mrb[0].mxu0 %v2243
        %v2488 = vpop.f32.mrb[0].mxu0
        %v2489 = vadd.f32 %v2448, %v2488
        %v2490 = vpop.f32.mrb[0].mxu0
        %v2491 = vadd.f32 %v2450, %v2490
        %v2492 = vpop.f32.mrb[0].mxu0
        %v2493 = vpop.f32.mrb[0].mxu0
        %2494 = vdwg.mxu0
        %2495 = vmatprep.subr.bf16.mxu0 %v1988
        %2496 = vmatpush1.bf16.msra.mxu0 %v1987
        %2497 = vmatprep.subr.bf16.mxu0 %v1996
        %2498 = vmatpush1.bf16.msra.mxu0 %v1995
        %2499 = vmatprep.subr.bf16.mxu0 %v2004
        %2500 = vmatpush1.bf16.msra.mxu0 %v2003
        %2501 = vmatprep.subr.bf16.mxu0 %v2012
        %2502 = vmatpush1.bf16.msra.mxu0 %v2011
        %2503 = vmatprep.subr.bf16.mxu0 %v2020
        %2504 = vmatpush1.bf16.msra.mxu0 %v2019
        %2505 = vmatprep.subr.bf16.mxu0 %v2028
        %2506 = vmatpush1.bf16.msra.mxu0 %v2027
        %2507 = vmatprep.subr.bf16.mxu0 %v2036
        %2508 = vmatpush1.bf16.msra.mxu0 %v2035
        %2509 = vmatprep.subr.bf16.mxu0 %v2044
        %2510 = vmatpush1.bf16.msra.mxu0 %v2043
        %2511 = vmatprep.subr.bf16.mxu0 %v2052
        %2512 = vmatpush1.bf16.msra.mxu0 %v2051
        %2513 = vmatprep.subr.bf16.mxu0 %v2060
        %2514 = vmatpush1.bf16.msra.mxu0 %v2059
        %2515 = vmatprep.subr.bf16.mxu0 %v2068
        %2516 = vmatpush1.bf16.msra.mxu0 %v2067
        %2517 = vmatprep.subr.bf16.mxu0 %v2076
        %2518 = vmatpush1.bf16.msra.mxu0 %v2075
        %2519 = vmatprep.subr.bf16.mxu0 %v2084
        %2520 = vmatpush1.bf16.msra.mxu0 %v2083
        %2521 = vmatprep.subr.bf16.mxu0 %v2092
        %2522 = vmatpush1.bf16.msra.mxu0 %v2091
        %2523 = vmatprep.subr.bf16.mxu0 %v2100
        %2524 = vmatpush1.bf16.msra.mxu0 %v2099
        %2525 = vmatprep.subr.bf16.mxu0 %v2108
        %2526 = vmatpush1.bf16.msra.mxu0 %v2107
        %2527 = vmatprep.mubr.bf16.mxu0 %v2246
        %2528 = vmatmul.mubr.bf16.gmra.mrb[0].mxu0 %v2245
        %v2529 = vpop.f32.mrb[0].mxu0
        %v2530 = vadd.f32 %v2489, %v2529
        %v2531 = vpop.f32.mrb[0].mxu0
        %v2532 = vadd.f32 %v2491, %v2531
        %v2533 = vpop.f32.mrb[0].mxu0
        %v2534 = vpop.f32.mrb[0].mxu0
        %2535 = vdwg.mxu0
        %2536 = vmatprep.subr.bf16.mxu0 %v2116
        %2537 = vmatpush1.bf16.msra.mxu0 %v2115
        %2538 = vmatprep.subr.bf16.mxu0 %v2124
        %2539 = vmatpush1.bf16.msra.mxu0 %v2123
        %2540 = vmatprep.subr.bf16.mxu0 %v2132
        %2541 = vmatpush1.bf16.msra.mxu0 %v2131
        %2542 = vmatprep.subr.bf16.mxu0 %v2140
        %2543 = vmatpush1.bf16.msra.mxu0 %v2139
        %2544 = vmatprep.subr.bf16.mxu0 %v2148
        %2545 = vmatpush1.bf16.msra.mxu0 %v2147
        %2546 = vmatprep.subr.bf16.mxu0 %v2156
        %2547 = vmatpush1.bf16.msra.mxu0 %v2155
        %2548 = vmatprep.subr.bf16.mxu0 %v2164
        %2549 = vmatpush1.bf16.msra.mxu0 %v2163
        %2550 = vmatprep.subr.bf16.mxu0 %v2172
        %2551 = vmatpush1.bf16.msra.mxu0 %v2171
        %2552 = vmatprep.subr.bf16.mxu0 %v2180
        %2553 = vmatpush1.bf16.msra.mxu0 %v2179
        %2554 = vmatprep.subr.bf16.mxu0 %v2188
        %2555 = vmatpush1.bf16.msra.mxu0 %v2187
        %2556 = vmatprep.subr.bf16.mxu0 %v2196
        %2557 = vmatpush1.bf16.msra.mxu0 %v2195
        %2558 = vmatprep.subr.bf16.mxu0 %v2204
        %2559 = vmatpush1.bf16.msra.mxu0 %v2203
        %2560 = vmatprep.subr.bf16.mxu0 %v2212
        %2561 = vmatpush1.bf16.msra.mxu0 %v2211
        %2562 = vmatprep.subr.bf16.mxu0 %v2220
        %2563 = vmatpush1.bf16.msra.mxu0 %v2219
        %2564 = vmatprep.subr.bf16.mxu0 %v2228
        %2565 = vmatpush1.bf16.msra.mxu0 %v2227
        %2566 = vmatprep.subr.bf16.mxu0 %v2236
        %2567 = vmatpush1.bf16.msra.mxu0 %v2235
        %2568 = vmatprep.mubr.bf16.mxu0 %v2248
        %2569 = vmatmul.mubr.bf16.gmra.mrb[0].mxu0 %v2247
        %v2570 = vpop.f32.mrb[0].mxu0
        %v2571 = vadd.f32 %v2530, %v2570
        %v2572 = vpop.f32.mrb[0].mxu0
        %v2573 = vadd.f32 %v2532, %v2572
        %v2574 = vpop.f32.mrb[0].mxu0
        %v2575 = vpop.f32.mrb[0].mxu0
        %2576 = vdwg.mxu0
        %2577 = vmatprep.subr.bf16.mxu0 %v1734
        %2578 = vmatpush1.bf16.msra.mxu0 %v1733
        %2579 = vmatprep.subr.bf16.mxu0 %v1742
        %2580 = vmatpush1.bf16.msra.mxu0 %v1741
        %2581 = vmatprep.subr.bf16.mxu0 %v1750
        %2582 = vmatpush1.bf16.msra.mxu0 %v1749
        %2583 = vmatprep.subr.bf16.mxu0 %v1758
        %2584 = vmatpush1.bf16.msra.mxu0 %v1757
        %2585 = vmatprep.subr.bf16.mxu0 %v1766
        %2586 = vmatpush1.bf16.msra.mxu0 %v1765
        %2587 = vmatprep.subr.bf16.mxu0 %v1774
        %2588 = vmatpush1.bf16.msra.mxu0 %v1773
        %2589 = vmatprep.subr.bf16.mxu0 %v1782
        %2590 = vmatpush1.bf16.msra.mxu0 %v1781
        %2591 = vmatprep.subr.bf16.mxu0 %v1790
        %2592 = vmatpush1.bf16.msra.mxu0 %v1789
        %2593 = vmatprep.subr.bf16.mxu0 %v1798
        %2594 = vmatpush1.bf16.msra.mxu0 %v1797
        %2595 = vmatprep.subr.bf16.mxu0 %v1806
        %2596 = vmatpush1.bf16.msra.mxu0 %v1805
        %2597 = vmatprep.subr.bf16.mxu0 %v1814
        %2598 = vmatpush1.bf16.msra.mxu0 %v1813
        %2599 = vmatprep.subr.bf16.mxu0 %v1822
        %2600 = vmatpush1.bf16.msra.mxu0 %v1821
        %2601 = vmatprep.subr.bf16.mxu0 %v1830
        %2602 = vmatpush1.bf16.msra.mxu0 %v1829
        %2603 = vmatprep.subr.bf16.mxu0 %v1838
        %2604 = vmatpush1.bf16.msra.mxu0 %v1837
        %2605 = vmatprep.subr.bf16.mxu0 %v1846
        %2606 = vmatpush1.bf16.msra.mxu0 %v1845
        %2607 = vmatprep.subr.bf16.mxu0 %v1854
        %2608 = vmatpush1.bf16.msra.mxu0 %v1853
        %2609 = vmatprep.mubr.bf16.mxu0 %v2242
        %2610 = vmatmul.mubr.bf16.gmra.mrb[0].mxu0 %v2241
        %v2611 = vpop.f32.mrb[0].mxu0
        %v2612 = vadd.f32 0.0, %v2611
        %v2613 = vpop.f32.mrb[0].mxu0
        %v2614 = vadd.f32 0.0, %v2613
        %v2615 = vpop.f32.mrb[0].mxu0
        %v2616 = vpop.f32.mrb[0].mxu0
        %2617 = vdwg.mxu0
        %2618 = vmatprep.subr.bf16.mxu0 %v1862
        %2619 = vmatpush1.bf16.msra.mxu0 %v1861
        %2620 = vmatprep.subr.bf16.mxu0 %v1870
        %2621 = vmatpush1.bf16.msra.mxu0 %v1869
        %2622 = vmatprep.subr.bf16.mxu0 %v1878
        %2623 = vmatpush1.bf16.msra.mxu0 %v1877
        %2624 = vmatprep.subr.bf16.mxu0 %v1886
        %2625 = vmatpush1.bf16.msra.mxu0 %v1885
        %2626 = vmatprep.subr.bf16.mxu0 %v1894
        %2627 = vmatpush1.bf16.msra.mxu0 %v1893
        %2628 = vmatprep.subr.bf16.mxu0 %v1902
        %2629 = vmatpush1.bf16.msra.mxu0 %v1901
        %2630 = vmatprep.subr.bf16.mxu0 %v1910
        %2631 = vmatpush1.bf16.msra.mxu0 %v1909
        %2632 = vmatprep.subr.bf16.mxu0 %v1918
        %2633 = vmatpush1.bf16.msra.mxu0 %v1917
        %2634 = vmatprep.subr.bf16.mxu0 %v1926
        %2635 = vmatpush1.bf16.msra.mxu0 %v1925
        %2636 = vmatprep.subr.bf16.mxu0 %v1934
        %2637 = vmatpush1.bf16.msra.mxu0 %v1933
        %2638 = vmatprep.subr.bf16.mxu0 %v1942
        %2639 = vmatpush1.bf16.msra.mxu0 %v1941
        %2640 = vmatprep.subr.bf16.mxu0 %v1950
        %2641 = vmatpush1.bf16.msra.mxu0 %v1949
        %2642 = vmatprep.subr.bf16.mxu0 %v1958
        %2643 = vmatpush1.bf16.msra.mxu0 %v1957
        %2644 = vmatprep.subr.bf16.mxu0 %v1966
        %2645 = vmatpush1.bf16.msra.mxu0 %v1965
        %2646 = vmatprep.subr.bf16.mxu0 %v1974
        %2647 = vmatpush1.bf16.msra.mxu0 %v1973
        %2648 = vmatprep.subr.bf16.mxu0 %v1982
        %2649 = vmatpush1.bf16.msra.mxu0 %v1981
        %2650 = vmatprep.mubr.bf16.mxu0 %v2244
        %2651 = vmatmul.mubr.bf16.gmra.mrb[0].mxu0 %v2243
        %v2652 = vpop.f32.mrb[0].mxu0
        %v2653 = vadd.f32 %v2612, %v2652
        %v2654 = vpop.f32.mrb[0].mxu0
        %v2655 = vadd.f32 %v2614, %v2654
        %v2656 = vpop.f32.mrb[0].mxu0
        %v2657 = vpop.f32.mrb[0].mxu0
        %2658 = vdwg.mxu0
        %2659 = vmatprep.subr.bf16.mxu0 %v1990
        %2660 = vmatpush1.bf16.msra.mxu0 %v1989
        %2661 = vmatprep.subr.bf16.mxu0 %v1998
        %2662 = vmatpush1.bf16.msra.mxu0 %v1997
        %2663 = vmatprep.subr.bf16.mxu0 %v2006
        %2664 = vmatpush1.bf16.msra.mxu0 %v2005
        %2665 = vmatprep.subr.bf16.mxu0 %v2014
        %2666 = vmatpush1.bf16.msra.mxu0 %v2013
        %2667 = vmatprep.subr.bf16.mxu0 %v2022
        %2668 = vmatpush1.bf16.msra.mxu0 %v2021
        %2669 = vmatprep.subr.bf16.mxu0 %v2030
        %2670 = vmatpush1.bf16.msra.mxu0 %v2029
        %2671 = vmatprep.subr.bf16.mxu0 %v2038
        %2672 = vmatpush1.bf16.msra.mxu0 %v2037
        %2673 = vmatprep.subr.bf16.mxu0 %v2046
        %2674 = vmatpush1.bf16.msra.mxu0 %v2045
        %2675 = vmatprep.subr.bf16.mxu0 %v2054
        %2676 = vmatpush1.bf16.msra.mxu0 %v2053
        %2677 = vmatprep.subr.bf16.mxu0 %v2062
        %2678 = vmatpush1.bf16.msra.mxu0 %v2061
        %2679 = vmatprep.subr.bf16.mxu0 %v2070
        %2680 = vmatpush1.bf16.msra.mxu0 %v2069
        %2681 = vmatprep.subr.bf16.mxu0 %v2078
        %2682 = vmatpush1.bf16.msra.mxu0 %v2077
        %2683 = vmatprep.subr.bf16.mxu0 %v2086
        %2684 = vmatpush1.bf16.msra.mxu0 %v2085
        %2685 = vmatprep.subr.bf16.mxu0 %v2094
        %2686 = vmatpush1.bf16.msra.mxu0 %v2093
        %2687 = vmatprep.subr.bf16.mxu0 %v2102
        %2688 = vmatpush1.bf16.msra.mxu0 %v2101
        %2689 = vmatprep.subr.bf16.mxu0 %v2110
        %2690 = vmatpush1.bf16.msra.mxu0 %v2109
        %2691 = vmatprep.mubr.bf16.mxu0 %v2246
        %2692 = vmatmul.mubr.bf16.gmra.mrb[0].mxu0 %v2245
        %v2693 = vpop.f32.mrb[0].mxu0
        %v2694 = vadd.f32 %v2653, %v2693
        %v2695 = vpop.f32.mrb[0].mxu0
        %v2696 = vadd.f32 %v2655, %v2695
        %v2697 = vpop.f32.mrb[0].mxu0
        %v2698 = vpop.f32.mrb[0].mxu0
        %2699 = vdwg.mxu0
        %2700 = vmatprep.subr.bf16.mxu0 %v2118
        %2701 = vmatpush1.bf16.msra.mxu0 %v2117
        %2702 = vmatprep.subr.bf16.mxu0 %v2126
        %2703 = vmatpush1.bf16.msra.mxu0 %v2125
        %2704 = vmatprep.subr.bf16.mxu0 %v2134
        %2705 = vmatpush1.bf16.msra.mxu0 %v2133
        %2706 = vmatprep.subr.bf16.mxu0 %v2142
        %2707 = vmatpush1.bf16.msra.mxu0 %v2141
        %2708 = vmatprep.subr.bf16.mxu0 %v2150
        %2709 = vmatpush1.bf16.msra.mxu0 %v2149
        %2710 = vmatprep.subr.bf16.mxu0 %v2158
        %2711 = vmatpush1.bf16.msra.mxu0 %v2157
        %2712 = vmatprep.subr.bf16.mxu0 %v2166
        %2713 = vmatpush1.bf16.msra.mxu0 %v2165
        %2714 = vmatprep.subr.bf16.mxu0 %v2174
        %2715 = vmatpush1.bf16.msra.mxu0 %v2173
        %2716 = vmatprep.subr.bf16.mxu0 %v2182
        %2717 = vmatpush1.bf16.msra.mxu0 %v2181
        %2718 = vmatprep.subr.bf16.mxu0 %v2190
        %2719 = vmatpush1.bf16.msra.mxu0 %v2189
        %2720 = vmatprep.subr.bf16.mxu0 %v2198
        %2721 = vmatpush1.bf16.msra.mxu0 %v2197
        %2722 = vmatprep.subr.bf16.mxu0 %v2206
        %2723 = vmatpush1.bf16.msra.mxu0 %v2205
        %2724 = vmatprep.subr.bf16.mxu0 %v2214
        %2725 = vmatpush1.bf16.msra.mxu0 %v2213
        %2726 = vmatprep.subr.bf16.mxu0 %v2222
        %2727 = vmatpush1.bf16.msra.mxu0 %v2221
        %2728 = vmatprep.subr.bf16.mxu0 %v2230
        %2729 = vmatpush1.bf16.msra.mxu0 %v2229
        %2730 = vmatprep.subr.bf16.mxu0 %v2238
        %2731 = vmatpush1.bf16.msra.mxu0 %v2237
        %2732 = vmatprep.mubr.bf16.mxu0 %v2248
        %2733 = vmatmul.mubr.bf16.gmra.mrb[0].mxu0 %v2247
        %v2734 = vpop.f32.mrb[0].mxu0
        %v2735 = vadd.f32 %v2694, %v2734
        %v2736 = vpop.f32.mrb[0].mxu0
        %v2737 = vadd.f32 %v2696, %v2736
        %v2738 = vpop.f32.mrb[0].mxu0
        %v2739 = vpop.f32.mrb[0].mxu0
        %2740 = vdwg.mxu0
        %2741 = vmatprep.subr.bf16.mxu0 %v1736
        %2742 = vmatpush1.bf16.msra.mxu0 %v1735
        %2743 = vmatprep.subr.bf16.mxu0 %v1744
        %2744 = vmatpush1.bf16.msra.mxu0 %v1743
        %2745 = vmatprep.subr.bf16.mxu0 %v1752
        %2746 = vmatpush1.bf16.msra.mxu0 %v1751
        %2747 = vmatprep.subr.bf16.mxu0 %v1760
        %2748 = vmatpush1.bf16.msra.mxu0 %v1759
        %2749 = vmatprep.subr.bf16.mxu0 %v1768
        %2750 = vmatpush1.bf16.msra.mxu0 %v1767
        %2751 = vmatprep.subr.bf16.mxu0 %v1776
        %2752 = vmatpush1.bf16.msra.mxu0 %v1775
        %2753 = vmatprep.subr.bf16.mxu0 %v1784
        %2754 = vmatpush1.bf16.msra.mxu0 %v1783
        %2755 = vmatprep.subr.bf16.mxu0 %v1792
        %2756 = vmatpush1.bf16.msra.mxu0 %v1791
        %2757 = vmatprep.subr.bf16.mxu0 %v1800
        %2758 = vmatpush1.bf16.msra.mxu0 %v1799
        %2759 = vmatprep.subr.bf16.mxu0 %v1808
        %2760 = vmatpush1.bf16.msra.mxu0 %v1807
        %2761 = vmatprep.subr.bf16.mxu0 %v1816
        %2762 = vmatpush1.bf16.msra.mxu0 %v1815
        %2763 = vmatprep.subr.bf16.mxu0 %v1824
        %2764 = vmatpush1.bf16.msra.mxu0 %v1823
        %2765 = vmatprep.subr.bf16.mxu0 %v1832
        %2766 = vmatpush1.bf16.msra.mxu0 %v1831
        %2767 = vmatprep.subr.bf16.mxu0 %v1840
        %2768 = vmatpush1.bf16.msra.mxu0 %v1839
        %2769 = vmatprep.subr.bf16.mxu0 %v1848
        %2770 = vmatpush1.bf16.msra.mxu0 %v1847
        %2771 = vmatprep.subr.bf16.mxu0 %v1856
        %2772 = vmatpush1.bf16.msra.mxu0 %v1855
        %2773 = vmatprep.mubr.bf16.mxu0 %v2242
        %2774 = vmatmul.mubr.bf16.gmra.mrb[0].mxu0 %v2241
        %v2775 = vpop.f32.mrb[0].mxu0
        %v2776 = vadd.f32 0.0, %v2775
        %v2777 = vpop.f32.mrb[0].mxu0
        %v2778 = vadd.f32 0.0, %v2777
        %v2779 = vpop.f32.mrb[0].mxu0
        %v2780 = vpop.f32.mrb[0].mxu0
        %2781 = vdwg.mxu0
        %2782 = vmatprep.subr.bf16.mxu0 %v1864
        %2783 = vmatpush1.bf16.msra.mxu0 %v1863
        %2784 = vmatprep.subr.bf16.mxu0 %v1872
        %2785 = vmatpush1.bf16.msra.mxu0 %v1871
        %2786 = vmatprep.subr.bf16.mxu0 %v1880
        %2787 = vmatpush1.bf16.msra.mxu0 %v1879
        %2788 = vmatprep.subr.bf16.mxu0 %v1888
        %2789 = vmatpush1.bf16.msra.mxu0 %v1887
        %2790 = vmatprep.subr.bf16.mxu0 %v1896
        %2791 = vmatpush1.bf16.msra.mxu0 %v1895
        %2792 = vmatprep.subr.bf16.mxu0 %v1904
        %2793 = vmatpush1.bf16.msra.mxu0 %v1903
        %2794 = vmatprep.subr.bf16.mxu0 %v1912
        %2795 = vmatpush1.bf16.msra.mxu0 %v1911
        %2796 = vmatprep.subr.bf16.mxu0 %v1920
        %2797 = vmatpush1.bf16.msra.mxu0 %v1919
        %2798 = vmatprep.subr.bf16.mxu0 %v1928
        %2799 = vmatpush1.bf16.msra.mxu0 %v1927
        %2800 = vmatprep.subr.bf16.mxu0 %v1936
        %2801 = vmatpush1.bf16.msra.mxu0 %v1935
        %2802 = vmatprep.subr.bf16.mxu0 %v1944
        %2803 = vmatpush1.bf16.msra.mxu0 %v1943
        %2804 = vmatprep.subr.bf16.mxu0 %v1952
        %2805 = vmatpush1.bf16.msra.mxu0 %v1951
        %2806 = vmatprep.subr.bf16.mxu0 %v1960
        %2807 = vmatpush1.bf16.msra.mxu0 %v1959
        %2808 = vmatprep.subr.bf16.mxu0 %v1968
        %2809 = vmatpush1.bf16.msra.mxu0 %v1967
        %2810 = vmatprep.subr.bf16.mxu0 %v1976
        %2811 = vmatpush1.bf16.msra.mxu0 %v1975
        %2812 = vmatprep.subr.bf16.mxu0 %v1984
        %2813 = vmatpush1.bf16.msra.mxu0 %v1983
        %2814 = vmatprep.mubr.bf16.mxu0 %v2244
        %2815 = vmatmul.mubr.bf16.gmra.mrb[0].mxu0 %v2243
        %v2816 = vpop.f32.mrb[0].mxu0
        %v2817 = vadd.f32 %v2776, %v2816
        %v2818 = vpop.f32.mrb[0].mxu0
        %v2819 = vadd.f32 %v2778, %v2818
        %v2820 = vpop.f32.mrb[0].mxu0
        %v2821 = vpop.f32.mrb[0].mxu0
        %2822 = vdwg.mxu0
        %2823 = vmatprep.subr.bf16.mxu0 %v1992
        %2824 = vmatpush1.bf16.msra.mxu0 %v1991
        %2825 = vmatprep.subr.bf16.mxu0 %v2000
        %2826 = vmatpush1.bf16.msra.mxu0 %v1999
        %2827 = vmatprep.subr.bf16.mxu0 %v2008
        %2828 = vmatpush1.bf16.msra.mxu0 %v2007
        %2829 = vmatprep.subr.bf16.mxu0 %v2016
        %2830 = vmatpush1.bf16.msra.mxu0 %v2015
        %2831 = vmatprep.subr.bf16.mxu0 %v2024
        %2832 = vmatpush1.bf16.msra.mxu0 %v2023
        %2833 = vmatprep.subr.bf16.mxu0 %v2032
        %2834 = vmatpush1.bf16.msra.mxu0 %v2031
        %2835 = vmatprep.subr.bf16.mxu0 %v2040
        %2836 = vmatpush1.bf16.msra.mxu0 %v2039
        %2837 = vmatprep.subr.bf16.mxu0 %v2048
        %2838 = vmatpush1.bf16.msra.mxu0 %v2047
        %2839 = vmatprep.subr.bf16.mxu0 %v2056
        %2840 = vmatpush1.bf16.msra.mxu0 %v2055
        %2841 = vmatprep.subr.bf16.mxu0 %v2064
        %2842 = vmatpush1.bf16.msra.mxu0 %v2063
        %2843 = vmatprep.subr.bf16.mxu0 %v2072
        %2844 = vmatpush1.bf16.msra.mxu0 %v2071
        %2845 = vmatprep.subr.bf16.mxu0 %v2080
        %2846 = vmatpush1.bf16.msra.mxu0 %v2079
        %2847 = vmatprep.subr.bf16.mxu0 %v2088
        %2848 = vmatpush1.bf16.msra.mxu0 %v2087
        %2849 = vmatprep.subr.bf16.mxu0 %v2096
        %2850 = vmatpush1.bf16.msra.mxu0 %v2095
        %2851 = vmatprep.subr.bf16.mxu0 %v2104
        %2852 = vmatpush1.bf16.msra.mxu0 %v2103
        %2853 = vmatprep.subr.bf16.mxu0 %v2112
        %2854 = vmatpush1.bf16.msra.mxu0 %v2111
        %2855 = vmatprep.mubr.bf16.mxu0 %v2246
        %2856 = vmatmul.mubr.bf16.gmra.mrb[0].mxu0 %v2245
        %v2857 = vpop.f32.mrb[0].mxu0
        %v2858 = vadd.f32 %v2817, %v2857
        %v2859 = vpop.f32.mrb[0].mxu0
        %v2860 = vadd.f32 %v2819, %v2859
        %v2861 = vpop.f32.mrb[0].mxu0
        %v2862 = vpop.f32.mrb[0].mxu0
        %2863 = vdwg.mxu0
        %2864 = vmatprep.subr.bf16.mxu0 %v2120
        %2865 = vmatpush1.bf16.msra.mxu0 %v2119
        %2866 = vmatprep.subr.bf16.mxu0 %v2128
        %2867 = vmatpush1.bf16.msra.mxu0 %v2127
        %2868 = vmatprep.subr.bf16.mxu0 %v2136
        %2869 = vmatpush1.bf16.msra.mxu0 %v2135
        %2870 = vmatprep.subr.bf16.mxu0 %v2144
        %2871 = vmatpush1.bf16.msra.mxu0 %v2143
        %2872 = vmatprep.subr.bf16.mxu0 %v2152
        %2873 = vmatpush1.bf16.msra.mxu0 %v2151
        %2874 = vmatprep.subr.bf16.mxu0 %v2160
        %2875 = vmatpush1.bf16.msra.mxu0 %v2159
        %2876 = vmatprep.subr.bf16.mxu0 %v2168
        %2877 = vmatpush1.bf16.msra.mxu0 %v2167
        %2878 = vmatprep.subr.bf16.mxu0 %v2176
        %2879 = vmatpush1.bf16.msra.mxu0 %v2175
        %2880 = vmatprep.subr.bf16.mxu0 %v2184
        %2881 = vmatpush1.bf16.msra.mxu0 %v2183
        %2882 = vmatprep.subr.bf16.mxu0 %v2192
        %2883 = vmatpush1.bf16.msra.mxu0 %v2191
        %2884 = vmatprep.subr.bf16.mxu0 %v2200
        %2885 = vmatpush1.bf16.msra.mxu0 %v2199
        %2886 = vmatprep.subr.bf16.mxu0 %v2208
        %2887 = vmatpush1.bf16.msra.mxu0 %v2207
        %2888 = vmatprep.subr.bf16.mxu0 %v2216
        %2889 = vmatpush1.bf16.msra.mxu0 %v2215
        %2890 = vmatprep.subr.bf16.mxu0 %v2224
        %2891 = vmatpush1.bf16.msra.mxu0 %v2223
        %2892 = vmatprep.subr.bf16.mxu0 %v2232
        %2893 = vmatpush1.bf16.msra.mxu0 %v2231
        %2894 = vmatprep.subr.bf16.mxu0 %v2240
        %2895 = vmatpush1.bf16.msra.mxu0 %v2239
        %2896 = vmatprep.mubr.bf16.mxu0 %v2248
        %2897 = vmatmul.mubr.bf16.gmra.mrb[0].mxu0 %v2247
        %v2898 = vpop.f32.mrb[0].mxu0
        %v2899 = vadd.f32 %v2858, %v2898
        %v2900 = vpop.f32.mrb[0].mxu0
        %v2901 = vadd.f32 %v2860, %v2900
        %v2902 = vpop.f32.mrb[0].mxu0
        %v2903 = vpop.f32.mrb[0].mxu0
        %2904 = vdwg.mxu0
        %v2905 = vld [vmem:[%s729] sm:$0xff]
        %v2907 = vlaneseq
        %v2908 = vshrl.u32 %v2907, 7
        %v2909 = vsub.s32 0, %v2908
        %v2910 = vrot.slane %v2905, %v2909
        %v2911 = vlaneseq
        %v2912 = vshrl.u32 %v2911, 7
        %v2913 = vsub.s32 1, %v2912
        %v2914 = vrot.slane %v2905, %v2913
        %v2915 = vlaneseq
        %v2916 = vshrl.u32 %v2915, 7
        %v2917 = vsub.s32 2, %v2916
        %v2918 = vrot.slane %v2905, %v2917
        %v2919 = vlaneseq
        %v2920 = vshrl.u32 %v2919, 7
        %v2921 = vsub.s32 3, %v2920
        %v2922 = vrot.slane %v2905, %v2921
        %v2923 = vlaneseq
        %v2924 = vshrl.u32 %v2923, 7
        %v2925 = vsub.s32 4, %v2924
        %v2926 = vrot.slane %v2905, %v2925
        %v2927 = vlaneseq
        %v2928 = vshrl.u32 %v2927, 7
        %v2929 = vsub.s32 5, %v2928
        %v2930 = vrot.slane %v2905, %v2929
        %v2931 = vlaneseq
        %v2932 = vshrl.u32 %v2931, 7
        %v2933 = vsub.s32 6, %v2932
        %v2934 = vrot.slane %v2905, %v2933
        %v2935 = vlaneseq
        %v2936 = vshrl.u32 %v2935, 7
        %v2937 = vsub.s32 7, %v2936
        %v2938 = vrot.slane %v2905, %v2937
        %v2947 = vmul.f32 %v2407, %v2910
        %v2948 = vmul.f32 %v2409, %v2914
        %v2949 = vmul.f32 %v2571, %v2918
        %v2950 = vmul.f32 %v2573, %v2922
        %v2951 = vmul.f32 %v2735, %v2926
        %v2952 = vmul.f32 %v2737, %v2930
        %v2953 = vmul.f32 %v2899, %v2934
        %v2954 = vmul.f32 %v2901, %v2938
        %v2955 = vld [vmem:[%s738] sm:$0xff]
        %v2957 = vlaneseq
        %v2958 = vshrl.u32 %v2957, 7
        %v2959 = vsub.s32 0, %v2958
        %v2960 = vrot.slane %v2955, %v2959
        %v2961 = vlaneseq
        %v2962 = vshrl.u32 %v2961, 7
        %v2963 = vsub.s32 1, %v2962
        %v2964 = vrot.slane %v2955, %v2963
        %v2965 = vlaneseq
        %v2966 = vshrl.u32 %v2965, 7
        %v2967 = vsub.s32 2, %v2966
        %v2968 = vrot.slane %v2955, %v2967
        %v2969 = vlaneseq
        %v2970 = vshrl.u32 %v2969, 7
        %v2971 = vsub.s32 3, %v2970
        %v2972 = vrot.slane %v2955, %v2971
        %v2973 = vlaneseq
        %v2974 = vshrl.u32 %v2973, 7
        %v2975 = vsub.s32 4, %v2974
        %v2976 = vrot.slane %v2955, %v2975
        %v2977 = vlaneseq
        %v2978 = vshrl.u32 %v2977, 7
        %v2979 = vsub.s32 5, %v2978
        %v2980 = vrot.slane %v2955, %v2979
        %v2981 = vlaneseq
        %v2982 = vshrl.u32 %v2981, 7
        %v2983 = vsub.s32 6, %v2982
        %v2984 = vrot.slane %v2955, %v2983
        %v2985 = vlaneseq
        %v2986 = vshrl.u32 %v2985, 7
        %v2987 = vsub.s32 7, %v2986
        %v2988 = vrot.slane %v2955, %v2987
        %v2997 = vadd.f32 %v2947, %v2960
        %v2998 = vadd.f32 %v2948, %v2964
        %v2999 = vadd.f32 %v2949, %v2968
        %v3000 = vadd.f32 %v2950, %v2972
        %v3001 = vadd.f32 %v2951, %v2976
        %v3002 = vadd.f32 %v2952, %v2980
        %v3003 = vadd.f32 %v2953, %v2984
        %v3004 = vadd.f32 %v2954, %v2988
        %vm3005 = vcmp.gt.f32.partialorder %v2997, 0.0
        %vm3006 = vcmp.gt.f32.partialorder %v2998, 0.0
        %vm3007 = vcmp.gt.f32.partialorder %v2999, 0.0
        %vm3008 = vcmp.gt.f32.partialorder %v3000, 0.0
        %vm3009 = vcmp.gt.f32.partialorder %v3001, 0.0
        %vm3010 = vcmp.gt.f32.partialorder %v3002, 0.0
        %vm3011 = vcmp.gt.f32.partialorder %v3003, 0.0
        %vm3012 = vcmp.gt.f32.partialorder %v3004, 0.0
        %v3013 = vmin.f32 %v2997, 0.0
        %v3014 = vmin.f32 %v2998, 0.0
        %v3015 = vmin.f32 %v2999, 0.0
        %v3016 = vmin.f32 %v3000, 0.0
        %v3017 = vmin.f32 %v3001, 0.0
        %v3018 = vmin.f32 %v3002, 0.0
        %v3019 = vmin.f32 %v3003, 0.0
        %v3020 = vmin.f32 %v3004, 0.0
        %v3021 = vmul.f32 %v3013, 1.442695
        %v3022 = vpow.pop %v3021
        %v3023 = vmul.f32 %v3014, 1.442695
        %v3024 = vpow.pop %v3023
        %v3025 = vmul.f32 %v3015, 1.442695
        %v3026 = vpow.pop %v3025
        %v3027 = vmul.f32 %v3016, 1.442695
        %v3028 = vpow.pop %v3027
        %v3029 = vmul.f32 %v3017, 1.442695
        %v3030 = vpow.pop %v3029
        %v3031 = vmul.f32 %v3018, 1.442695
        %v3032 = vpow.pop %v3031
        %v3033 = vmul.f32 %v3019, 1.442695
        %v3034 = vpow.pop %v3033
        %v3035 = vmul.f32 %v3020, 1.442695
        %v3036 = vpow.pop %v3035
        %v3037 = vsub.f32 %v3022, 1.0
        %v3038 = vsub.f32 %v3024, 1.0
        %v3039 = vsub.f32 %v3026, 1.0
        %v3040 = vsub.f32 %v3028, 1.0
        %v3041 = vsub.f32 %v3030, 1.0
        %v3042 = vsub.f32 %v3032, 1.0
        %v3043 = vsub.f32 %v3034, 1.0
        %v3044 = vsub.f32 %v3036, 1.0
        %v3045 = vsel %vm3005, %v2997, %v3037
        %v3046 = vsel %vm3006, %v2998, %v3038
        %v3047 = vsel %vm3007, %v2999, %v3039
        %v3048 = vsel %vm3008, %v3000, %v3040
        %v3049 = vsel %vm3009, %v3001, %v3041
        %v3050 = vsel %vm3010, %v3002, %v3042
        %v3051 = vsel %vm3011, %v3003, %v3043
        %v3052 = vsel %vm3012, %v3004, %v3044
        %v3053 = vpack.c.bf16 %v3045, %v3045
        %v3054 = vpack.c.bf16 %v3046, %v3046
        %v3055 = vpack.c.bf16 %v3047, %v3047
        %v3056 = vpack.c.bf16 %v3048, %v3048
        %v3057 = vpack.c.bf16 %v3049, %v3049
        %v3058 = vpack.c.bf16 %v3050, %v3050
        %v3059 = vpack.c.bf16 %v3051, %v3051
        %v3060 = vpack.c.bf16 %v3052, %v3052
        %v3061 = vld [vmem:[%s840] sm:$0xf]
        %v3062 = vld [vmem:[%s840 + $0x4] sm:$0xf]
        %v3063 = vld [vmem:[%s840 + $0x8] sm:$0xf]
        %v3064 = vld [vmem:[%s840 + $0xc] sm:$0xf]
        %v3065 = vld [vmem:[%s840 + $0x10] sm:$0xf]
        %v3066 = vld [vmem:[%s840 + $0x14] sm:$0xf]
        %v3067 = vld [vmem:[%s840 + $0x18] sm:$0xf]
        %v3068 = vld [vmem:[%s840 + $0x1c] sm:$0xf]
        %v3069 = vld [vmem:[%s840 + $0x20] sm:$0xf]
        %v3070 = vld [vmem:[%s840 + $0x24] sm:$0xf]
        %v3071 = vld [vmem:[%s840 + $0x28] sm:$0xf]
        %v3072 = vld [vmem:[%s840 + $0x2c] sm:$0xf]
        %v3073 = vld [vmem:[%s840 + $0x30] sm:$0xf]
        %v3074 = vld [vmem:[%s840 + $0x34] sm:$0xf]
        %v3075 = vld [vmem:[%s840 + $0x38] sm:$0xf]
        %v3076 = vld [vmem:[%s840 + $0x3c] sm:$0xf]
        %v3077 = vld [vmem:[%s840 + $0x40] sm:$0xf]
        %v3078 = vld [vmem:[%s840 + $0x44] sm:$0xf]
        %v3079 = vld [vmem:[%s840 + $0x48] sm:$0xf]
        %v3080 = vld [vmem:[%s840 + $0x4c] sm:$0xf]
        %v3081 = vld [vmem:[%s840 + $0x50] sm:$0xf]
        %v3082 = vld [vmem:[%s840 + $0x54] sm:$0xf]
        %v3083 = vld [vmem:[%s840 + $0x58] sm:$0xf]
        %v3084 = vld [vmem:[%s840 + $0x5c] sm:$0xf]
        %v3085 = vld [vmem:[%s840 + $0x60] sm:$0xf]
        %v3086 = vld [vmem:[%s840 + $0x64] sm:$0xf]
        %v3087 = vld [vmem:[%s840 + $0x68] sm:$0xf]
        %v3088 = vld [vmem:[%s840 + $0x6c] sm:$0xf]
        %v3089 = vld [vmem:[%s840 + $0x70] sm:$0xf]
        %v3090 = vld [vmem:[%s840 + $0x74] sm:$0xf]
        %v3091 = vld [vmem:[%s840 + $0x78] sm:$0xf]
        %v3092 = vld [vmem:[%s840 + $0x7c] sm:$0xf]
        %v3093 = vld [vmem:[%s840 + $0x80] sm:$0xf]
        %v3094 = vld [vmem:[%s840 + $0x84] sm:$0xf]
        %v3095 = vld [vmem:[%s840 + $0x88] sm:$0xf]
        %v3096 = vld [vmem:[%s840 + $0x8c] sm:$0xf]
        %v3097 = vld [vmem:[%s840 + $0x90] sm:$0xf]
        %v3098 = vld [vmem:[%s840 + $0x94] sm:$0xf]
        %v3099 = vld [vmem:[%s840 + $0x98] sm:$0xf]
        %v3100 = vld [vmem:[%s840 + $0x9c] sm:$0xf]
        %v3101 = vld [vmem:[%s840 + $0xa0] sm:$0xf]
        %v3102 = vld [vmem:[%s840 + $0xa4] sm:$0xf]
        %v3103 = vld [vmem:[%s840 + $0xa8] sm:$0xf]
        %v3104 = vld [vmem:[%s840 + $0xac] sm:$0xf]
        %v3105 = vld [vmem:[%s840 + $0xb0] sm:$0xf]
        %v3106 = vld [vmem:[%s840 + $0xb4] sm:$0xf]
        %v3107 = vld [vmem:[%s840 + $0xb8] sm:$0xf]
        %v3108 = vld [vmem:[%s840 + $0xbc] sm:$0xf]
        %v3109 = vld [vmem:[%s840 + $0xc0] sm:$0xf]
        %v3110 = vld [vmem:[%s840 + $0xc4] sm:$0xf]
        %v3111 = vld [vmem:[%s840 + $0xc8] sm:$0xf]
        %v3112 = vld [vmem:[%s840 + $0xcc] sm:$0xf]
        %v3113 = vld [vmem:[%s840 + $0xd0] sm:$0xf]
        %v3114 = vld [vmem:[%s840 + $0xd4] sm:$0xf]
        %v3115 = vld [vmem:[%s840 + $0xd8] sm:$0xf]
        %v3116 = vld [vmem:[%s840 + $0xdc] sm:$0xf]
        %v3117 = vld [vmem:[%s840 + $0xe0] sm:$0xf]
        %v3118 = vld [vmem:[%s840 + $0xe4] sm:$0xf]
        %v3119 = vld [vmem:[%s840 + $0xe8] sm:$0xf]
        %v3120 = vld [vmem:[%s840 + $0xec] sm:$0xf]
        %v3121 = vld [vmem:[%s840 + $0xf0] sm:$0xf]
        %v3122 = vld [vmem:[%s840 + $0xf4] sm:$0xf]
        %v3123 = vld [vmem:[%s840 + $0xf8] sm:$0xf]
        %v3124 = vld [vmem:[%s840 + $0xfc] sm:$0xf]
        %v3125 = vld [vmem:[%s840 + $0x100] sm:$0xf]
        %v3126 = vld [vmem:[%s840 + $0x104] sm:$0xf]
        %v3127 = vld [vmem:[%s840 + $0x108] sm:$0xf]
        %v3128 = vld [vmem:[%s840 + $0x10c] sm:$0xf]
        %v3129 = vld [vmem:[%s840 + $0x110] sm:$0xf]
        %v3130 = vld [vmem:[%s840 + $0x114] sm:$0xf]
        %v3131 = vld [vmem:[%s840 + $0x118] sm:$0xf]
        %v3132 = vld [vmem:[%s840 + $0x11c] sm:$0xf]
        %v3133 = vld [vmem:[%s840 + $0x120] sm:$0xf]
        %v3134 = vld [vmem:[%s840 + $0x124] sm:$0xf]
        %v3135 = vld [vmem:[%s840 + $0x128] sm:$0xf]
        %v3136 = vld [vmem:[%s840 + $0x12c] sm:$0xf]
        %v3137 = vld [vmem:[%s840 + $0x130] sm:$0xf]
        %v3138 = vld [vmem:[%s840 + $0x134] sm:$0xf]
        %v3139 = vld [vmem:[%s840 + $0x138] sm:$0xf]
        %v3140 = vld [vmem:[%s840 + $0x13c] sm:$0xf]
        %v3141 = vld [vmem:[%s840 + $0x140] sm:$0xf]
        %v3142 = vld [vmem:[%s840 + $0x144] sm:$0xf]
        %v3143 = vld [vmem:[%s840 + $0x148] sm:$0xf]
        %v3144 = vld [vmem:[%s840 + $0x14c] sm:$0xf]
        %v3145 = vld [vmem:[%s840 + $0x150] sm:$0xf]
        %v3146 = vld [vmem:[%s840 + $0x154] sm:$0xf]
        %v3147 = vld [vmem:[%s840 + $0x158] sm:$0xf]
        %v3148 = vld [vmem:[%s840 + $0x15c] sm:$0xf]
        %v3149 = vld [vmem:[%s840 + $0x160] sm:$0xf]
        %v3150 = vld [vmem:[%s840 + $0x164] sm:$0xf]
        %v3151 = vld [vmem:[%s840 + $0x168] sm:$0xf]
        %v3152 = vld [vmem:[%s840 + $0x16c] sm:$0xf]
        %v3153 = vld [vmem:[%s840 + $0x170] sm:$0xf]
        %v3154 = vld [vmem:[%s840 + $0x174] sm:$0xf]
        %v3155 = vld [vmem:[%s840 + $0x178] sm:$0xf]
        %v3156 = vld [vmem:[%s840 + $0x17c] sm:$0xf]
        %v3157 = vld [vmem:[%s840 + $0x180] sm:$0xf]
        %v3158 = vld [vmem:[%s840 + $0x184] sm:$0xf]
        %v3159 = vld [vmem:[%s840 + $0x188] sm:$0xf]
        %v3160 = vld [vmem:[%s840 + $0x18c] sm:$0xf]
        %v3161 = vld [vmem:[%s840 + $0x190] sm:$0xf]
        %v3162 = vld [vmem:[%s840 + $0x194] sm:$0xf]
        %v3163 = vld [vmem:[%s840 + $0x198] sm:$0xf]
        %v3164 = vld [vmem:[%s840 + $0x19c] sm:$0xf]
        %v3165 = vld [vmem:[%s840 + $0x1a0] sm:$0xf]
        %v3166 = vld [vmem:[%s840 + $0x1a4] sm:$0xf]
        %v3167 = vld [vmem:[%s840 + $0x1a8] sm:$0xf]
        %v3168 = vld [vmem:[%s840 + $0x1ac] sm:$0xf]
        %v3169 = vld [vmem:[%s840 + $0x1b0] sm:$0xf]
        %v3170 = vld [vmem:[%s840 + $0x1b4] sm:$0xf]
        %v3171 = vld [vmem:[%s840 + $0x1b8] sm:$0xf]
        %v3172 = vld [vmem:[%s840 + $0x1bc] sm:$0xf]
        %v3173 = vld [vmem:[%s840 + $0x1c0] sm:$0xf]
        %v3174 = vld [vmem:[%s840 + $0x1c4] sm:$0xf]
        %v3175 = vld [vmem:[%s840 + $0x1c8] sm:$0xf]
        %v3176 = vld [vmem:[%s840 + $0x1cc] sm:$0xf]
        %v3177 = vld [vmem:[%s840 + $0x1d0] sm:$0xf]
        %v3178 = vld [vmem:[%s840 + $0x1d4] sm:$0xf]
        %v3179 = vld [vmem:[%s840 + $0x1d8] sm:$0xf]
        %v3180 = vld [vmem:[%s840 + $0x1dc] sm:$0xf]
        %v3181 = vld [vmem:[%s840 + $0x1e0] sm:$0xf]
        %v3182 = vld [vmem:[%s840 + $0x1e4] sm:$0xf]
        %v3183 = vld [vmem:[%s840 + $0x1e8] sm:$0xf]
        %v3184 = vld [vmem:[%s840 + $0x1ec] sm:$0xf]
        %v3185 = vld [vmem:[%s840 + $0x1f0] sm:$0xf]
        %v3186 = vld [vmem:[%s840 + $0x1f4] sm:$0xf]
        %v3187 = vld [vmem:[%s840 + $0x1f8] sm:$0xf]
        %v3188 = vld [vmem:[%s840 + $0x1fc] sm:$0xf]
        %v3189 = vld [vmem:[%s746] sm:$0x1]
        %v3191 = vlaneseq
        %v3192 = vshrl.u32 %v3191, 7
        %v3193 = vsub.s32 0, %v3192
        %v3194 = vrot.slane %v3189, %v3193
        %v3324 = vunpack.c.l.b16 %v3061
        %v3325 = vunpack.c.l.b16 %v3062
        %v3326 = vunpack.c.l.b16 %v3063
        %v3327 = vunpack.c.l.b16 %v3064
        %v3328 = vunpack.c.l.b16 %v3065
        %v3329 = vunpack.c.l.b16 %v3066
        %v3330 = vunpack.c.l.b16 %v3067
        %v3331 = vunpack.c.l.b16 %v3068
        %v3332 = vunpack.c.l.b16 %v3069
        %v3333 = vunpack.c.l.b16 %v3070
        %v3334 = vunpack.c.l.b16 %v3071
        %v3335 = vunpack.c.l.b16 %v3072
        %v3336 = vunpack.c.l.b16 %v3073
        %v3337 = vunpack.c.l.b16 %v3074
        %v3338 = vunpack.c.l.b16 %v3075
        %v3339 = vunpack.c.l.b16 %v3076
        %v3340 = vunpack.c.l.b16 %v3077
        %v3341 = vunpack.c.l.b16 %v3078
        %v3342 = vunpack.c.l.b16 %v3079
        %v3343 = vunpack.c.l.b16 %v3080
        %v3344 = vunpack.c.l.b16 %v3081
        %v3345 = vunpack.c.l.b16 %v3082
        %v3346 = vunpack.c.l.b16 %v3083
        %v3347 = vunpack.c.l.b16 %v3084
        %v3348 = vunpack.c.l.b16 %v3085
        %v3349 = vunpack.c.l.b16 %v3086
        %v3350 = vunpack.c.l.b16 %v3087
        %v3351 = vunpack.c.l.b16 %v3088
        %v3352 = vunpack.c.l.b16 %v3089
        %v3353 = vunpack.c.l.b16 %v3090
        %v3354 = vunpack.c.l.b16 %v3091
        %v3355 = vunpack.c.l.b16 %v3092
        %v3356 = vunpack.c.l.b16 %v3093
        %v3357 = vunpack.c.l.b16 %v3094
        %v3358 = vunpack.c.l.b16 %v3095
        %v3359 = vunpack.c.l.b16 %v3096
        %v3360 = vunpack.c.l.b16 %v3097
        %v3361 = vunpack.c.l.b16 %v3098
        %v3362 = vunpack.c.l.b16 %v3099
        %v3363 = vunpack.c.l.b16 %v3100
        %v3364 = vunpack.c.l.b16 %v3101
        %v3365 = vunpack.c.l.b16 %v3102
        %v3366 = vunpack.c.l.b16 %v3103
        %v3367 = vunpack.c.l.b16 %v3104
        %v3368 = vunpack.c.l.b16 %v3105
        %v3369 = vunpack.c.l.b16 %v3106
        %v3370 = vunpack.c.l.b16 %v3107
        %v3371 = vunpack.c.l.b16 %v3108
        %v3372 = vunpack.c.l.b16 %v3109
        %v3373 = vunpack.c.l.b16 %v3110
        %v3374 = vunpack.c.l.b16 %v3111
        %v3375 = vunpack.c.l.b16 %v3112
        %v3376 = vunpack.c.l.b16 %v3113
        %v3377 = vunpack.c.l.b16 %v3114
        %v3378 = vunpack.c.l.b16 %v3115
        %v3379 = vunpack.c.l.b16 %v3116
        %v3380 = vunpack.c.l.b16 %v3117
        %v3381 = vunpack.c.l.b16 %v3118
        %v3382 = vunpack.c.l.b16 %v3119
        %v3383 = vunpack.c.l.b16 %v3120
        %v3384 = vunpack.c.l.b16 %v3121
        %v3385 = vunpack.c.l.b16 %v3122
        %v3386 = vunpack.c.l.b16 %v3123
        %v3387 = vunpack.c.l.b16 %v3124
        %v3388 = vunpack.c.l.b16 %v3125
        %v3389 = vunpack.c.l.b16 %v3126
        %v3390 = vunpack.c.l.b16 %v3127
        %v3391 = vunpack.c.l.b16 %v3128
        %v3392 = vunpack.c.l.b16 %v3129
        %v3393 = vunpack.c.l.b16 %v3130
        %v3394 = vunpack.c.l.b16 %v3131
        %v3395 = vunpack.c.l.b16 %v3132
        %v3396 = vunpack.c.l.b16 %v3133
        %v3397 = vunpack.c.l.b16 %v3134
        %v3398 = vunpack.c.l.b16 %v3135
        %v3399 = vunpack.c.l.b16 %v3136
        %v3400 = vunpack.c.l.b16 %v3137
        %v3401 = vunpack.c.l.b16 %v3138
        %v3402 = vunpack.c.l.b16 %v3139
        %v3403 = vunpack.c.l.b16 %v3140
        %v3404 = vunpack.c.l.b16 %v3141
        %v3405 = vunpack.c.l.b16 %v3142
        %v3406 = vunpack.c.l.b16 %v3143
        %v3407 = vunpack.c.l.b16 %v3144
        %v3408 = vunpack.c.l.b16 %v3145
        %v3409 = vunpack.c.l.b16 %v3146
        %v3410 = vunpack.c.l.b16 %v3147
        %v3411 = vunpack.c.l.b16 %v3148
        %v3412 = vunpack.c.l.b16 %v3149
        %v3413 = vunpack.c.l.b16 %v3150
        %v3414 = vunpack.c.l.b16 %v3151
        %v3415 = vunpack.c.l.b16 %v3152
        %v3416 = vunpack.c.l.b16 %v3153
        %v3417 = vunpack.c.l.b16 %v3154
        %v3418 = vunpack.c.l.b16 %v3155
        %v3419 = vunpack.c.l.b16 %v3156
        %v3420 = vunpack.c.l.b16 %v3157
        %v3421 = vunpack.c.l.b16 %v3158
        %v3422 = vunpack.c.l.b16 %v3159
        %v3423 = vunpack.c.l.b16 %v3160
        %v3424 = vunpack.c.l.b16 %v3161
        %v3425 = vunpack.c.l.b16 %v3162
        %v3426 = vunpack.c.l.b16 %v3163
        %v3427 = vunpack.c.l.b16 %v3164
        %v3428 = vunpack.c.l.b16 %v3165
        %v3429 = vunpack.c.l.b16 %v3166
        %v3430 = vunpack.c.l.b16 %v3167
        %v3431 = vunpack.c.l.b16 %v3168
        %v3432 = vunpack.c.l.b16 %v3169
        %v3433 = vunpack.c.l.b16 %v3170
        %v3434 = vunpack.c.l.b16 %v3171
        %v3435 = vunpack.c.l.b16 %v3172
        %v3436 = vunpack.c.l.b16 %v3173
        %v3437 = vunpack.c.l.b16 %v3174
        %v3438 = vunpack.c.l.b16 %v3175
        %v3439 = vunpack.c.l.b16 %v3176
        %v3440 = vunpack.c.l.b16 %v3177
        %v3441 = vunpack.c.l.b16 %v3178
        %v3442 = vunpack.c.l.b16 %v3179
        %v3443 = vunpack.c.l.b16 %v3180
        %v3444 = vunpack.c.l.b16 %v3181
        %v3445 = vunpack.c.l.b16 %v3182
        %v3446 = vunpack.c.l.b16 %v3183
        %v3447 = vunpack.c.l.b16 %v3184
        %v3448 = vunpack.c.l.b16 %v3185
        %v3449 = vunpack.c.l.b16 %v3186
        %v3450 = vunpack.c.l.b16 %v3187
        %v3451 = vunpack.c.l.b16 %v3188
        %v3452 = vpack.c.b16 %v3325, %v3324
        %v3453 = vpack.c.b16 %v3327, %v3326
        %v3454 = vpack.c.b16 %v3329, %v3328
        %v3455 = vpack.c.b16 %v3331, %v3330
        %v3456 = vpack.c.b16 %v3333, %v3332
        %v3457 = vpack.c.b16 %v3335, %v3334
        %v3458 = vpack.c.b16 %v3337, %v3336
        %v3459 = vpack.c.b16 %v3339, %v3338
        %v3460 = vpack.c.b16 %v3341, %v3340
        %v3461 = vpack.c.b16 %v3343, %v3342
        %v3462 = vpack.c.b16 %v3345, %v3344
        %v3463 = vpack.c.b16 %v3347, %v3346
        %v3464 = vpack.c.b16 %v3349, %v3348
        %v3465 = vpack.c.b16 %v3351, %v3350
        %v3466 = vpack.c.b16 %v3353, %v3352
        %v3467 = vpack.c.b16 %v3355, %v3354
        %v3468 = vpack.c.b16 %v3357, %v3356
        %v3469 = vpack.c.b16 %v3359, %v3358
        %v3470 = vpack.c.b16 %v3361, %v3360
        %v3471 = vpack.c.b16 %v3363, %v3362
        %v3472 = vpack.c.b16 %v3365, %v3364
        %v3473 = vpack.c.b16 %v3367, %v3366
        %v3474 = vpack.c.b16 %v3369, %v3368
        %v3475 = vpack.c.b16 %v3371, %v3370
        %v3476 = vpack.c.b16 %v3373, %v3372
        %v3477 = vpack.c.b16 %v3375, %v3374
        %v3478 = vpack.c.b16 %v3377, %v3376
        %v3479 = vpack.c.b16 %v3379, %v3378
        %v3480 = vpack.c.b16 %v3381, %v3380
        %v3481 = vpack.c.b16 %v3383, %v3382
        %v3482 = vpack.c.b16 %v3385, %v3384
        %v3483 = vpack.c.b16 %v3387, %v3386
        %v3484 = vpack.c.b16 %v3389, %v3388
        %v3485 = vpack.c.b16 %v3391, %v3390
        %v3486 = vpack.c.b16 %v3393, %v3392
        %v3487 = vpack.c.b16 %v3395, %v3394
        %v3488 = vpack.c.b16 %v3397, %v3396
        %v3489 = vpack.c.b16 %v3399, %v3398
        %v3490 = vpack.c.b16 %v3401, %v3400
        %v3491 = vpack.c.b16 %v3403, %v3402
        %v3492 = vpack.c.b16 %v3405, %v3404
        %v3493 = vpack.c.b16 %v3407, %v3406
        %v3494 = vpack.c.b16 %v3409, %v3408
        %v3495 = vpack.c.b16 %v3411, %v3410
        %v3496 = vpack.c.b16 %v3413, %v3412
        %v3497 = vpack.c.b16 %v3415, %v3414
        %v3498 = vpack.c.b16 %v3417, %v3416
        %v3499 = vpack.c.b16 %v3419, %v3418
        %v3500 = vpack.c.b16 %v3421, %v3420
        %v3501 = vpack.c.b16 %v3423, %v3422
        %v3502 = vpack.c.b16 %v3425, %v3424
        %v3503 = vpack.c.b16 %v3427, %v3426
        %v3504 = vpack.c.b16 %v3429, %v3428
        %v3505 = vpack.c.b16 %v3431, %v3430
        %v3506 = vpack.c.b16 %v3433, %v3432
        %v3507 = vpack.c.b16 %v3435, %v3434
        %v3508 = vpack.c.b16 %v3437, %v3436
        %v3509 = vpack.c.b16 %v3439, %v3438
        %v3510 = vpack.c.b16 %v3441, %v3440
        %v3511 = vpack.c.b16 %v3443, %v3442
        %v3512 = vpack.c.b16 %v3445, %v3444
        %v3513 = vpack.c.b16 %v3447, %v3446
        %v3514 = vpack.c.b16 %v3449, %v3448
        %v3515 = vpack.c.b16 %v3451, %v3450
        %3580 = vmatprep.subr.bf16.mxu0 0
        %3581 = vmatpush1.bf16.msra.mxu0 %v3452
        %3582 = vmatprep.subr.bf16.mxu0 0
        %3583 = vmatpush1.bf16.msra.mxu0 %v3453
        %3584 = vmatprep.subr.bf16.mxu0 0
        %3585 = vmatpush1.bf16.msra.mxu0 %v3454
        %3586 = vmatprep.subr.bf16.mxu0 0
        %3587 = vmatpush1.bf16.msra.mxu0 %v3455
        %3588 = vmatprep.subr.bf16.mxu0 0
        %3589 = vmatpush1.bf16.msra.mxu0 %v3456
        %3590 = vmatprep.subr.bf16.mxu0 0
        %3591 = vmatpush1.bf16.msra.mxu0 %v3457
        %3592 = vmatprep.subr.bf16.mxu0 0
        %3593 = vmatpush1.bf16.msra.mxu0 %v3458
        %3594 = vmatprep.subr.bf16.mxu0 0
        %3595 = vmatpush1.bf16.msra.mxu0 %v3459
        %3596 = vmatprep.subr.bf16.mxu0 0
        %3597 = vmatpush1.bf16.msra.mxu0 %v3460
        %3598 = vmatprep.subr.bf16.mxu0 0
        %3599 = vmatpush1.bf16.msra.mxu0 %v3461
        %3600 = vmatprep.subr.bf16.mxu0 0
        %3601 = vmatpush1.bf16.msra.mxu0 %v3462
        %3602 = vmatprep.subr.bf16.mxu0 0
        %3603 = vmatpush1.bf16.msra.mxu0 %v3463
        %3604 = vmatprep.subr.bf16.mxu0 0
        %3605 = vmatpush1.bf16.msra.mxu0 %v3464
        %3606 = vmatprep.subr.bf16.mxu0 0
        %3607 = vmatpush1.bf16.msra.mxu0 %v3465
        %3608 = vmatprep.subr.bf16.mxu0 0
        %3609 = vmatpush1.bf16.msra.mxu0 %v3466
        %3610 = vmatprep.subr.bf16.mxu0 0
        %3611 = vmatpush1.bf16.msra.mxu0 %v3467
        %3612 = vmatprep.mubr.bf16.mxu0 %v3054
        %3613 = vmatmul.mubr.bf16.gmra.mrb[0].mxu0 %v3053
        %v3614 = vpop.f32.mrb[0].mxu0
        %v3615 = vadd.f32 %v3194, %v3614
        %v3616 = vpop.f32.mrb[0].mxu0
        %v3617 = vpop.f32.mrb[0].mxu0
        %v3618 = vpop.f32.mrb[0].mxu0
        %3619 = vdwg.mxu0
        %3620 = vmatprep.subr.bf16.mxu0 0
        %3621 = vmatpush1.bf16.msra.mxu0 %v3468
        %3622 = vmatprep.subr.bf16.mxu0 0
        %3623 = vmatpush1.bf16.msra.mxu0 %v3469
        %3624 = vmatprep.subr.bf16.mxu0 0
        %3625 = vmatpush1.bf16.msra.mxu0 %v3470
        %3626 = vmatprep.subr.bf16.mxu0 0
        %3627 = vmatpush1.bf16.msra.mxu0 %v3471
        %3628 = vmatprep.subr.bf16.mxu0 0
        %3629 = vmatpush1.bf16.msra.mxu0 %v3472
        %3630 = vmatprep.subr.bf16.mxu0 0
        %3631 = vmatpush1.bf16.msra.mxu0 %v3473
        %3632 = vmatprep.subr.bf16.mxu0 0
        %3633 = vmatpush1.bf16.msra.mxu0 %v3474
        %3634 = vmatprep.subr.bf16.mxu0 0
        %3635 = vmatpush1.bf16.msra.mxu0 %v3475
        %3636 = vmatprep.subr.bf16.mxu0 0
        %3637 = vmatpush1.bf16.msra.mxu0 %v3476
        %3638 = vmatprep.subr.bf16.mxu0 0
        %3639 = vmatpush1.bf16.msra.mxu0 %v3477
        %3640 = vmatprep.subr.bf16.mxu0 0
        %3641 = vmatpush1.bf16.msra.mxu0 %v3478
        %3642 = vmatprep.subr.bf16.mxu0 0
        %3643 = vmatpush1.bf16.msra.mxu0 %v3479
        %3644 = vmatprep.subr.bf16.mxu0 0
        %3645 = vmatpush1.bf16.msra.mxu0 %v3480
        %3646 = vmatprep.subr.bf16.mxu0 0
        %3647 = vmatpush1.bf16.msra.mxu0 %v3481
        %3648 = vmatprep.subr.bf16.mxu0 0
        %3649 = vmatpush1.bf16.msra.mxu0 %v3482
        %3650 = vmatprep.subr.bf16.mxu0 0
        %3651 = vmatpush1.bf16.msra.mxu0 %v3483
        %3652 = vmatprep.mubr.bf16.mxu0 %v3056
        %3653 = vmatmul.mubr.bf16.gmra.mrb[0].mxu0 %v3055
        %v3654 = vpop.f32.mrb[0].mxu0
        %v3655 = vadd.f32 %v3615, %v3654
        %v3656 = vpop.f32.mrb[0].mxu0
        %v3657 = vpop.f32.mrb[0].mxu0
        %v3658 = vpop.f32.mrb[0].mxu0
        %3659 = vdwg.mxu0
        %3660 = vmatprep.subr.bf16.mxu0 0
        %3661 = vmatpush1.bf16.msra.mxu0 %v3484
        %3662 = vmatprep.subr.bf16.mxu0 0
        %3663 = vmatpush1.bf16.msra.mxu0 %v3485
        %3664 = vmatprep.subr.bf16.mxu0 0
        %3665 = vmatpush1.bf16.msra.mxu0 %v3486
        %3666 = vmatprep.subr.bf16.mxu0 0
        %3667 = vmatpush1.bf16.msra.mxu0 %v3487
        %3668 = vmatprep.subr.bf16.mxu0 0
        %3669 = vmatpush1.bf16.msra.mxu0 %v3488
        %3670 = vmatprep.subr.bf16.mxu0 0
        %3671 = vmatpush1.bf16.msra.mxu0 %v3489
        %3672 = vmatprep.subr.bf16.mxu0 0
        %3673 = vmatpush1.bf16.msra.mxu0 %v3490
        %3674 = vmatprep.subr.bf16.mxu0 0
        %3675 = vmatpush1.bf16.msra.mxu0 %v3491
        %3676 = vmatprep.subr.bf16.mxu0 0
        %3677 = vmatpush1.bf16.msra.mxu0 %v3492
        %3678 = vmatprep.subr.bf16.mxu0 0
        %3679 = vmatpush1.bf16.msra.mxu0 %v3493
        %3680 = vmatprep.subr.bf16.mxu0 0
        %3681 = vmatpush1.bf16.msra.mxu0 %v3494
        %3682 = vmatprep.subr.bf16.mxu0 0
        %3683 = vmatpush1.bf16.msra.mxu0 %v3495
        %3684 = vmatprep.subr.bf16.mxu0 0
        %3685 = vmatpush1.bf16.msra.mxu0 %v3496
        %3686 = vmatprep.subr.bf16.mxu0 0
        %3687 = vmatpush1.bf16.msra.mxu0 %v3497
        %3688 = vmatprep.subr.bf16.mxu0 0
        %3689 = vmatpush1.bf16.msra.mxu0 %v3498
        %3690 = vmatprep.subr.bf16.mxu0 0
        %3691 = vmatpush1.bf16.msra.mxu0 %v3499
        %3692 = vmatprep.mubr.bf16.mxu0 %v3058
        %3693 = vmatmul.mubr.bf16.gmra.mrb[0].mxu0 %v3057
        %v3694 = vpop.f32.mrb[0].mxu0
        %v3695 = vadd.f32 %v3655, %v3694
        %v3696 = vpop.f32.mrb[0].mxu0
        %v3697 = vpop.f32.mrb[0].mxu0
        %v3698 = vpop.f32.mrb[0].mxu0
        %3699 = vdwg.mxu0
        %3700 = vmatprep.subr.bf16.mxu0 0
        %3701 = vmatpush1.bf16.msra.mxu0 %v3500
        %3702 = vmatprep.subr.bf16.mxu0 0
        %3703 = vmatpush1.bf16.msra.mxu0 %v3501
        %3704 = vmatprep.subr.bf16.mxu0 0
        %3705 = vmatpush1.bf16.msra.mxu0 %v3502
        %3706 = vmatprep.subr.bf16.mxu0 0
        %3707 = vmatpush1.bf16.msra.mxu0 %v3503
        %3708 = vmatprep.subr.bf16.mxu0 0
        %3709 = vmatpush1.bf16.msra.mxu0 %v3504
        %3710 = vmatprep.subr.bf16.mxu0 0
        %3711 = vmatpush1.bf16.msra.mxu0 %v3505
        %3712 = vmatprep.subr.bf16.mxu0 0
        %3713 = vmatpush1.bf16.msra.mxu0 %v3506
        %3714 = vmatprep.subr.bf16.mxu0 0
        %3715 = vmatpush1.bf16.msra.mxu0 %v3507
        %3716 = vmatprep.subr.bf16.mxu0 0
        %3717 = vmatpush1.bf16.msra.mxu0 %v3508
        %3718 = vmatprep.subr.bf16.mxu0 0
        %3719 = vmatpush1.bf16.msra.mxu0 %v3509
        %3720 = vmatprep.subr.bf16.mxu0 0
        %3721 = vmatpush1.bf16.msra.mxu0 %v3510
        %3722 = vmatprep.subr.bf16.mxu0 0
        %3723 = vmatpush1.bf16.msra.mxu0 %v3511
        %3724 = vmatprep.subr.bf16.mxu0 0
        %3725 = vmatpush1.bf16.msra.mxu0 %v3512
        %3726 = vmatprep.subr.bf16.mxu0 0
        %3727 = vmatpush1.bf16.msra.mxu0 %v3513
        %3728 = vmatprep.subr.bf16.mxu0 0
        %3729 = vmatpush1.bf16.msra.mxu0 %v3514
        %3730 = vmatprep.subr.bf16.mxu0 0
        %3731 = vmatpush1.bf16.msra.mxu0 %v3515
        %3732 = vmatprep.mubr.bf16.mxu0 %v3060
        %3733 = vmatmul.mubr.bf16.gmra.mrb[0].mxu0 %v3059
        %v3734 = vpop.f32.mrb[0].mxu0
        %v3735 = vadd.f32 %v3695, %v3734
        %v3736 = vpop.f32.mrb[0].mxu0
        %v3737 = vpop.f32.mrb[0].mxu0
        %v3738 = vpop.f32.mrb[0].mxu0
        %3739 = vdwg.mxu0
        %v3740 = vld [vmem:[%s755] sm:$0xff]
        %v3741 = vadd.f32 %v3735, %v3740
        %3743 = vrot.lane.b32.xlu0 %v3741, 120
        %v3744 = vpop.permute.xlu0 %3743
        %v3746 = vmax.f32 %v3741, %v3744
        %3748 = vrot.lane.b32.xlu0 %v3746, 112
        %v3749 = vpop.permute.xlu0 %3748
        %v3751 = vmax.f32 %v3746, %v3749
        %vm3752 = vcmp.ge.f32.partialorder %v3741, %v3751
        %v3753 = vsel %vm3752, 0, 4
        %3755 = vrot.lane.b32.xlu0 %v3751, 8
        %v3756 = vpop.permute.xlu0 %3755
        %vm3758 = vcmp.ge.f32.partialorder %v3741, %v3756
        %v3759 = vsel %vm3758, 1, 4
        %3760 = vrot.lane.b32.xlu0 %v3751, 16
        %v3761 = vpop.permute.xlu0 %3760
        %vm3763 = vcmp.ge.f32.partialorder %v3741, %v3761
        %v3764 = vsel %vm3763, 2, 4
        %3765 = vrot.lane.b32.xlu0 %v3751, 24
        %v3766 = vpop.permute.xlu0 %3765
        %vm3768 = vcmp.ge.f32.partialorder %v3741, %v3766
        %v3769 = vsel %vm3768, 3, 4
        %3770 = vrot.lane.b32.xlu0 %v3759, 120
        %v3771 = vpop.permute.xlu0 %3770
        %vm3772 = vcmp.lt.s32.totalorder %v3753, %v3771
        %v3773 = vsel %vm3772, %v3753, %v3771
        %3774 = vrot.lane.b32.xlu0 %v3769, 120
        %v3775 = vpop.permute.xlu0 %3774
        %vm3776 = vcmp.lt.s32.totalorder %v3764, %v3775
        %v3777 = vsel %vm3776, %v3764, %v3775
        %3778 = vrot.lane.b32.xlu0 %v3777, 112
        %v3779 = vpop.permute.xlu0 %3778
        %vm3780 = vcmp.lt.s32.totalorder %v3773, %v3779
        %v3781 = vsel %vm3780, %v3773, %v3779
        %vm3782 = vcmp.eq.s32.totalorder %v3781, 0
        %v3783 = vsel %vm3782, 1, 0
        %v3784 = vcvt.s32.f32 %v3783
        %vm3785 = vcmp.eq.s32.totalorder %v3781, 1
        %v3786 = vsel %vm3785, 1, 0
        %v3787 = vcvt.s32.f32 %v3786
        %vm3788 = vcmp.eq.s32.totalorder %v3781, 2
        %v3789 = vsel %vm3788, 1, 0
        %v3790 = vcvt.s32.f32 %v3789
        %vm3791 = vcmp.eq.s32.totalorder %v3781, 3
        %v3792 = vsel %vm3791, 1, 0
        %v3793 = vcvt.s32.f32 %v3792
        %3795 = vrot.lane.b32.xlu0 %v1019, 96
        %v3796 = vpop.permute.xlu0 %3795
        %3799 = vrot.lane.b32.xlu0 %v3784, 32
        %v3800 = vpop.permute.xlu0 %3799
        %3803 = vrot.lane.b32.xlu0 %v3787, 40
        %v3804 = vpop.permute.xlu0 %3803
        %3807 = vrot.lane.b32.xlu0 %v3790, 48
        %v3808 = vpop.permute.xlu0 %3807
        %3811 = vrot.lane.b32.xlu0 %v3793, 56
        %v3812 = vpop.permute.xlu0 %3811
        %v3814 = vsel %vm946, %v3796, %v3800
        %v3815 = vsel %vm874, %v3814, %v3804
        %vm3816 = vcmask 392192
        %v3817 = vsel %vm3816, %v3815, %v3808
        %vm3818 = vcmask 457728
        %v3819 = vsel %vm3818, %v3817, %v3812
        %v3820 = vsel %vm1258, %v3819, 0.0
        %3821 = vst [vmem:[%s835] sm:$0xff] %v3820
        %s3822 = sand.u32 %s408, 1
        %s3823 = scalar_lea.sflag [#allocation4], %s3822
        %s3824 = sand.u32 %s408, 1
        %s3825 = smul.addr %s3824, 8
        %s3826 = scalar_lea.vmem [#allocation25], %s3825
        // Predicated region
        $region137: #{tpu_custom_call.1} parent=79 // pred_check
          %p3827 = pneg %p418
        $region138: #{tpu_custom_call.1} parent=79 // pred_check_branch
          %3829 = sbr.rel (%p3827) target = $region140
        $region139: #{tpu_custom_call.1} parent=79 // pred_region
          %s3831 = ssub.s32 128, 128
          %3832 = vsyncadd %s3823, %s3831
          %s3833 = smul.addr %s45, 128
          %s3834 = scalar_lea.hbm %s15, %s3833
          %s3836 = sshll.u32 %s3826, 4
          %s3837 = int_to_ptr.vmem [resolvable:$true] %s3836
          %3839 = dma.vmem_to_hbm [thread:$0]  %s3837, 128, %s3834, %s3823
        $region140: #{tpu_custom_call.1} parent=79 // pred_fallthru
          _
      $region80: #{tpu_custom_call.1} parent=5 // pred_fallthru
        _
      %p3840 = scmp.le.s32.totalorder 2, %s40
      // Predicated region
      $region141: #{tpu_custom_call.1} parent=5 // pred_check
        %p3841 = pneg %p3840
      $region142: #{tpu_custom_call.1} parent=5 // pred_check_branch
        %3843 = sbr.rel (%p3841) target = $region144
      $region143: #{tpu_custom_call.1} parent=5 // pred_region
        %s3844 = ssub.s32 %s40, 2
        // Predicated region
        $region145: #{tpu_custom_call.1} parent=143 // pred_check
          %p3845 = pneg %p424
        $region146: #{tpu_custom_call.1} parent=143 // pred_check_branch
          %3847 = sbr.rel (%p3845) target = $region148
        $region147: #{tpu_custom_call.1} parent=143 // pred_region
          %s3848 = sand.u32 %s409, 1
          %s3849 = scalar_lea.sflag [#allocation4], %s3848
          %s3850 = sand.u32 %s409, 1
          %s3851 = smul.addr %s3850, 8
          %s3852 = scalar_lea.vmem [#allocation25], %s3851
          %3853 = dma.done %s3849, 128
        $region148: #{tpu_custom_call.1} parent=143 // pred_fallthru
          _
      $region144: #{tpu_custom_call.1} parent=5 // pred_fallthru
        _
    $region6: #{tpu_custom_call.1} parent=1 // loop_footer
      %s44 = sadd.s32 1, %s40
    $region7: #{tpu_custom_call.1} parent=1 // loop_footer_branch
      %39 = sbr.rel target = $region3
    $region8: #{tpu_custom_call.1} parent=1 // loop_exit
      _
    %3854 = vsyncpa [#allocation3], 1
    %s3855 = scalar_lea.sflag [#allocation3], 1
    %3856 = vsyncpa %s3855, 1
    %3857 = vsyncpa [#allocation6], 1
    %3858 = vsyncpa [#allocation9], 1
    %3859 = vsyncpa [#allocation12], 1
    %3860 = vsyncpa [#allocation15], 1
    %s3861 = scalar_lea.sflag [#allocation15], 1
    %3862 = vsyncpa %s3861, 1
    %3863 = vsyncpa [#allocation18], 1
    %s3864 = scalar_lea.sflag [#allocation18], 1
    %3865 = vsyncpa %s3864, 1
    %3866 = vsyncpa [#allocation21], 1
    %s3867 = scalar_lea.sflag [#allocation21], 1
    %3868 = vsyncpa %s3867, 1
    %3869 = vsyncpa [#allocation24], 1
    %s3870 = scalar_lea.sflag [#allocation24], 1
    %3871 = vsyncpa %s3870, 1
    %3872 = vsyncpa [#allocation4], 1
    %s3873 = scalar_lea.sflag [#allocation4], 1
    %3874 = vsyncpa %s3873, 1

</llo_original>
